<compile_context>
chip_gen: v5e
topology: v5e:2x2
jax: 0.10.0
libtpu: 0.0.40
codegen_flags: <defaults>
</compile_context>

<pallas_src>
import math

import jax
import jax.numpy as jnp
from jax import lax
from jax.experimental import pallas as pl
from jax.experimental.pallas import tpu as pltpu

LN_EPS = 1e-5  # PyTorch nn.LayerNorm default


def _vmem_capacity_bytes():
    """Physical VMEM of the local chip (conservative 64 MiB fallback)."""
    try:
        info = pltpu.get_tpu_info()
        for name in ("vmem_capacity_bytes", "vmem_size_bytes", "vmem_bytes"):
            v = getattr(info, name, None)
            if v:
                return int(v)
    except Exception:
        pass
    return 64 * 1024 * 1024  # v7x-sized (smallest current chip)


def _pick_batch_tile(B, Lq, Lk, F, fuse_kv, budget_bytes):
    """Largest batch fold that fits the VMEM budget, keeping (8,*) alignment and
    (when possible) >= 2 — preferably an even number of — grid steps so v7x's
    two TensorCores get equal work under dimension_semantics=('parallel',)."""
    F2 = 2 * F
    W = 3 * F if fuse_kv else F2

    def aligned(bt):
        return bt == B or ((bt * Lq) % 8 == 0 and (bt * Lk) % 8 == 0)

    def vmem_bytes(bt):
        rq, rk = bt * Lq, bt * Lk
        stream = 2 * 4 * (rq * F + rk * F + rk * F2)      # double-buffered f32 input blocks
        out = 2 * 4 * rq * F2                             # double-buffered output block
        if fuse_kv:
            weights = 2 * (F * F + 9 * F * F)              # bf16 Wq + Wkv (single-buffered)
        else:
            weights = 2 * (2 * F * F + F2 * F2)
        vec = 4 * 8 * W
        bias = 4 * rq * rk if bt > 1 else 0                # block-diagonal softmax bias
        live = 4 * (3 * rq * rk + rk * 3 * F + rq * F + 2 * rq * F2)  # score/exp/prob + kv + q + ctx
        return stream + out + weights + vec + bias + live

    cands = [d for d in range(1, B + 1) if B % d == 0 and aligned(d)] or [B]
    feas = [d for d in cands if vmem_bytes(d) <= budget_bytes] or [min(cands)]
    bt = max(feas)
    multi = [d for d in feas if (B // d) >= 2]
    if multi:
        even = [d for d in multi if (B // d) % 2 == 0]
        bt = max(even) if even else max(multi)
    return bt


def tscab_forward(trg_time, src_time, trg_poi, params,
                  attn_mask=None, pad_mask=None, batch_tile=None,
                  out_dtype=jnp.float32):
    # Masks accepted for API parity but unused: the reference uses the
    # NON-in-place `masked_fill` and discards the result, so they are no-ops.
    del attn_mask, pad_mask

    B, Lq, F = trg_time.shape
    _, Lk, _ = src_time.shape
    F2 = 2 * F
    wq, bq, wk, bk, wv, bv, gamma, beta = params
    scale = 1.0 / math.sqrt(F)

    fuse_kv_pref = F < 128          # widen K/V projection toward the 128-lane MXU tile
    phys = _vmem_capacity_bytes()
    budget = int(phys * 5 // 8)     # ~40 MiB on v7x (64 MiB), ~80 MiB on v5e/v6e (128 MiB)
    vmem_limit = int(min(phys * 3 // 4, budget + (8 << 20)))

    bt = batch_tile if batch_tile is not None else _pick_batch_tile(
        B, Lq, Lk, F, fuse_kv_pref, budget)
    assert B % bt == 0, "batch_tile must divide the batch size"
    steps = B // bt
    use_bias = bt > 1

    # Flatten batch into matmul rows: projections / attention become full-slab
    # MXU matmuls and the writeback is one contiguous (bt*Lq, 2F) slab per step.
    f32 = jnp.float32
    bf16 = jnp.bfloat16
    trg2 = trg_time.reshape(B * Lq, F).astype(f32)
    src2 = src_time.reshape(B * Lk, F).astype(f32)
    poi2 = trg_poi.reshape(B * Lk, F2).astype(f32)

    # Block-diagonal additive bias that separates the `bt` folded batches inside
    # one dense score matmul (0 on same-batch blocks, -1e30 elsewhere).
    # NOTE: this is purely the batch-fold mask, NOT attn_mask / pad_mask.
    if use_bias:
        rb = jnp.repeat(jnp.arange(bt, dtype=jnp.int32), Lq)
        cb = jnp.repeat(jnp.arange(bt, dtype=jnp.int32), Lk)
        bias = jnp.where(rb[:, None] == cb[None, :], 0.0, -1e30).astype(f32)
    else:
        bias = None

    def _run(fuse_kv, single_buffer_consts):
        W = 3 * F if fuse_kv else F2

        # 1/sqrt(F) folded into Q's weight + bias (once, on tiny params);
        # weights pre-cast to bf16 (halves weight DMA / VMEM residency).
        wq_s = (jnp.asarray(wq, f32) * scale).astype(bf16)
        vec = jnp.zeros((8, W), f32)
        vec = vec.at[0, :F].set(jnp.reshape(bq, (F,)).astype(f32) * scale)
        if fuse_kv:
            wkv = jnp.zeros((3 * F, 3 * F), f32)
            wkv = wkv.at[:F, :F].set(jnp.asarray(wk, f32))
            wkv = wkv.at[F:, F:].set(jnp.asarray(wv, f32))
            weights_list = [wq_s, wkv.astype(bf16)]
            vec = vec.at[1, :F].set(jnp.reshape(bk, (F,)).astype(f32))
            vec = vec.at[1, F:].set(jnp.reshape(bv, (F2,)).astype(f32))
            gi, bi = 2, 3
        else:
            weights_list = [wq_s, jnp.asarray(wk, f32).astype(bf16),
                            jnp.asarray(wv, f32).astype(bf16)]
            vec = vec.at[1, :F].set(jnp.reshape(bk, (F,)).astype(f32))
            vec = vec.at[2, :F2].set(jnp.reshape(bv, (F2,)).astype(f32))
            gi, bi = 3, 4
        vec = vec.at[gi, :F2].set(jnp.reshape(gamma, (F2,)).astype(f32))
        vec = vec.at[bi, :F2].set(jnp.reshape(beta, (F2,)).astype(f32))

        def kernel(trg_ref, src_ref, poi_ref, *rest):
            if fuse_kv:
                wq_ref, wkv_ref = rest[0], rest[1]
                nxt = 2
            else:
                wq_ref, wk_ref, wv_ref = rest[0], rest[1], rest[2]
                nxt = 3
            vec_ref = rest[nxt]
            bias_ref = rest[nxt + 1] if use_bias else None
            out_ref = rest[-1]

            bq_v = vec_ref[0:1, 0:F]            # already scaled by 1/sqrt(F)
            gamma_v = vec_ref[gi:gi + 1, 0:F2]
            beta_v = vec_ref[bi:bi + 1, 0:F2]

            # --- Projections: bf16 MXU matmuls over all `bt` folded batches.
            q = jnp.dot(trg_ref[...].astype(bf16), wq_ref[...],
                        preferred_element_type=f32) + bq_v           # (bt*Lq, F)

            if fuse_kv:
                bkv_v = vec_ref[1:2, :]                              # (1, 3F) = [bk | bv]
                srcpoi = jnp.concatenate(
                    [src_ref[...].astype(bf16), poi_ref[...].astype(bf16)], axis=-1)
                kv = jnp.dot(srcpoi, wkv_ref[...],
                             preferred_element_type=f32) + bkv_v     # (bt*Lk, 3F)
                k = kv[:, 0:F]
                v = kv[:, F:]
            else:
                bk_v = vec_ref[1:2, 0:F]
                bv_v = vec_ref[2:3, 0:F2]
                k = jnp.dot(src_ref[...].astype(bf16), wk_ref[...],
                            preferred_element_type=f32) + bk_v
                v = jnp.dot(poi_ref[...].astype(bf16), wv_ref[...],
                            preferred_element_type=f32) + bv_v

            # --- One dense score matmul for the whole batch tile; contract the
            # feature dim of both operands (no explicit K^T materialized).
            score = lax.dot_general(q.astype(bf16), k.astype(bf16),
                                    (((1,), (1,)), ((), ())),
                                    preferred_element_type=f32)      # (bt*Lq, bt*Lk)
            if bias_ref is not None:
                score = score + bias_ref[...]    # block-diag batch separation only
            # attn_mask / pad_mask intentionally NOT applied (reference bug
            # reproduced: non-in-place masked_fill result is discarded);
            # dropout == identity in eval.
            m = jnp.max(score, axis=-1, keepdims=True)
            e = jnp.exp(score - m)
            denom = jnp.sum(e, axis=-1, keepdims=True)
            prob = e * pl.reciprocal(denom, approx=True)

            ctx = jnp.dot(prob.astype(bf16), v.astype(bf16),
                          preferred_element_type=f32)                # (bt*Lq, 2F)

            # LayerNorm over the last dim (biased variance, like PyTorch).
            mean = jnp.mean(ctx, axis=-1, keepdims=True)
            cen = ctx - mean
            var = jnp.mean(cen * cen, axis=-1, keepdims=True)
            normed = cen * lax.rsqrt(var + LN_EPS)
            out_ref[...] = (normed * gamma_v + beta_v).astype(out_ref.dtype)

        # Grid-invariant operands are fetched once; don't double-buffer them.
        pkw = {"pipeline_mode": pl.Buffered(1)} if single_buffer_consts else {}

        in_specs = [
            pl.BlockSpec((bt * Lq, F), lambda i: (i, 0)),    # trg_time rows
            pl.BlockSpec((bt * Lk, F), lambda i: (i, 0)),    # src_time rows
            pl.BlockSpec((bt * Lk, F2), lambda i: (i, 0)),   # trg_poi rows
        ]
        args = [trg2, src2, poi2]
        for w in weights_list:
            in_specs.append(pl.BlockSpec(w.shape, lambda i: (0, 0), **pkw))
            args.append(w)
        in_specs.append(pl.BlockSpec((8, W), lambda i: (0, 0), **pkw))
        args.append(vec)
        if use_bias:
            in_specs.append(pl.BlockSpec((bt * Lq, bt * Lk), lambda i: (0, 0), **pkw))
            args.append(bias)

        out = pl.pallas_call(
            kernel,
            out_shape=jax.ShapeDtypeStruct((B * Lq, F2), out_dtype),
            grid_spec=pltpu.PrefetchScalarGridSpec(
                num_scalar_prefetch=0,
                grid=(steps,),
                in_specs=in_specs,
                out_specs=pl.BlockSpec((bt * Lq, F2), lambda i: (i, 0)),
            ),
            compiler_params=pltpu.CompilerParams(
                dimension_semantics=("parallel",),
                vmem_limit_bytes=vmem_limit,
            ),
        )(*args)
        return jax.block_until_ready(out)

    # Try the fully optimized configuration first; degrade gracefully if an
    # optional optimization (single-buffered constants / fused K|V projection)
    # fails to lower on this runtime.
    attempts = []
    if fuse_kv_pref:
        attempts += [(True, True), (True, False)]
    attempts += [(False, True), (False, False)]
    last_err = None
    out_flat = None
    for fkv, sbuf in attempts:
        try:
            out_flat = _run(fkv, sbuf)
            break
        except Exception as e:  # noqa: BLE001 - fall back to a simpler config
            last_err = e
    if out_flat is None:
        raise last_err
    return out_flat.reshape(B, Lq, F2)


def tscab_reference(trg_time, src_time, trg_poi, params):
    """Pure-JAX f32 reference mirroring the PyTorch forward (eval mode)."""
    wq, bq, wk, bk, wv, bv, gamma, beta = params
    q = trg_time @ wq + bq
    k = src_time @ wk + bk
    v = trg_poi @ wv + bv
    score = jnp.einsum("bqf,bkf->bqk", q, k) / math.sqrt(q.shape[-1])
    prob = jax.nn.softmax(score, axis=-1)
    ctx = jnp.einsum("bqk,bkd->bqd", prob, v)
    mean = jnp.mean(ctx, axis=-1, keepdims=True)
    var = jnp.mean((ctx - mean) ** 2, axis=-1, keepdims=True)
    return (ctx - mean) * jax.lax.rsqrt(var + LN_EPS) * gamma + beta


if __name__ == "__main__":
    B, Lq, Lk, F = 4, 8, 8, 32
    F2 = 2 * F

    key = jax.random.PRNGKey(0)
    ks = jax.random.split(key, 12)

    trg_time = jax.random.normal(ks[0], (B, Lq, F), jnp.float32)
    src_time = jax.random.normal(ks[1], (B, Lk, F), jnp.float32)
    trg_poi = jax.random.normal(ks[2], (B, Lk, F2), jnp.float32)
    attn_mask = jnp.ones((Lq, Lk), jnp.float32)    # unused (reference masked_fill no-op)
    pad_mask = jnp.ones((B, 1, Lk), jnp.float32)   # unused (reference masked_fill no-op)

    # Deterministic parameter init.  Weights are (in_features, out_features),
    # i.e. transposed relative to torch nn.Linear.weight.
    sq = 1.0 / math.sqrt(F)
    sv = 1.0 / math.sqrt(F2)
    wq = jax.random.uniform(ks[3], (F, F), jnp.float32, -sq, sq)
    bq = jax.random.uniform(ks[4], (1, F), jnp.float32, -sq, sq)
    wk = jax.random.uniform(ks[5], (F, F), jnp.float32, -sq, sq)
    bk = jax.random.uniform(ks[6], (1, F), jnp.float32, -sq, sq)
    wv = jax.random.uniform(ks[7], (F2, F2), jnp.float32, -sv, sv)
    bv = jax.random.uniform(ks[8], (1, F2), jnp.float32, -sv, sv)
    gamma = jnp.ones((1, F2), jnp.float32)   # LayerNorm default weight
    beta = jnp.zeros((1, F2), jnp.float32)   # LayerNorm default bias
    params = (wq, bq, wk, bk, wv, bv, gamma, beta)

    out = tscab_forward(trg_time, src_time, trg_poi, params,
                        attn_mask=attn_mask, pad_mask=pad_mask)
    out = jax.block_until_ready(out)

    ref = tscab_reference(trg_time, src_time, trg_poi, params)
    assert out.shape == (B, Lq, F2)
    # bf16 MXU operands (f32 accumulation) + approx reciprocal -> looser
    # tolerance than a pure-f32 kernel; structural errors would be O(1).
    assert jnp.allclose(out, ref, atol=8e-2, rtol=8e-2)

    print("KERNEL_OK")
</pallas_src>

<mosaic_0001>
module attributes {stable_mosaic.version = 11 : i64} {
  func.func @kernel(%arg0: i32, %arg1: memref<16x32xf32, #tpu.memory_space<vmem>>, %arg2: memref<16x32xf32, #tpu.memory_space<vmem>>, %arg3: memref<16x64xf32, #tpu.memory_space<vmem>>, %arg4: memref<32x32xbf16, #tpu.memory_space<vmem>>, %arg5: memref<96x96xbf16, #tpu.memory_space<vmem>>, %arg6: memref<8x96xf32, #tpu.memory_space<vmem>>, %arg7: memref<16x16xf32, #tpu.memory_space<vmem>>, %arg8: memref<16x64xf32, #tpu.memory_space<vmem>>) attributes {dimension_semantics = [#tpu.dimension_semantics<parallel>], iteration_bounds = array<i64: 2>, scalar_prefetch = 0 : i64, scratch_operands = 0 : i64, tpu.core_type = #tpu.core_type<tc>, window_params = [{transform_indices = @transform_0, window_bounds = array<i64: 16, 32>}, {transform_indices = @transform_1, window_bounds = array<i64: 16, 32>}, {transform_indices = @transform_2, window_bounds = array<i64: 16, 64>}, {pipeline_mode = #tpu.pipeline_mode<synchronous>, transform_indices = @transform_3, window_bounds = array<i64: 32, 32>}, {pipeline_mode = #tpu.pipeline_mode<synchronous>, transform_indices = @transform_4, window_bounds = array<i64: 96, 96>}, {pipeline_mode = #tpu.pipeline_mode<synchronous>, transform_indices = @transform_5, window_bounds = array<i64: 8, 96>}, {pipeline_mode = #tpu.pipeline_mode<synchronous>, transform_indices = @transform_6, window_bounds = array<i64: 16, 16>}, {transform_indices = @transform_7, window_bounds = array<i64: 16, 64>}]} {
    %c0 = arith.constant 0 : index
    %c0_0 = arith.constant 0 : index
    %0 = vector.load %arg6[%c0, %c0_0] : memref<8x96xf32, #tpu.memory_space<vmem>>, vector<1x32xf32>
    %c2 = arith.constant 2 : index
    %c0_1 = arith.constant 0 : index
    %1 = vector.load %arg6[%c2, %c0_1] : memref<8x96xf32, #tpu.memory_space<vmem>>, vector<1x64xf32>
    %c3 = arith.constant 3 : index
    %c0_2 = arith.constant 0 : index
    %2 = vector.load %arg6[%c3, %c0_2] : memref<8x96xf32, #tpu.memory_space<vmem>>, vector<1x64xf32>
    %c0_3 = arith.constant 0 : index
    %c0_4 = arith.constant 0 : index
    %3 = vector.load %arg1[%c0_3, %c0_4] : memref<16x32xf32, #tpu.memory_space<vmem>>, vector<16x32xf32>
    %4 = arith.truncf %3 : vector<16x32xf32> to vector<16x32xbf16>
    %c0_5 = arith.constant 0 : index
    %c0_6 = arith.constant 0 : index
    %5 = vector.load %arg4[%c0_5, %c0_6] : memref<32x32xbf16, #tpu.memory_space<vmem>>, vector<32x32xbf16>
    %cst = arith.constant dense<0.000000e+00> : vector<16x32xf32>
    %6 = tpu.matmul %4, %5, %cst {dimension_numbers = #tpu.dot_dimension_numbers<[1], [0], [0], [1], [0, 0, 1, 1], [], []>} : vector<16x32xbf16>, vector<32x32xbf16>, vector<16x32xf32> -> vector<16x32xf32>
    %7 = vector.broadcast %0 : vector<1x32xf32> to vector<16x32xf32>
    %8 = arith.addf %6, %7 : vector<16x32xf32>
    %c1 = arith.constant 1 : index
    %c0_7 = arith.constant 0 : index
    %9 = vector.load %arg6[%c1, %c0_7] : memref<8x96xf32, #tpu.memory_space<vmem>>, vector<1x96xf32>
    %c0_8 = arith.constant 0 : index
    %c0_9 = arith.constant 0 : index
    %10 = vector.load %arg2[%c0_8, %c0_9] : memref<16x32xf32, #tpu.memory_space<vmem>>, vector<16x32xf32>
    %11 = arith.truncf %10 : vector<16x32xf32> to vector<16x32xbf16>
    %c0_10 = arith.constant 0 : index
    %c0_11 = arith.constant 0 : index
    %12 = vector.load %arg3[%c0_10, %c0_11] : memref<16x64xf32, #tpu.memory_space<vmem>>, vector<16x64xf32>
    %13 = arith.truncf %12 : vector<16x64xf32> to vector<16x64xbf16>
    %14 = tpu.concatenate %11, %13 in 1 : vector<16x32xbf16>, vector<16x64xbf16> -> vector<16x96xbf16>
    %c0_12 = arith.constant 0 : index
    %c0_13 = arith.constant 0 : index
    %15 = vector.load %arg5[%c0_12, %c0_13] : memref<96x96xbf16, #tpu.memory_space<vmem>>, vector<96x96xbf16>
    %cst_14 = arith.constant dense<0.000000e+00> : vector<16x96xf32>
    %16 = tpu.matmul %14, %15, %cst_14 {dimension_numbers = #tpu.dot_dimension_numbers<[1], [0], [0], [1], [0, 0, 1, 1], [], []>} : vector<16x96xbf16>, vector<96x96xbf16>, vector<16x96xf32> -> vector<16x96xf32>
    %17 = vector.broadcast %9 : vector<1x96xf32> to vector<16x96xf32>
    %18 = arith.addf %16, %17 : vector<16x96xf32>
    %19 = vector.extract_strided_slice %18 {offsets = [0, 0], sizes = [16, 32], strides = [1, 1]} : vector<16x96xf32> to vector<16x32xf32>
    %20 = vector.extract_strided_slice %18 {offsets = [0, 32], sizes = [16, 64], strides = [1, 1]} : vector<16x96xf32> to vector<16x64xf32>
    %21 = arith.truncf %8 : vector<16x32xf32> to vector<16x32xbf16>
    %22 = arith.truncf %19 : vector<16x32xf32> to vector<16x32xbf16>
    %cst_15 = arith.constant dense<0.000000e+00> : vector<16x16xf32>
    %23 = tpu.matmul %21, %22, %cst_15 {dimension_numbers = #tpu.dot_dimension_numbers<[1], [1], [0], [0], [0, 0, 1, 0], [], []>} : vector<16x32xbf16>, vector<16x32xbf16>, vector<16x16xf32> -> vector<16x16xf32>
    %c0_16 = arith.constant 0 : index
    %c0_17 = arith.constant 0 : index
    %24 = vector.load %arg7[%c0_16, %c0_17] : memref<16x16xf32, #tpu.memory_space<vmem>>, vector<16x16xf32>
    %25 = arith.addf %23, %24 : vector<16x16xf32>
    %cst_18 = arith.constant dense<0xFF800000> : vector<16xf32>
    %26 = vector.multi_reduction <maximumf>, %25, %cst_18 [1] : vector<16x16xf32> to vector<16xf32>
    %27 = vector.shape_cast %26 : vector<16xf32> to vector<16x1xf32>
    %28 = vector.broadcast %27 : vector<16x1xf32> to vector<16x16xf32>
    %29 = arith.subf %25, %28 : vector<16x16xf32>
    %30 = math.exp %29 : vector<16x16xf32>
    %cst_19 = arith.constant dense<0.000000e+00> : vector<16xf32>
    %31 = vector.multi_reduction <add>, %30, %cst_19 [1] : vector<16x16xf32> to vector<16xf32>
    %32 = vector.shape_cast %31 : vector<16xf32> to vector<16x1xf32>
    %33 = tpu.reciprocal %32 {approx = true} : vector<16x1xf32> -> vector<16x1xf32>
    %34 = vector.broadcast %33 : vector<16x1xf32> to vector<16x16xf32>
    %35 = arith.mulf %30, %34 : vector<16x16xf32>
    %36 = arith.truncf %35 : vector<16x16xf32> to vector<16x16xbf16>
    %37 = arith.truncf %20 : vector<16x64xf32> to vector<16x64xbf16>
    %cst_20 = arith.constant dense<0.000000e+00> : vector<16x64xf32>
    %38 = tpu.matmul %36, %37, %cst_20 {dimension_numbers = #tpu.dot_dimension_numbers<[1], [0], [0], [1], [0, 0, 1, 1], [], []>} : vector<16x16xbf16>, vector<16x64xbf16>, vector<16x64xf32> -> vector<16x64xf32>
    %cst_21 = arith.constant dense<0.000000e+00> : vector<16xf32>
    %39 = vector.multi_reduction <add>, %38, %cst_21 [1] : vector<16x64xf32> to vector<16xf32>
    %40 = vector.shape_cast %39 : vector<16xf32> to vector<16x1xf32>
    %cst_22 = arith.constant 6.400000e+01 : f32
    %41 = vector.broadcast %cst_22 : f32 to vector<16x1xf32>
    %42 = arith.divf %40, %41 : vector<16x1xf32>
    %43 = vector.broadcast %42 : vector<16x1xf32> to vector<16x64xf32>
    %44 = arith.subf %38, %43 : vector<16x64xf32>
    %45 = arith.mulf %44, %44 : vector<16x64xf32>
    %cst_23 = arith.constant dense<0.000000e+00> : vector<16xf32>
    %46 = vector.multi_reduction <add>, %45, %cst_23 [1] : vector<16x64xf32> to vector<16xf32>
    %47 = vector.shape_cast %46 : vector<16xf32> to vector<16x1xf32>
    %cst_24 = arith.constant 6.400000e+01 : f32
    %48 = vector.broadcast %cst_24 : f32 to vector<16x1xf32>
    %49 = arith.divf %47, %48 : vector<16x1xf32>
    %cst_25 = arith.constant 9.99999974E-6 : f32
    %50 = vector.broadcast %cst_25 : f32 to vector<16x1xf32>
    %51 = arith.addf %49, %50 : vector<16x1xf32>
    %52 = math.rsqrt %51 : vector<16x1xf32>
    %53 = vector.broadcast %52 : vector<16x1xf32> to vector<16x64xf32>
    %54 = arith.mulf %44, %53 : vector<16x64xf32>
    %55 = vector.broadcast %1 : vector<1x64xf32> to vector<16x64xf32>
    %56 = arith.mulf %54, %55 : vector<16x64xf32>
    %57 = vector.broadcast %2 : vector<1x64xf32> to vector<16x64xf32>
    %58 = arith.addf %56, %57 : vector<16x64xf32>
    %c0_26 = arith.constant 0 : index
    %c0_27 = arith.constant 0 : index
    %59 = vector.load %arg8[%c0_26, %c0_27] : memref<16x64xf32, #tpu.memory_space<vmem>>, vector<16x64xf32>
    tpu.vector_store %arg8[%c0_26, %c0_27], %58 {strides = array<i32>} : memref<16x64xf32, #tpu.memory_space<vmem>>, vector<16x64xf32>,
    return
  }
  func.func @transform_0(%arg0: i32) -> (i32, i32) {
    %c0_i32 = arith.constant 0 : i32
    %c0_i32_0 = arith.constant 0 : i32
    return %arg0, %c0_i32 : i32, i32
  }
  func.func @transform_1(%arg0: i32) -> (i32, i32) {
    %c0_i32 = arith.constant 0 : i32
    %c0_i32_0 = arith.constant 0 : i32
    return %arg0, %c0_i32 : i32, i32
  }
  func.func @transform_2(%arg0: i32) -> (i32, i32) {
    %c0_i32 = arith.constant 0 : i32
    %c0_i32_0 = arith.constant 0 : i32
    return %arg0, %c0_i32 : i32, i32
  }
  func.func @transform_3(%arg0: i32) -> (i32, i32) {
    %c0_i32 = arith.constant 0 : i32
    %c0_i32_0 = arith.constant 0 : i32
    %c0_i32_1 = arith.constant 0 : i32
    return %c0_i32, %c0_i32_0 : i32, i32
  }
  func.func @transform_4(%arg0: i32) -> (i32, i32) {
    %c0_i32 = arith.constant 0 : i32
    %c0_i32_0 = arith.constant 0 : i32
    %c0_i32_1 = arith.constant 0 : i32
    return %c0_i32, %c0_i32_0 : i32, i32
  }
  func.func @transform_5(%arg0: i32) -> (i32, i32) {
    %c0_i32 = arith.constant 0 : i32
    %c0_i32_0 = arith.constant 0 : i32
    %c0_i32_1 = arith.constant 0 : i32
    return %c0_i32, %c0_i32_0 : i32, i32
  }
  func.func @transform_6(%arg0: i32) -> (i32, i32) {
    %c0_i32 = arith.constant 0 : i32
    %c0_i32_0 = arith.constant 0 : i32
    %c0_i32_1 = arith.constant 0 : i32
    return %c0_i32, %c0_i32_0 : i32, i32
  }
  func.func @transform_7(%arg0: i32) -> (i32, i32) {
    %c0_i32 = arith.constant 0 : i32
    %c0_i32_0 = arith.constant 0 : i32
    return %arg0, %c0_i32 : i32, i32
  }
}

module attributes {stable_mosaic.version = 11 : i64} {
  func.func @kernel(%arg0: i32, %arg1: memref<16x32xf32, #tpu.memory_space<vmem>>, %arg2: memref<16x32xf32, #tpu.memory_space<vmem>>, %arg3: memref<16x64xf32, #tpu.memory_space<vmem>>, %arg4: memref<32x32xbf16, #tpu.memory_space<vmem>>, %arg5: memref<96x96xbf16, #tpu.memory_space<vmem>>, %arg6: memref<8x96xf32, #tpu.memory_space<vmem>>, %arg7: memref<16x16xf32, #tpu.memory_space<vmem>>, %arg8: memref<16x64xf32, #tpu.memory_space<vmem>>) attributes {dimension_semantics = [#tpu.dimension_semantics<parallel>], iteration_bounds = array<i64: 2>, scalar_prefetch = 0 : i64, scratch_operands = 0 : i64, tpu.core_type = #tpu.core_type<tc>, window_params = [{transform_indices = @transform_0, window_bounds = array<i64: 16, 32>}, {transform_indices = @transform_1, window_bounds = array<i64: 16, 32>}, {transform_indices = @transform_2, window_bounds = array<i64: 16, 64>}, {pipeline_mode = #tpu.pipeline_mode<synchronous>, transform_indices = @transform_3, window_bounds = array<i64: 32, 32>}, {pipeline_mode = #tpu.pipeline_mode<synchronous>, transform_indices = @transform_4, window_bounds = array<i64: 96, 96>}, {pipeline_mode = #tpu.pipeline_mode<synchronous>, transform_indices = @transform_5, window_bounds = array<i64: 8, 96>}, {pipeline_mode = #tpu.pipeline_mode<synchronous>, transform_indices = @transform_6, window_bounds = array<i64: 16, 16>}, {transform_indices = @transform_7, window_bounds = array<i64: 16, 64>}]} {
    %c0 = arith.constant 0 : index
    %c0_0 = arith.constant 0 : index
    %0 = vector.load %arg6[%c0, %c0_0] : memref<8x96xf32, #tpu.memory_space<vmem>>, vector<1x32xf32>
    %c2 = arith.constant 2 : index
    %c0_1 = arith.constant 0 : index
    %1 = vector.load %arg6[%c2, %c0_1] : memref<8x96xf32, #tpu.memory_space<vmem>>, vector<1x64xf32>
    %c3 = arith.constant 3 : index
    %c0_2 = arith.constant 0 : index
    %2 = vector.load %arg6[%c3, %c0_2] : memref<8x96xf32, #tpu.memory_space<vmem>>, vector<1x64xf32>
    %c0_3 = arith.constant 0 : index
    %c0_4 = arith.constant 0 : index
    %3 = vector.load %arg1[%c0_3, %c0_4] : memref<16x32xf32, #tpu.memory_space<vmem>>, vector<16x32xf32>
    %4 = arith.truncf %3 : vector<16x32xf32> to vector<16x32xbf16>
    %c0_5 = arith.constant 0 : index
    %c0_6 = arith.constant 0 : index
    %5 = vector.load %arg4[%c0_5, %c0_6] : memref<32x32xbf16, #tpu.memory_space<vmem>>, vector<32x32xbf16>
    %cst = arith.constant dense<0.000000e+00> : vector<16x32xf32>
    %6 = tpu.matmul %4, %5, %cst {dimension_numbers = #tpu.dot_dimension_numbers<[1], [0], [0], [1], [0, 0, 1, 1], [], []>} : vector<16x32xbf16>, vector<32x32xbf16>, vector<16x32xf32> -> vector<16x32xf32>
    %7 = vector.broadcast %0 : vector<1x32xf32> to vector<16x32xf32>
    %8 = arith.addf %6, %7 : vector<16x32xf32>
    %c1 = arith.constant 1 : index
    %c0_7 = arith.constant 0 : index
    %9 = vector.load %arg6[%c1, %c0_7] : memref<8x96xf32, #tpu.memory_space<vmem>>, vector<1x96xf32>
    %c0_8 = arith.constant 0 : index
    %c0_9 = arith.constant 0 : index
    %10 = vector.load %arg2[%c0_8, %c0_9] : memref<16x32xf32, #tpu.memory_space<vmem>>, vector<16x32xf32>
    %11 = arith.truncf %10 : vector<16x32xf32> to vector<16x32xbf16>
    %c0_10 = arith.constant 0 : index
    %c0_11 = arith.constant 0 : index
    %12 = vector.load %arg3[%c0_10, %c0_11] : memref<16x64xf32, #tpu.memory_space<vmem>>, vector<16x64xf32>
    %13 = arith.truncf %12 : vector<16x64xf32> to vector<16x64xbf16>
    %14 = tpu.concatenate %11, %13 in 1 : vector<16x32xbf16>, vector<16x64xbf16> -> vector<16x96xbf16>
    %c0_12 = arith.constant 0 : index
    %c0_13 = arith.constant 0 : index
    %15 = vector.load %arg5[%c0_12, %c0_13] : memref<96x96xbf16, #tpu.memory_space<vmem>>, vector<96x96xbf16>
    %cst_14 = arith.constant dense<0.000000e+00> : vector<16x96xf32>
    %16 = tpu.matmul %14, %15, %cst_14 {dimension_numbers = #tpu.dot_dimension_numbers<[1], [0], [0], [1], [0, 0, 1, 1], [], []>} : vector<16x96xbf16>, vector<96x96xbf16>, vector<16x96xf32> -> vector<16x96xf32>
    %17 = vector.broadcast %9 : vector<1x96xf32> to vector<16x96xf32>
    %18 = arith.addf %16, %17 : vector<16x96xf32>
    %19 = vector.extract_strided_slice %18 {offsets = [0, 0], sizes = [16, 32], strides = [1, 1]} : vector<16x96xf32> to vector<16x32xf32>
    %20 = vector.extract_strided_slice %18 {offsets = [0, 32], sizes = [16, 64], strides = [1, 1]} : vector<16x96xf32> to vector<16x64xf32>
    %21 = arith.truncf %8 : vector<16x32xf32> to vector<16x32xbf16>
    %22 = arith.truncf %19 : vector<16x32xf32> to vector<16x32xbf16>
    %cst_15 = arith.constant dense<0.000000e+00> : vector<16x16xf32>
    %23 = tpu.matmul %21, %22, %cst_15 {dimension_numbers = #tpu.dot_dimension_numbers<[1], [1], [0], [0], [0, 0, 1, 0], [], []>} : vector<16x32xbf16>, vector<16x32xbf16>, vector<16x16xf32> -> vector<16x16xf32>
    %c0_16 = arith.constant 0 : index
    %c0_17 = arith.constant 0 : index
    %24 = vector.load %arg7[%c0_16, %c0_17] : memref<16x16xf32, #tpu.memory_space<vmem>>, vector<16x16xf32>
    %25 = arith.addf %23, %24 : vector<16x16xf32>
    %cst_18 = arith.constant dense<0xFF800000> : vector<16xf32>
    %26 = vector.multi_reduction <maximumf>, %25, %cst_18 [1] : vector<16x16xf32> to vector<16xf32>
    %27 = vector.shape_cast %26 : vector<16xf32> to vector<16x1xf32>
    %28 = vector.broadcast %27 : vector<16x1xf32> to vector<16x16xf32>
    %29 = arith.subf %25, %28 : vector<16x16xf32>
    %30 = math.exp %29 : vector<16x16xf32>
    %cst_19 = arith.constant dense<0.000000e+00> : vector<16xf32>
    %31 = vector.multi_reduction <add>, %30, %cst_19 [1] : vector<16x16xf32> to vector<16xf32>
    %32 = vector.shape_cast %31 : vector<16xf32> to vector<16x1xf32>
    %33 = tpu.reciprocal %32 {approx = true} : vector<16x1xf32> -> vector<16x1xf32>
    %34 = vector.broadcast %33 : vector<16x1xf32> to vector<16x16xf32>
    %35 = arith.mulf %30, %34 : vector<16x16xf32>
    %36 = arith.truncf %35 : vector<16x16xf32> to vector<16x16xbf16>
    %37 = arith.truncf %20 : vector<16x64xf32> to vector<16x64xbf16>
    %cst_20 = arith.constant dense<0.000000e+00> : vector<16x64xf32>
    %38 = tpu.matmul %36, %37, %cst_20 {dimension_numbers = #tpu.dot_dimension_numbers<[1], [0], [0], [1], [0, 0, 1, 1], [], []>} : vector<16x16xbf16>, vector<16x64xbf16>, vector<16x64xf32> -> vector<16x64xf32>
    %cst_21 = arith.constant dense<0.000000e+00> : vector<16xf32>
    %39 = vector.multi_reduction <add>, %38, %cst_21 [1] : vector<16x64xf32> to vector<16xf32>
    %40 = vector.shape_cast %39 : vector<16xf32> to vector<16x1xf32>
    %cst_22 = arith.constant 6.400000e+01 : f32
    %41 = vector.broadcast %cst_22 : f32 to vector<16x1xf32>
    %42 = arith.divf %40, %41 : vector<16x1xf32>
    %43 = vector.broadcast %42 : vector<16x1xf32> to vector<16x64xf32>
    %44 = arith.subf %38, %43 : vector<16x64xf32>
    %45 = arith.mulf %44, %44 : vector<16x64xf32>
    %cst_23 = arith.constant dense<0.000000e+00> : vector<16xf32>
    %46 = vector.multi_reduction <add>, %45, %cst_23 [1] : vector<16x64xf32> to vector<16xf32>
    %47 = vector.shape_cast %46 : vector<16xf32> to vector<16x1xf32>
    %cst_24 = arith.constant 6.400000e+01 : f32
    %48 = vector.broadcast %cst_24 : f32 to vector<16x1xf32>
    %49 = arith.divf %47, %48 : vector<16x1xf32>
    %cst_25 = arith.constant 9.99999974E-6 : f32
    %50 = vector.broadcast %cst_25 : f32 to vector<16x1xf32>
    %51 = arith.addf %49, %50 : vector<16x1xf32>
    %52 = math.rsqrt %51 : vector<16x1xf32>
    %53 = vector.broadcast %52 : vector<16x1xf32> to vector<16x64xf32>
    %54 = arith.mulf %44, %53 : vector<16x64xf32>
    %55 = vector.broadcast %1 : vector<1x64xf32> to vector<16x64xf32>
    %56 = arith.mulf %54, %55 : vector<16x64xf32>
    %57 = vector.broadcast %2 : vector<1x64xf32> to vector<16x64xf32>
    %58 = arith.addf %56, %57 : vector<16x64xf32>
    %c0_26 = arith.constant 0 : index
    %c0_27 = arith.constant 0 : index
    %59 = vector.load %arg8[%c0_26, %c0_27] : memref<16x64xf32, #tpu.memory_space<vmem>>, vector<16x64xf32>
    tpu.vector_store %arg8[%c0_26, %c0_27], %58 {strides = array<i32>} : memref<16x64xf32, #tpu.memory_space<vmem>>, vector<16x64xf32>,
    return
  }
  func.func @transform_0(%arg0: i32) -> (i32, i32) {
    %c0_i32 = arith.constant 0 : i32
    %c0_i32_0 = arith.constant 0 : i32
    return %arg0, %c0_i32 : i32, i32
  }
  func.func @transform_1(%arg0: i32) -> (i32, i32) {
    %c0_i32 = arith.constant 0 : i32
    %c0_i32_0 = arith.constant 0 : i32
    return %arg0, %c0_i32 : i32, i32
  }
  func.func @transform_2(%arg0: i32) -> (i32, i32) {
    %c0_i32 = arith.constant 0 : i32
    %c0_i32_0 = arith.constant 0 : i32
    return %arg0, %c0_i32 : i32, i32
  }
  func.func @transform_3(%arg0: i32) -> (i32, i32) {
    %c0_i32 = arith.constant 0 : i32
    %c0_i32_0 = arith.constant 0 : i32
    %c0_i32_1 = arith.constant 0 : i32
    return %c0_i32, %c0_i32_0 : i32, i32
  }
  func.func @transform_4(%arg0: i32) -> (i32, i32) {
    %c0_i32 = arith.constant 0 : i32
    %c0_i32_0 = arith.constant 0 : i32
    %c0_i32_1 = arith.constant 0 : i32
    return %c0_i32, %c0_i32_0 : i32, i32
  }
  func.func @transform_5(%arg0: i32) -> (i32, i32) {
    %c0_i32 = arith.constant 0 : i32
    %c0_i32_0 = arith.constant 0 : i32
    %c0_i32_1 = arith.constant 0 : i32
    return %c0_i32, %c0_i32_0 : i32, i32
  }
  func.func @transform_6(%arg0: i32) -> (i32, i32) {
    %c0_i32 = arith.constant 0 : i32
    %c0_i32_0 = arith.constant 0 : i32
    %c0_i32_1 = arith.constant 0 : i32
    return %c0_i32, %c0_i32_0 : i32, i32
  }
  func.func @transform_7(%arg0: i32) -> (i32, i32) {
    %c0_i32 = arith.constant 0 : i32
    %c0_i32_0 = arith.constant 0 : i32
    return %arg0, %c0_i32 : i32, i32
  }
}

module attributes {stable_mosaic.version = 11 : i64} {
  func.func @kernel(%arg0: i32, %arg1: memref<16x32xf32, #tpu.memory_space<vmem>>, %arg2: memref<16x32xf32, #tpu.memory_space<vmem>>, %arg3: memref<16x64xf32, #tpu.memory_space<vmem>>, %arg4: memref<32x32xbf16, #tpu.memory_space<vmem>>, %arg5: memref<32x32xbf16, #tpu.memory_space<vmem>>, %arg6: memref<64x64xbf16, #tpu.memory_space<vmem>>, %arg7: memref<8x64xf32, #tpu.memory_space<vmem>>, %arg8: memref<16x16xf32, #tpu.memory_space<vmem>>, %arg9: memref<16x64xf32, #tpu.memory_space<vmem>>) attributes {dimension_semantics = [#tpu.dimension_semantics<parallel>], iteration_bounds = array<i64: 2>, scalar_prefetch = 0 : i64, scratch_operands = 0 : i64, tpu.core_type = #tpu.core_type<tc>, window_params = [{transform_indices = @transform_0, window_bounds = array<i64: 16, 32>}, {transform_indices = @transform_1, window_bounds = array<i64: 16, 32>}, {transform_indices = @transform_2, window_bounds = array<i64: 16, 64>}, {pipeline_mode = #tpu.pipeline_mode<synchronous>, transform_indices = @transform_3, window_bounds = array<i64: 32, 32>}, {pipeline_mode = #tpu.pipeline_mode<synchronous>, transform_indices = @transform_4, window_bounds = array<i64: 32, 32>}, {pipeline_mode = #tpu.pipeline_mode<synchronous>, transform_indices = @transform_5, window_bounds = array<i64: 64, 64>}, {pipeline_mode = #tpu.pipeline_mode<synchronous>, transform_indices = @transform_6, window_bounds = array<i64: 8, 64>}, {pipeline_mode = #tpu.pipeline_mode<synchronous>, transform_indices = @transform_7, window_bounds = array<i64: 16, 16>}, {transform_indices = @transform_8, window_bounds = array<i64: 16, 64>}]} {
    %c0 = arith.constant 0 : index
    %c0_0 = arith.constant 0 : index
    %0 = vector.load %arg7[%c0, %c0_0] : memref<8x64xf32, #tpu.memory_space<vmem>>, vector<1x32xf32>
    %c3 = arith.constant 3 : index
    %c0_1 = arith.constant 0 : index
    %1 = vector.load %arg7[%c3, %c0_1] : memref<8x64xf32, #tpu.memory_space<vmem>>, vector<1x64xf32>
    %c4 = arith.constant 4 : index
    %c0_2 = arith.constant 0 : index
    %2 = vector.load %arg7[%c4, %c0_2] : memref<8x64xf32, #tpu.memory_space<vmem>>, vector<1x64xf32>
    %c0_3 = arith.constant 0 : index
    %c0_4 = arith.constant 0 : index
    %3 = vector.load %arg1[%c0_3, %c0_4] : memref<16x32xf32, #tpu.memory_space<vmem>>, vector<16x32xf32>
    %4 = arith.truncf %3 : vector<16x32xf32> to vector<16x32xbf16>
    %c0_5 = arith.constant 0 : index
    %c0_6 = arith.constant 0 : index
    %5 = vector.load %arg4[%c0_5, %c0_6] : memref<32x32xbf16, #tpu.memory_space<vmem>>, vector<32x32xbf16>
    %cst = arith.constant dense<0.000000e+00> : vector<16x32xf32>
    %6 = tpu.matmul %4, %5, %cst {dimension_numbers = #tpu.dot_dimension_numbers<[1], [0], [0], [1], [0, 0, 1, 1], [], []>} : vector<16x32xbf16>, vector<32x32xbf16>, vector<16x32xf32> -> vector<16x32xf32>
    %7 = vector.broadcast %0 : vector<1x32xf32> to vector<16x32xf32>
    %8 = arith.addf %6, %7 : vector<16x32xf32>
    %c1 = arith.constant 1 : index
    %c0_7 = arith.constant 0 : index
    %9 = vector.load %arg7[%c1, %c0_7] : memref<8x64xf32, #tpu.memory_space<vmem>>, vector<1x32xf32>
    %c2 = arith.constant 2 : index
    %c0_8 = arith.constant 0 : index
    %10 = vector.load %arg7[%c2, %c0_8] : memref<8x64xf32, #tpu.memory_space<vmem>>, vector<1x64xf32>
    %c0_9 = arith.constant 0 : index
    %c0_10 = arith.constant 0 : index
    %11 = vector.load %arg2[%c0_9, %c0_10] : memref<16x32xf32, #tpu.memory_space<vmem>>, vector<16x32xf32>
    %12 = arith.truncf %11 : vector<16x32xf32> to vector<16x32xbf16>
    %c0_11 = arith.constant 0 : index
    %c0_12 = arith.constant 0 : index
    %13 = vector.load %arg5[%c0_11, %c0_12] : memref<32x32xbf16, #tpu.memory_space<vmem>>, vector<32x32xbf16>
    %cst_13 = arith.constant dense<0.000000e+00> : vector<16x32xf32>
    %14 = tpu.matmul %12, %13, %cst_13 {dimension_numbers = #tpu.dot_dimension_numbers<[1], [0], [0], [1], [0, 0, 1, 1], [], []>} : vector<16x32xbf16>, vector<32x32xbf16>, vector<16x32xf32> -> vector<16x32xf32>
    %15 = vector.broadcast %9 : vector<1x32xf32> to vector<16x32xf32>
    %16 = arith.addf %14, %15 : vector<16x32xf32>
    %c0_14 = arith.constant 0 : index
    %c0_15 = arith.constant 0 : index
    %17 = vector.load %arg3[%c0_14, %c0_15] : memref<16x64xf32, #tpu.memory_space<vmem>>, vector<16x64xf32>
    %18 = arith.truncf %17 : vector<16x64xf32> to vector<16x64xbf16>
    %c0_16 = arith.constant 0 : index
    %c0_17 = arith.constant 0 : index
    %19 = vector.load %arg6[%c0_16, %c0_17] : memref<64x64xbf16, #tpu.memory_space<vmem>>, vector<64x64xbf16>
    %cst_18 = arith.constant dense<0.000000e+00> : vector<16x64xf32>
    %20 = tpu.matmul %18, %19, %cst_18 {dimension_numbers = #tpu.dot_dimension_numbers<[1], [0], [0], [1], [0, 0, 1, 1], [], []>} : vector<16x64xbf16>, vector<64x64xbf16>, vector<16x64xf32> -> vector<16x64xf32>
    %21 = vector.broadcast %10 : vector<1x64xf32> to vector<16x64xf32>
    %22 = arith.addf %20, %21 : vector<16x64xf32>
    %23 = arith.truncf %8 : vector<16x32xf32> to vector<16x32xbf16>
    %24 = arith.truncf %16 : vector<16x32xf32> to vector<16x32xbf16>
    %cst_19 = arith.constant dense<0.000000e+00> : vector<16x16xf32>
    %25 = tpu.matmul %23, %24, %cst_19 {dimension_numbers = #tpu.dot_dimension_numbers<[1], [1], [0], [0], [0, 0, 1, 0], [], []>} : vector<16x32xbf16>, vector<16x32xbf16>, vector<16x16xf32> -> vector<16x16xf32>
    %c0_20 = arith.constant 0 : index
    %c0_21 = arith.constant 0 : index
    %26 = vector.load %arg8[%c0_20, %c0_21] : memref<16x16xf32, #tpu.memory_space<vmem>>, vector<16x16xf32>
    %27 = arith.addf %25, %26 : vector<16x16xf32>
    %cst_22 = arith.constant dense<0xFF800000> : vector<16xf32>
    %28 = vector.multi_reduction <maximumf>, %27, %cst_22 [1] : vector<16x16xf32> to vector<16xf32>
    %29 = vector.shape_cast %28 : vector<16xf32> to vector<16x1xf32>
    %30 = vector.broadcast %29 : vector<16x1xf32> to vector<16x16xf32>
    %31 = arith.subf %27, %30 : vector<16x16xf32>
    %32 = math.exp %31 : vector<16x16xf32>
    %cst_23 = arith.constant dense<0.000000e+00> : vector<16xf32>
    %33 = vector.multi_reduction <add>, %32, %cst_23 [1] : vector<16x16xf32> to vector<16xf32>
    %34 = vector.shape_cast %33 : vector<16xf32> to vector<16x1xf32>
    %35 = tpu.reciprocal %34 {approx = true} : vector<16x1xf32> -> vector<16x1xf32>
    %36 = vector.broadcast %35 : vector<16x1xf32> to vector<16x16xf32>
    %37 = arith.mulf %32, %36 : vector<16x16xf32>
    %38 = arith.truncf %37 : vector<16x16xf32> to vector<16x16xbf16>
    %39 = arith.truncf %22 : vector<16x64xf32> to vector<16x64xbf16>
    %cst_24 = arith.constant dense<0.000000e+00> : vector<16x64xf32>
    %40 = tpu.matmul %38, %39, %cst_24 {dimension_numbers = #tpu.dot_dimension_numbers<[1], [0], [0], [1], [0, 0, 1, 1], [], []>} : vector<16x16xbf16>, vector<16x64xbf16>, vector<16x64xf32> -> vector<16x64xf32>
    %cst_25 = arith.constant dense<0.000000e+00> : vector<16xf32>
    %41 = vector.multi_reduction <add>, %40, %cst_25 [1] : vector<16x64xf32> to vector<16xf32>
    %42 = vector.shape_cast %41 : vector<16xf32> to vector<16x1xf32>
    %cst_26 = arith.constant 6.400000e+01 : f32
    %43 = vector.broadcast %cst_26 : f32 to vector<16x1xf32>
    %44 = arith.divf %42, %43 : vector<16x1xf32>
    %45 = vector.broadcast %44 : vector<16x1xf32> to vector<16x64xf32>
    %46 = arith.subf %40, %45 : vector<16x64xf32>
    %47 = arith.mulf %46, %46 : vector<16x64xf32>
    %cst_27 = arith.constant dense<0.000000e+00> : vector<16xf32>
    %48 = vector.multi_reduction <add>, %47, %cst_27 [1] : vector<16x64xf32> to vector<16xf32>
    %49 = vector.shape_cast %48 : vector<16xf32> to vector<16x1xf32>
    %cst_28 = arith.constant 6.400000e+01 : f32
    %50 = vector.broadcast %cst_28 : f32 to vector<16x1xf32>
    %51 = arith.divf %49, %50 : vector<16x1xf32>
    %cst_29 = arith.constant 9.99999974E-6 : f32
    %52 = vector.broadcast %cst_29 : f32 to vector<16x1xf32>
    %53 = arith.addf %51, %52 : vector<16x1xf32>
    %54 = math.rsqrt %53 : vector<16x1xf32>
    %55 = vector.broadcast %54 : vector<16x1xf32> to vector<16x64xf32>
    %56 = arith.mulf %46, %55 : vector<16x64xf32>
    %57 = vector.broadcast %1 : vector<1x64xf32> to vector<16x64xf32>
    %58 = arith.mulf %56, %57 : vector<16x64xf32>
    %59 = vector.broadcast %2 : vector<1x64xf32> to vector<16x64xf32>
    %60 = arith.addf %58, %59 : vector<16x64xf32>
    %c0_30 = arith.constant 0 : index
    %c0_31 = arith.constant 0 : index
    %61 = vector.load %arg9[%c0_30, %c0_31] : memref<16x64xf32, #tpu.memory_space<vmem>>, vector<16x64xf32>
    tpu.vector_store %arg9[%c0_30, %c0_31], %60 {strides = array<i32>} : memref<16x64xf32, #tpu.memory_space<vmem>>, vector<16x64xf32>,
    return
  }
  func.func @transform_0(%arg0: i32) -> (i32, i32) {
    %c0_i32 = arith.constant 0 : i32
    %c0_i32_0 = arith.constant 0 : i32
    return %arg0, %c0_i32 : i32, i32
  }
  func.func @transform_1(%arg0: i32) -> (i32, i32) {
    %c0_i32 = arith.constant 0 : i32
    %c0_i32_0 = arith.constant 0 : i32
    return %arg0, %c0_i32 : i32, i32
  }
  func.func @transform_2(%arg0: i32) -> (i32, i32) {
    %c0_i32 = arith.constant 0 : i32
    %c0_i32_0 = arith.constant 0 : i32
    return %arg0, %c0_i32 : i32, i32
  }
  func.func @transform_3(%arg0: i32) -> (i32, i32) {
    %c0_i32 = arith.constant 0 : i32
    %c0_i32_0 = arith.constant 0 : i32
    %c0_i32_1 = arith.constant 0 : i32
    return %c0_i32, %c0_i32_0 : i32, i32
  }
  func.func @transform_4(%arg0: i32) -> (i32, i32) {
    %c0_i32 = arith.constant 0 : i32
    %c0_i32_0 = arith.constant 0 : i32
    %c0_i32_1 = arith.constant 0 : i32
    return %c0_i32, %c0_i32_0 : i32, i32
  }
  func.func @transform_5(%arg0: i32) -> (i32, i32) {
    %c0_i32 = arith.constant 0 : i32
    %c0_i32_0 = arith.constant 0 : i32
    %c0_i32_1 = arith.constant 0 : i32
    return %c0_i32, %c0_i32_0 : i32, i32
  }
  func.func @transform_6(%arg0: i32) -> (i32, i32) {
    %c0_i32 = arith.constant 0 : i32
    %c0_i32_0 = arith.constant 0 : i32
    %c0_i32_1 = arith.constant 0 : i32
    return %c0_i32, %c0_i32_0 : i32, i32
  }
  func.func @transform_7(%arg0: i32) -> (i32, i32) {
    %c0_i32 = arith.constant 0 : i32
    %c0_i32_0 = arith.constant 0 : i32
    %c0_i32_1 = arith.constant 0 : i32
    return %c0_i32, %c0_i32_0 : i32, i32
  }
  func.func @transform_8(%arg0: i32) -> (i32, i32) {
    %c0_i32 = arith.constant 0 : i32
    %c0_i32_0 = arith.constant 0 : i32
    return %arg0, %c0_i32 : i32, i32
  }
}

module attributes {stable_mosaic.version = 11 : i64} {
  func.func @kernel(%arg0: i32, %arg1: memref<16x32xf32, #tpu.memory_space<vmem>>, %arg2: memref<16x32xf32, #tpu.memory_space<vmem>>, %arg3: memref<16x64xf32, #tpu.memory_space<vmem>>, %arg4: memref<32x32xbf16, #tpu.memory_space<vmem>>, %arg5: memref<32x32xbf16, #tpu.memory_space<vmem>>, %arg6: memref<64x64xbf16, #tpu.memory_space<vmem>>, %arg7: memref<8x64xf32, #tpu.memory_space<vmem>>, %arg8: memref<16x16xf32, #tpu.memory_space<vmem>>, %arg9: memref<16x64xf32, #tpu.memory_space<vmem>>) attributes {dimension_semantics = [#tpu.dimension_semantics<parallel>], iteration_bounds = array<i64: 2>, scalar_prefetch = 0 : i64, scratch_operands = 0 : i64, tpu.core_type = #tpu.core_type<tc>, window_params = [{transform_indices = @transform_0, window_bounds = array<i64: 16, 32>}, {transform_indices = @transform_1, window_bounds = array<i64: 16, 32>}, {transform_indices = @transform_2, window_bounds = array<i64: 16, 64>}, {pipeline_mode = #tpu.pipeline_mode<synchronous>, transform_indices = @transform_3, window_bounds = array<i64: 32, 32>}, {pipeline_mode = #tpu.pipeline_mode<synchronous>, transform_indices = @transform_4, window_bounds = array<i64: 32, 32>}, {pipeline_mode = #tpu.pipeline_mode<synchronous>, transform_indices = @transform_5, window_bounds = array<i64: 64, 64>}, {pipeline_mode = #tpu.pipeline_mode<synchronous>, transform_indices = @transform_6, window_bounds = array<i64: 8, 64>}, {pipeline_mode = #tpu.pipeline_mode<synchronous>, transform_indices = @transform_7, window_bounds = array<i64: 16, 16>}, {transform_indices = @transform_8, window_bounds = array<i64: 16, 64>}]} {
    %c0 = arith.constant 0 : index
    %c0_0 = arith.constant 0 : index
    %0 = vector.load %arg7[%c0, %c0_0] : memref<8x64xf32, #tpu.memory_space<vmem>>, vector<1x32xf32>
    %c3 = arith.constant 3 : index
    %c0_1 = arith.constant 0 : index
    %1 = vector.load %arg7[%c3, %c0_1] : memref<8x64xf32, #tpu.memory_space<vmem>>, vector<1x64xf32>
    %c4 = arith.constant 4 : index
    %c0_2 = arith.constant 0 : index
    %2 = vector.load %arg7[%c4, %c0_2] : memref<8x64xf32, #tpu.memory_space<vmem>>, vector<1x64xf32>
    %c0_3 = arith.constant 0 : index
    %c0_4 = arith.constant 0 : index
    %3 = vector.load %arg1[%c0_3, %c0_4] : memref<16x32xf32, #tpu.memory_space<vmem>>, vector<16x32xf32>
    %4 = arith.truncf %3 : vector<16x32xf32> to vector<16x32xbf16>
    %c0_5 = arith.constant 0 : index
    %c0_6 = arith.constant 0 : index
    %5 = vector.load %arg4[%c0_5, %c0_6] : memref<32x32xbf16, #tpu.memory_space<vmem>>, vector<32x32xbf16>
    %cst = arith.constant dense<0.000000e+00> : vector<16x32xf32>
    %6 = tpu.matmul %4, %5, %cst {dimension_numbers = #tpu.dot_dimension_numbers<[1], [0], [0], [1], [0, 0, 1, 1], [], []>} : vector<16x32xbf16>, vector<32x32xbf16>, vector<16x32xf32> -> vector<16x32xf32>
    %7 = vector.broadcast %0 : vector<1x32xf32> to vector<16x32xf32>
    %8 = arith.addf %6, %7 : vector<16x32xf32>
    %c1 = arith.constant 1 : index
    %c0_7 = arith.constant 0 : index
    %9 = vector.load %arg7[%c1, %c0_7] : memref<8x64xf32, #tpu.memory_space<vmem>>, vector<1x32xf32>
    %c2 = arith.constant 2 : index
    %c0_8 = arith.constant 0 : index
    %10 = vector.load %arg7[%c2, %c0_8] : memref<8x64xf32, #tpu.memory_space<vmem>>, vector<1x64xf32>
    %c0_9 = arith.constant 0 : index
    %c0_10 = arith.constant 0 : index
    %11 = vector.load %arg2[%c0_9, %c0_10] : memref<16x32xf32, #tpu.memory_space<vmem>>, vector<16x32xf32>
    %12 = arith.truncf %11 : vector<16x32xf32> to vector<16x32xbf16>
    %c0_11 = arith.constant 0 : index
    %c0_12 = arith.constant 0 : index
    %13 = vector.load %arg5[%c0_11, %c0_12] : memref<32x32xbf16, #tpu.memory_space<vmem>>, vector<32x32xbf16>
    %cst_13 = arith.constant dense<0.000000e+00> : vector<16x32xf32>
    %14 = tpu.matmul %12, %13, %cst_13 {dimension_numbers = #tpu.dot_dimension_numbers<[1], [0], [0], [1], [0, 0, 1, 1], [], []>} : vector<16x32xbf16>, vector<32x32xbf16>, vector<16x32xf32> -> vector<16x32xf32>
    %15 = vector.broadcast %9 : vector<1x32xf32> to vector<16x32xf32>
    %16 = arith.addf %14, %15 : vector<16x32xf32>
    %c0_14 = arith.constant 0 : index
    %c0_15 = arith.constant 0 : index
    %17 = vector.load %arg3[%c0_14, %c0_15] : memref<16x64xf32, #tpu.memory_space<vmem>>, vector<16x64xf32>
    %18 = arith.truncf %17 : vector<16x64xf32> to vector<16x64xbf16>
    %c0_16 = arith.constant 0 : index
    %c0_17 = arith.constant 0 : index
    %19 = vector.load %arg6[%c0_16, %c0_17] : memref<64x64xbf16, #tpu.memory_space<vmem>>, vector<64x64xbf16>
    %cst_18 = arith.constant dense<0.000000e+00> : vector<16x64xf32>
    %20 = tpu.matmul %18, %19, %cst_18 {dimension_numbers = #tpu.dot_dimension_numbers<[1], [0], [0], [1], [0, 0, 1, 1], [], []>} : vector<16x64xbf16>, vector<64x64xbf16>, vector<16x64xf32> -> vector<16x64xf32>
    %21 = vector.broadcast %10 : vector<1x64xf32> to vector<16x64xf32>
    %22 = arith.addf %20, %21 : vector<16x64xf32>
    %23 = arith.truncf %8 : vector<16x32xf32> to vector<16x32xbf16>
    %24 = arith.truncf %16 : vector<16x32xf32> to vector<16x32xbf16>
    %cst_19 = arith.constant dense<0.000000e+00> : vector<16x16xf32>
    %25 = tpu.matmul %23, %24, %cst_19 {dimension_numbers = #tpu.dot_dimension_numbers<[1], [1], [0], [0], [0, 0, 1, 0], [], []>} : vector<16x32xbf16>, vector<16x32xbf16>, vector<16x16xf32> -> vector<16x16xf32>
    %c0_20 = arith.constant 0 : index
    %c0_21 = arith.constant 0 : index
    %26 = vector.load %arg8[%c0_20, %c0_21] : memref<16x16xf32, #tpu.memory_space<vmem>>, vector<16x16xf32>
    %27 = arith.addf %25, %26 : vector<16x16xf32>
    %cst_22 = arith.constant dense<0xFF800000> : vector<16xf32>
    %28 = vector.multi_reduction <maximumf>, %27, %cst_22 [1] : vector<16x16xf32> to vector<16xf32>
    %29 = vector.shape_cast %28 : vector<16xf32> to vector<16x1xf32>
    %30 = vector.broadcast %29 : vector<16x1xf32> to vector<16x16xf32>
    %31 = arith.subf %27, %30 : vector<16x16xf32>
    %32 = math.exp %31 : vector<16x16xf32>
    %cst_23 = arith.constant dense<0.000000e+00> : vector<16xf32>
    %33 = vector.multi_reduction <add>, %32, %cst_23 [1] : vector<16x16xf32> to vector<16xf32>
    %34 = vector.shape_cast %33 : vector<16xf32> to vector<16x1xf32>
    %35 = tpu.reciprocal %34 {approx = true} : vector<16x1xf32> -> vector<16x1xf32>
    %36 = vector.broadcast %35 : vector<16x1xf32> to vector<16x16xf32>
    %37 = arith.mulf %32, %36 : vector<16x16xf32>
    %38 = arith.truncf %37 : vector<16x16xf32> to vector<16x16xbf16>
    %39 = arith.truncf %22 : vector<16x64xf32> to vector<16x64xbf16>
    %cst_24 = arith.constant dense<0.000000e+00> : vector<16x64xf32>
    %40 = tpu.matmul %38, %39, %cst_24 {dimension_numbers = #tpu.dot_dimension_numbers<[1], [0], [0], [1], [0, 0, 1, 1], [], []>} : vector<16x16xbf16>, vector<16x64xbf16>, vector<16x64xf32> -> vector<16x64xf32>
    %cst_25 = arith.constant dense<0.000000e+00> : vector<16xf32>
    %41 = vector.multi_reduction <add>, %40, %cst_25 [1] : vector<16x64xf32> to vector<16xf32>
    %42 = vector.shape_cast %41 : vector<16xf32> to vector<16x1xf32>
    %cst_26 = arith.constant 6.400000e+01 : f32
    %43 = vector.broadcast %cst_26 : f32 to vector<16x1xf32>
    %44 = arith.divf %42, %43 : vector<16x1xf32>
    %45 = vector.broadcast %44 : vector<16x1xf32> to vector<16x64xf32>
    %46 = arith.subf %40, %45 : vector<16x64xf32>
    %47 = arith.mulf %46, %46 : vector<16x64xf32>
    %cst_27 = arith.constant dense<0.000000e+00> : vector<16xf32>
    %48 = vector.multi_reduction <add>, %47, %cst_27 [1] : vector<16x64xf32> to vector<16xf32>
    %49 = vector.shape_cast %48 : vector<16xf32> to vector<16x1xf32>
    %cst_28 = arith.constant 6.400000e+01 : f32
    %50 = vector.broadcast %cst_28 : f32 to vector<16x1xf32>
    %51 = arith.divf %49, %50 : vector<16x1xf32>
    %cst_29 = arith.constant 9.99999974E-6 : f32
    %52 = vector.broadcast %cst_29 : f32 to vector<16x1xf32>
    %53 = arith.addf %51, %52 : vector<16x1xf32>
    %54 = math.rsqrt %53 : vector<16x1xf32>
    %55 = vector.broadcast %54 : vector<16x1xf32> to vector<16x64xf32>
    %56 = arith.mulf %46, %55 : vector<16x64xf32>
    %57 = vector.broadcast %1 : vector<1x64xf32> to vector<16x64xf32>
    %58 = arith.mulf %56, %57 : vector<16x64xf32>
    %59 = vector.broadcast %2 : vector<1x64xf32> to vector<16x64xf32>
    %60 = arith.addf %58, %59 : vector<16x64xf32>
    %c0_30 = arith.constant 0 : index
    %c0_31 = arith.constant 0 : index
    %61 = vector.load %arg9[%c0_30, %c0_31] : memref<16x64xf32, #tpu.memory_space<vmem>>, vector<16x64xf32>
    tpu.vector_store %arg9[%c0_30, %c0_31], %60 {strides = array<i32>} : memref<16x64xf32, #tpu.memory_space<vmem>>, vector<16x64xf32>,
    return
  }
  func.func @transform_0(%arg0: i32) -> (i32, i32) {
    %c0_i32 = arith.constant 0 : i32
    %c0_i32_0 = arith.constant 0 : i32
    return %arg0, %c0_i32 : i32, i32
  }
  func.func @transform_1(%arg0: i32) -> (i32, i32) {
    %c0_i32 = arith.constant 0 : i32
    %c0_i32_0 = arith.constant 0 : i32
    return %arg0, %c0_i32 : i32, i32
  }
  func.func @transform_2(%arg0: i32) -> (i32, i32) {
    %c0_i32 = arith.constant 0 : i32
    %c0_i32_0 = arith.constant 0 : i32
    return %arg0, %c0_i32 : i32, i32
  }
  func.func @transform_3(%arg0: i32) -> (i32, i32) {
    %c0_i32 = arith.constant 0 : i32
    %c0_i32_0 = arith.constant 0 : i32
    %c0_i32_1 = arith.constant 0 : i32
    return %c0_i32, %c0_i32_0 : i32, i32
  }
  func.func @transform_4(%arg0: i32) -> (i32, i32) {
    %c0_i32 = arith.constant 0 : i32
    %c0_i32_0 = arith.constant 0 : i32
    %c0_i32_1 = arith.constant 0 : i32
    return %c0_i32, %c0_i32_0 : i32, i32
  }
  func.func @transform_5(%arg0: i32) -> (i32, i32) {
    %c0_i32 = arith.constant 0 : i32
    %c0_i32_0 = arith.constant 0 : i32
    %c0_i32_1 = arith.constant 0 : i32
    return %c0_i32, %c0_i32_0 : i32, i32
  }
  func.func @transform_6(%arg0: i32) -> (i32, i32) {
    %c0_i32 = arith.constant 0 : i32
    %c0_i32_0 = arith.constant 0 : i32
    %c0_i32_1 = arith.constant 0 : i32
    return %c0_i32, %c0_i32_0 : i32, i32
  }
  func.func @transform_7(%arg0: i32) -> (i32, i32) {
    %c0_i32 = arith.constant 0 : i32
    %c0_i32_0 = arith.constant 0 : i32
    %c0_i32_1 = arith.constant 0 : i32
    return %c0_i32, %c0_i32_0 : i32, i32
  }
  func.func @transform_8(%arg0: i32) -> (i32, i32) {
    %c0_i32 = arith.constant 0 : i32
    %c0_i32_0 = arith.constant 0 : i32
    return %arg0, %c0_i32 : i32, i32
  }
}

</mosaic_0001>

<llo_original>
// kernel: tpu_custom_call.1
$region0: #{tpu_custom_call.1}
  #allocation0 [shape = 'u32[]', space=smem, size = 0x4, offset = 0x4, fixed_abs, tag = 'smem constant byte address 0x4 - core index']
  #allocation1 [shape = 'u32[72,128]{1,0:T(1,128)}', space=vmem, size = 0x9000, scoped, tag = 'internal scratch']
  %s0 = inlined_call_operand.hbm [shape: f32[32,32], index: 0, kind: input, shape index: {}]
  %s1 = inlined_call_operand.hbm [shape: f32[32,32], index: 1, kind: input, shape index: {}]
  %s2 = inlined_call_operand.hbm [shape: f32[32,64], index: 2, kind: input, shape index: {}]
  %s3 = inlined_call_operand.hbm [shape: bf16[32,32], index: 3, kind: input, shape index: {}]
  %s4 = inlined_call_operand.hbm [shape: bf16[96,96], index: 4, kind: input, shape index: {}]
  %s5 = inlined_call_operand.hbm [shape: f32[8,96], index: 5, kind: input, shape index: {}]
  %s6 = inlined_call_operand.hbm [shape: f32[16,16], index: 6, kind: input, shape index: {}]
  %s7 = inlined_call_operand.hbm [shape: f32[32,64], index: 7, kind: output, shape index: {}]
  %s8 = sld [smem:[#allocation0]]
  $region89: #{tpu_custom_call.1} parent=0
    _
  %s10 = ssub.s32 1, %s8
  %s11 = scalar_select 0, %s10, %s8
  $region1: #{tpu_custom_call.1} parent=0
    #allocation2 [shape = 'u8[16384]{0}', space=vmem, size = 0x4000, scoped, tag = 'input window, operand 0']
    #allocation3 [shape = 's32[2]{0}', space=sflag, size = 0x8, scoped, tag = 'scoped memory for tpu_custom_call.1']
    #allocation4 [shape = 's32[2]{0}', space=sflag, size = 0x8, scoped, tag = 'scoped memory for tpu_custom_call.1']
    #allocation5 [shape = 'u8[16384]{0}', space=vmem, size = 0x4000, scoped, tag = 'input window, operand 1']
    #allocation6 [shape = 's32[2]{0}', space=sflag, size = 0x8, scoped, tag = 'scoped memory for tpu_custom_call.1']
    #allocation7 [shape = 'u8[16384]{0}', space=vmem, size = 0x4000, scoped, tag = 'input window, operand 2']
    #allocation8 [shape = 'u8[8192]{0}', space=vmem, size = 0x2000, scoped, tag = 'input window, operand 3, single buffered']
    #allocation9 [shape = 's32[1]{0}', space=sflag, size = 0x4, scoped, tag = 'scoped memory for tpu_custom_call.1']
    #allocation10 [shape = 'u8[24576]{0}', space=vmem, size = 0x6000, scoped, tag = 'input window, operand 4, single buffered']
    #allocation11 [shape = 'u8[4096]{0}', space=vmem, size = 0x1000, scoped, tag = 'input window, operand 5, single buffered']
    #allocation12 [shape = 's32[1]{0}', space=sflag, size = 0x4, scoped, tag = 'scoped memory for tpu_custom_call.1']
    #allocation13 [shape = 'u8[8192]{0}', space=vmem, size = 0x2000, scoped, tag = 'input window, operand 6, single buffered']
    #allocation14 [shape = 'u8[16384]{0}', space=vmem, size = 0x4000, scoped, tag = 'output window, operand 0']
    %12 = vsyncpa [#allocation3], 0
    %s13 = scalar_lea.sflag [#allocation3], 1
    %14 = vsyncpa %s13, 0
    %15 = vsyncpa [#allocation6], 0
    %s16 = scalar_lea.sflag [#allocation6], 1
    %17 = vsyncpa %s16, 0
    %18 = vsyncpa [#allocation9], 0
    %19 = vsyncpa [#allocation12], 0
    %20 = vsyncpa [#allocation4], 0
    %s21 = scalar_lea.sflag [#allocation4], 1
    %22 = vsyncpa %s21, 0
    loop: start=0, step=1, limit=4
    $region2: #{tpu_custom_call.1} parent=1 // loop_pre_header
      _
    $region3: #{tpu_custom_call.1} parent=1 // loop_header
      %s24 = sphi 0, %s28
      %p25 = scmp.ge.s32.totalorder %s24, 4
      %s34 = sphi 0, %s36
      %s37 = sphi 0, %s34
      %s38 = sphi 0, %s37
      %s54 = sphi 0, %s38
      %s60 = sphi 0, %s62
      %s63 = sphi 0, %s60
      %s64 = sphi 0, %s63
      %s80 = sphi 0, %s64
      %s86 = sphi 0, %s88
      %s89 = sphi 0, %s86
      %s90 = sphi 0, %s89
      %s106 = sphi 0, %s90
      %s110 = sphi 0, %s110
      %s112 = sphi 0, %s110
      %s113 = sphi 0, %s112
      %s127 = sphi 0, %s113
      %s131 = sphi 0, %s131
      %s133 = sphi 0, %s131
      %s134 = sphi 0, %s133
      %s148 = sphi 0, %s134
      %s152 = sphi 0, %s152
      %s154 = sphi 0, %s152
      %s155 = sphi 0, %s154
      %s169 = sphi 0, %s155
      %s173 = sphi 0, %s173
      %s175 = sphi 0, %s173
      %s176 = sphi 0, %s175
      %s190 = sphi 0, %s176
      %s196 = sphi 0, %s198
      %s199 = sphi 0, %s196
      %s200 = sphi 0, %s199
      %s216 = sphi 0, %s200
    $region4: #{tpu_custom_call.1} parent=1 // loop_header_branch
      %27 = sbr.rel (%p25) target = $region8
    $region5: #{tpu_custom_call.1} parent=1 // loop_body
      %s29 = ssub.s32 %s24, 1
      %s30 = ssub.s32 %s24, 2
      %s31 = sadd.s32 %s24, 1
      %s32 = ssub.s32 %s24, %s31
      %p33 = scmp.eq.s32.totalorder %s32, 0
      %s35 = sadd.s32 %s34, 1
      %s36 = scalar_select %p33, %s34, %s35
      %p39 = pneg %p33
      %p40 = scmp.eq.s32.totalorder %s24, 1
      %p41 = por %p39, %p40
      %p42 = scmp.ne.s32.totalorder %s34, %s37
      %p43 = scmp.eq.s32.totalorder %s24, 0
      %p44 = por %p42, %p43
      %p45 = scmp.ne.s32.totalorder %s34, %s37
      %p46 = scmp.eq.s32.totalorder %s29, 1
      %p47 = por %p45, %p46
      %p48 = scmp.ne.s32.totalorder %s37, %s38
      %p49 = scmp.eq.s32.totalorder %s29, 0
      %p50 = por %p48, %p49
      %p51 = scmp.ne.s32.totalorder %s37, %s38
      %p52 = scmp.eq.s32.totalorder %s30, 1
      %p53 = por %p51, %p52
      %p55 = scmp.ne.s32.totalorder %s38, %s54
      %p56 = scmp.eq.s32.totalorder %s30, 0
      %p57 = por %p55, %p56
      %s58 = ssub.s32 %s24, %s31
      %p59 = scmp.eq.s32.totalorder %s58, 0
      %s61 = sadd.s32 %s60, 1
      %s62 = scalar_select %p59, %s60, %s61
      %p65 = pneg %p59
      %p66 = scmp.eq.s32.totalorder %s24, 1
      %p67 = por %p65, %p66
      %p68 = scmp.ne.s32.totalorder %s60, %s63
      %p69 = scmp.eq.s32.totalorder %s24, 0
      %p70 = por %p68, %p69
      %p71 = scmp.ne.s32.totalorder %s60, %s63
      %p72 = scmp.eq.s32.totalorder %s29, 1
      %p73 = por %p71, %p72
      %p74 = scmp.ne.s32.totalorder %s63, %s64
      %p75 = scmp.eq.s32.totalorder %s29, 0
      %p76 = por %p74, %p75
      %p77 = scmp.ne.s32.totalorder %s63, %s64
      %p78 = scmp.eq.s32.totalorder %s30, 1
      %p79 = por %p77, %p78
      %p81 = scmp.ne.s32.totalorder %s64, %s80
      %p82 = scmp.eq.s32.totalorder %s30, 0
      %p83 = por %p81, %p82
      %s84 = ssub.s32 %s24, %s31
      %p85 = scmp.eq.s32.totalorder %s84, 0
      %s87 = sadd.s32 %s86, 1
      %s88 = scalar_select %p85, %s86, %s87
      %p91 = pneg %p85
      %p92 = scmp.eq.s32.totalorder %s24, 1
      %p93 = por %p91, %p92
      %p94 = scmp.ne.s32.totalorder %s86, %s89
      %p95 = scmp.eq.s32.totalorder %s24, 0
      %p96 = por %p94, %p95
      %p97 = scmp.ne.s32.totalorder %s86, %s89
      %p98 = scmp.eq.s32.totalorder %s29, 1
      %p99 = por %p97, %p98
      %p100 = scmp.ne.s32.totalorder %s89, %s90
      %p101 = scmp.eq.s32.totalorder %s29, 0
      %p102 = por %p100, %p101
      %p103 = scmp.ne.s32.totalorder %s89, %s90
      %p104 = scmp.eq.s32.totalorder %s30, 1
      %p105 = por %p103, %p104
      %p107 = scmp.ne.s32.totalorder %s90, %s106
      %p108 = scmp.eq.s32.totalorder %s30, 0
      %p109 = por %p107, %p108
      %s111 = sadd.s32 %s110, 1
      %p114 = scmp.eq.s32.totalorder %s24, 1
      %p115 = scmp.ne.s32.totalorder %s110, %s112
      %p116 = scmp.eq.s32.totalorder %s24, 0
      %p117 = por %p115, %p116
      %p118 = scmp.ne.s32.totalorder %s110, %s112
      %p119 = scmp.eq.s32.totalorder %s29, 1
      %p120 = por %p118, %p119
      %p121 = scmp.ne.s32.totalorder %s112, %s113
      %p122 = scmp.eq.s32.totalorder %s29, 0
      %p123 = por %p121, %p122
      %p124 = scmp.ne.s32.totalorder %s112, %s113
      %p125 = scmp.eq.s32.totalorder %s30, 1
      %p126 = por %p124, %p125
      %p128 = scmp.ne.s32.totalorder %s113, %s127
      %p129 = scmp.eq.s32.totalorder %s30, 0
      %p130 = por %p128, %p129
      %s132 = sadd.s32 %s131, 1
      %p135 = scmp.eq.s32.totalorder %s24, 1
      %p136 = scmp.ne.s32.totalorder %s131, %s133
      %p137 = scmp.eq.s32.totalorder %s24, 0
      %p138 = por %p136, %p137
      %p139 = scmp.ne.s32.totalorder %s131, %s133
      %p140 = scmp.eq.s32.totalorder %s29, 1
      %p141 = por %p139, %p140
      %p142 = scmp.ne.s32.totalorder %s133, %s134
      %p143 = scmp.eq.s32.totalorder %s29, 0
      %p144 = por %p142, %p143
      %p145 = scmp.ne.s32.totalorder %s133, %s134
      %p146 = scmp.eq.s32.totalorder %s30, 1
      %p147 = por %p145, %p146
      %p149 = scmp.ne.s32.totalorder %s134, %s148
      %p150 = scmp.eq.s32.totalorder %s30, 0
      %p151 = por %p149, %p150
      %s153 = sadd.s32 %s152, 1
      %p156 = scmp.eq.s32.totalorder %s24, 1
      %p157 = scmp.ne.s32.totalorder %s152, %s154
      %p158 = scmp.eq.s32.totalorder %s24, 0
      %p159 = por %p157, %p158
      %p160 = scmp.ne.s32.totalorder %s152, %s154
      %p161 = scmp.eq.s32.totalorder %s29, 1
      %p162 = por %p160, %p161
      %p163 = scmp.ne.s32.totalorder %s154, %s155
      %p164 = scmp.eq.s32.totalorder %s29, 0
      %p165 = por %p163, %p164
      %p166 = scmp.ne.s32.totalorder %s154, %s155
      %p167 = scmp.eq.s32.totalorder %s30, 1
      %p168 = por %p166, %p167
      %p170 = scmp.ne.s32.totalorder %s155, %s169
      %p171 = scmp.eq.s32.totalorder %s30, 0
      %p172 = por %p170, %p171
      %s174 = sadd.s32 %s173, 1
      %p177 = scmp.eq.s32.totalorder %s24, 1
      %p178 = scmp.ne.s32.totalorder %s173, %s175
      %p179 = scmp.eq.s32.totalorder %s24, 0
      %p180 = por %p178, %p179
      %p181 = scmp.ne.s32.totalorder %s173, %s175
      %p182 = scmp.eq.s32.totalorder %s29, 1
      %p183 = por %p181, %p182
      %p184 = scmp.ne.s32.totalorder %s175, %s176
      %p185 = scmp.eq.s32.totalorder %s29, 0
      %p186 = por %p184, %p185
      %p187 = scmp.ne.s32.totalorder %s175, %s176
      %p188 = scmp.eq.s32.totalorder %s30, 1
      %p189 = por %p187, %p188
      %p191 = scmp.ne.s32.totalorder %s176, %s190
      %p192 = scmp.eq.s32.totalorder %s30, 0
      %p193 = por %p191, %p192
      %s194 = ssub.s32 %s24, %s31
      %p195 = scmp.eq.s32.totalorder %s194, 0
      %s197 = sadd.s32 %s196, 1
      %s198 = scalar_select %p195, %s196, %s197
      %p201 = pneg %p195
      %p202 = scmp.eq.s32.totalorder %s24, 1
      %p203 = por %p201, %p202
      %p204 = scmp.ne.s32.totalorder %s196, %s199
      %p205 = scmp.eq.s32.totalorder %s24, 0
      %p206 = por %p204, %p205
      %p207 = scmp.ne.s32.totalorder %s196, %s199
      %p208 = scmp.eq.s32.totalorder %s29, 1
      %p209 = por %p207, %p208
      %p210 = scmp.ne.s32.totalorder %s199, %s200
      %p211 = scmp.eq.s32.totalorder %s29, 0
      %p212 = por %p210, %p211
      %p213 = scmp.ne.s32.totalorder %s199, %s200
      %p214 = scmp.eq.s32.totalorder %s30, 1
      %p215 = por %p213, %p214
      %p217 = scmp.ne.s32.totalorder %s200, %s216
      %p218 = scmp.eq.s32.totalorder %s30, 0
      %p219 = por %p217, %p218
      %p220 = scmp.le.s32.totalorder 1, %s24
      %p221 = scmp.lt.s32.totalorder %s24, 3
      %p222 = pnand %p220, %p221
      %p223 = pneg %p222
      // Predicated region
      $region9: #{tpu_custom_call.1} parent=5 // pred_check
        _
      $region10: #{tpu_custom_call.1} parent=5 // pred_check_branch
        %225 = sbr.rel (%p222) target = $region12
      $region11: #{tpu_custom_call.1} parent=5 // pred_region
        %s226 = ssub.s32 %s24, 1
        // Predicated region
        $region13: #{tpu_custom_call.1} parent=11 // pred_check
          %p227 = pneg %p123
        $region14: #{tpu_custom_call.1} parent=11 // pred_check_branch
          %229 = sbr.rel (%p227) target = $region16
        $region15: #{tpu_custom_call.1} parent=11 // pred_region
          %231 = vsyncadd [#allocation9], 0
          %s232 = sshll.u32 %s3, 4
          %s233 = int_to_ptr.hbm [resolvable:$true] %s232
          %s234 = sshll.u32 [#allocation8], 4
          %s235 = int_to_ptr.vmem [resolvable:$true] %s234
          %240 = dma.hbm_to_vmem [thread:$0]  %s233, 256, %s235, [#allocation9], 64, 64, 4
        $region16: #{tpu_custom_call.1} parent=11 // pred_fallthru
          _
        // Predicated region
        $region17: #{tpu_custom_call.1} parent=11 // pred_check
          %p241 = pneg %p144
        $region18: #{tpu_custom_call.1} parent=11 // pred_check_branch
          %243 = sbr.rel (%p241) target = $region20
        $region19: #{tpu_custom_call.1} parent=11 // pred_region
          %245 = vsyncadd [#allocation9], 0
          %s246 = sshll.u32 %s4, 4
          %s247 = int_to_ptr.hbm [resolvable:$true] %s246
          %s248 = sshll.u32 [#allocation10], 4
          %s249 = int_to_ptr.vmem [resolvable:$true] %s248
          %254 = dma.hbm_to_vmem [thread:$0]  %s247, 768, %s249, [#allocation9], 64, 64, 4
        $region20: #{tpu_custom_call.1} parent=11 // pred_fallthru
          _
        // Predicated region
        $region21: #{tpu_custom_call.1} parent=11 // pred_check
          %p255 = pneg %p165
        $region22: #{tpu_custom_call.1} parent=11 // pred_check_branch
          %257 = sbr.rel (%p255) target = $region24
        $region23: #{tpu_custom_call.1} parent=11 // pred_region
          %259 = vsyncadd [#allocation12], 0
          %s261 = sshll.u32 %s5, 4
          %s262 = int_to_ptr.hbm [resolvable:$true] %s261
          %s263 = sshll.u32 [#allocation11], 4
          %s264 = int_to_ptr.vmem [resolvable:$true] %s263
          %266 = dma.hbm_to_vmem [thread:$0]  %s262, 128, %s264, [#allocation12]
        $region24: #{tpu_custom_call.1} parent=11 // pred_fallthru
          _
        // Predicated region
        $region25: #{tpu_custom_call.1} parent=11 // pred_check
          %p267 = pneg %p186
        $region26: #{tpu_custom_call.1} parent=11 // pred_check_branch
          %269 = sbr.rel (%p267) target = $region28
        $region27: #{tpu_custom_call.1} parent=11 // pred_region
          %271 = vsyncadd [#allocation12], 0
          %s272 = sshll.u32 %s6, 4
          %s273 = int_to_ptr.hbm [resolvable:$true] %s272
          %s274 = sshll.u32 [#allocation13], 4
          %s275 = int_to_ptr.vmem [resolvable:$true] %s274
          %280 = dma.hbm_to_vmem [thread:$0]  %s273, 256, %s275, [#allocation12], 128, 128, 8
        $region28: #{tpu_custom_call.1} parent=11 // pred_fallthru
          _
      $region12: #{tpu_custom_call.1} parent=5 // pred_fallthru
        _
      %p281 = scmp.lt.s32.totalorder %s24, 2
      // Predicated region
      $region29: #{tpu_custom_call.1} parent=5 // pred_check
        %p282 = pneg %p281
      $region30: #{tpu_custom_call.1} parent=5 // pred_check_branch
        %284 = sbr.rel (%p282) target = $region32
      $region31: #{tpu_custom_call.1} parent=5 // pred_region
        // Predicated region
        $region33: #{tpu_custom_call.1} parent=31 // pred_check
          %p285 = pneg %p44
        $region34: #{tpu_custom_call.1} parent=31 // pred_check_branch
          %287 = sbr.rel (%p285) target = $region36
        $region35: #{tpu_custom_call.1} parent=31 // pred_region
          %s288 = sand.u32 %s34, 1
          %s289 = scalar_lea.sflag [#allocation3], %s288
          %s290 = sand.u32 %s34, 1
          %s291 = smul.addr %s290, 16
          %s292 = scalar_lea.vmem [#allocation2], %s291
          %s293 = smul.u32 2, %s24
          %295 = vsyncadd %s289, 0
          %s296 = smul.addr %s293, 8
          %s297 = scalar_lea.hbm %s0, %s296
          %s298 = sshll.u32 %s297, 4
          %s299 = int_to_ptr.hbm [resolvable:$true] %s298
          %s300 = sshll.u32 %s292, 4
          %s301 = int_to_ptr.vmem [resolvable:$true] %s300
          %306 = dma.hbm_to_vmem [thread:$0]  %s299, 256, %s301, %s289, 128, 128, 8
        $region36: #{tpu_custom_call.1} parent=31 // pred_fallthru
          _
        // Predicated region
        $region37: #{tpu_custom_call.1} parent=31 // pred_check
          %p307 = pneg %p70
        $region38: #{tpu_custom_call.1} parent=31 // pred_check_branch
          %309 = sbr.rel (%p307) target = $region40
        $region39: #{tpu_custom_call.1} parent=31 // pred_region
          %s310 = sand.u32 %s24, 1
          %s311 = scalar_lea.sflag [#allocation6], %s310
          %s312 = sand.u32 %s60, 1
          %s313 = smul.addr %s312, 16
          %s314 = scalar_lea.vmem [#allocation5], %s313
          %s315 = smul.u32 2, %s24
          %317 = vsyncadd %s311, 0
          %s318 = smul.addr %s315, 8
          %s319 = scalar_lea.hbm %s1, %s318
          %s320 = sshll.u32 %s319, 4
          %s321 = int_to_ptr.hbm [resolvable:$true] %s320
          %s322 = sshll.u32 %s314, 4
          %s323 = int_to_ptr.vmem [resolvable:$true] %s322
          %328 = dma.hbm_to_vmem [thread:$0]  %s321, 256, %s323, %s311, 128, 128, 8
        $region40: #{tpu_custom_call.1} parent=31 // pred_fallthru
          _
        // Predicated region
        $region41: #{tpu_custom_call.1} parent=31 // pred_check
          %p329 = pneg %p96
        $region42: #{tpu_custom_call.1} parent=31 // pred_check_branch
          %331 = sbr.rel (%p329) target = $region44
        $region43: #{tpu_custom_call.1} parent=31 // pred_region
          %s332 = sand.u32 %s24, 1
          %s333 = scalar_lea.sflag [#allocation6], %s332
          %s334 = sand.u32 %s86, 1
          %s335 = smul.addr %s334, 16
          %s336 = scalar_lea.vmem [#allocation7], %s335
          %s337 = smul.u32 2, %s24
          %339 = vsyncadd %s333, 0
          %s340 = smul.addr %s337, 8
          %s341 = scalar_lea.hbm %s2, %s340
          %s342 = sshll.u32 %s341, 4
          %s343 = int_to_ptr.hbm [resolvable:$true] %s342
          %s344 = sshll.u32 %s336, 4
          %s345 = int_to_ptr.vmem [resolvable:$true] %s344
          %350 = dma.hbm_to_vmem [thread:$0]  %s343, 256, %s345, %s333, 128, 128, 8
        $region44: #{tpu_custom_call.1} parent=31 // pred_fallthru
          _
      $region32: #{tpu_custom_call.1} parent=5 // pred_fallthru
        _
      %p351 = scmp.le.s32.totalorder 1, %s24
      %p352 = scmp.lt.s32.totalorder %s24, 3
      %p353 = pnand %p351, %p352
      %p354 = pneg %p353
      // Predicated region
      $region45: #{tpu_custom_call.1} parent=5 // pred_check
        _
      $region46: #{tpu_custom_call.1} parent=5 // pred_check_branch
        %356 = sbr.rel (%p353) target = $region48
      $region47: #{tpu_custom_call.1} parent=5 // pred_region
        %s357 = ssub.s32 %s24, 1
        %s358 = sand.u32 %s37, 1
        %s359 = scalar_lea.sflag [#allocation3], %s358
        %s360 = sand.u32 %s37, 1
        %s361 = smul.addr %s360, 16
        %s362 = scalar_lea.vmem [#allocation2], %s361
        // Predicated region
        $region49: #{tpu_custom_call.1} parent=47 // pred_check
          %p363 = pneg %p50
        $region50: #{tpu_custom_call.1} parent=47 // pred_check_branch
          %365 = sbr.rel (%p363) target = $region52
        $region51: #{tpu_custom_call.1} parent=47 // pred_region
          %367 = dma.done %s359, 256
        $region52: #{tpu_custom_call.1} parent=47 // pred_fallthru
          _
        %s368 = sand.u32 %s29, 1
        %s369 = scalar_lea.sflag [#allocation6], %s368
        %s370 = sand.u32 %s63, 1
        %s371 = smul.addr %s370, 16
        %s372 = scalar_lea.vmem [#allocation5], %s371
        // Predicated region
        $region53: #{tpu_custom_call.1} parent=47 // pred_check
          %p373 = pneg %p76
        $region54: #{tpu_custom_call.1} parent=47 // pred_check_branch
          %375 = sbr.rel (%p373) target = $region56
        $region55: #{tpu_custom_call.1} parent=47 // pred_region
          %377 = dma.done %s369, 256
        $region56: #{tpu_custom_call.1} parent=47 // pred_fallthru
          _
        %s378 = sand.u32 %s29, 1
        %s379 = scalar_lea.sflag [#allocation6], %s378
        %s380 = sand.u32 %s89, 1
        %s381 = smul.addr %s380, 16
        %s382 = scalar_lea.vmem [#allocation7], %s381
        // Predicated region
        $region57: #{tpu_custom_call.1} parent=47 // pred_check
          %p383 = pneg %p102
        $region58: #{tpu_custom_call.1} parent=47 // pred_check_branch
          %385 = sbr.rel (%p383) target = $region60
        $region59: #{tpu_custom_call.1} parent=47 // pred_region
          %387 = dma.done %s379, 256
        $region60: #{tpu_custom_call.1} parent=47 // pred_fallthru
          _
        // Predicated region
        $region61: #{tpu_custom_call.1} parent=47 // pred_check
          %p388 = pneg %p123
        $region62: #{tpu_custom_call.1} parent=47 // pred_check_branch
          %390 = sbr.rel (%p388) target = $region64
        $region63: #{tpu_custom_call.1} parent=47 // pred_region
          %392 = dma.done [#allocation9], 256
        $region64: #{tpu_custom_call.1} parent=47 // pred_fallthru
          _
        // Predicated region
        $region65: #{tpu_custom_call.1} parent=47 // pred_check
          %p393 = pneg %p144
        $region66: #{tpu_custom_call.1} parent=47 // pred_check_branch
          %395 = sbr.rel (%p393) target = $region68
        $region67: #{tpu_custom_call.1} parent=47 // pred_region
          %397 = dma.done [#allocation9], 768
        $region68: #{tpu_custom_call.1} parent=47 // pred_fallthru
          _
        // Predicated region
        $region69: #{tpu_custom_call.1} parent=47 // pred_check
          %p398 = pneg %p165
        $region70: #{tpu_custom_call.1} parent=47 // pred_check_branch
          %400 = sbr.rel (%p398) target = $region72
        $region71: #{tpu_custom_call.1} parent=47 // pred_region
          %402 = dma.done [#allocation12], 128
        $region72: #{tpu_custom_call.1} parent=47 // pred_fallthru
          _
        // Predicated region
        $region73: #{tpu_custom_call.1} parent=47 // pred_check
          %p403 = pneg %p186
        $region74: #{tpu_custom_call.1} parent=47 // pred_check_branch
          %405 = sbr.rel (%p403) target = $region76
        $region75: #{tpu_custom_call.1} parent=47 // pred_region
          %407 = dma.done [#allocation12], 256
        $region76: #{tpu_custom_call.1} parent=47 // pred_fallthru
          _
        %s408 = sand.u32 %s37, 1
        %s409 = scalar_lea.sflag [#allocation3], %s408
        %s410 = sand.u32 %s37, 1
        %s411 = smul.addr %s410, 16
        %s412 = scalar_lea.vmem [#allocation2], %s411
        %p413 = pneg %p50
        %p414 = pneg %p47
        %s415 = sand.u32 %s29, 1
        %s416 = scalar_lea.sflag [#allocation6], %s415
        %s417 = sand.u32 %s63, 1
        %s418 = smul.addr %s417, 16
        %s419 = scalar_lea.vmem [#allocation5], %s418
        %p420 = pneg %p76
        %p421 = pneg %p73
        %s422 = sand.u32 %s29, 1
        %s423 = scalar_lea.sflag [#allocation6], %s422
        %s424 = sand.u32 %s89, 1
        %s425 = smul.addr %s424, 16
        %s426 = scalar_lea.vmem [#allocation7], %s425
        %p427 = pneg %p102
        %p428 = pneg %p99
        %p429 = pneg %p123
        %p430 = pneg %p120
        %p431 = pneg %p144
        %p432 = pneg %p141
        %p433 = pneg %p165
        %p434 = pneg %p162
        %p435 = pneg %p186
        %p436 = pneg %p183
        %p437 = pneg %p212
        %p438 = pneg %p209
        %s439 = sand.u32 %s199, 1
        %s440 = scalar_lea.sflag [#allocation4], %s439
        %s441 = sand.u32 %s199, 1
        %s442 = smul.addr %s441, 16
        %s443 = scalar_lea.vmem [#allocation14], %s442
        %s444 = smul.u32 2, %s29
        %s445 = smul.u32 2, %s29
        %s446 = smul.u32 2, %s29
        %s447 = smul.u32 2, %s29
        %v449 = vld [vmem:[#allocation11] sm:$0x1]
        %v450 = vld [vmem:[#allocation11 + $0x2] sm:$0x1]
        %v451 = vld [vmem:[#allocation11 + $0x3] sm:$0x1]
        %v452 = vld [vmem:[%s362] sm:$0xff]
        %v453 = vld [vmem:[%s362 + $0x8] sm:$0xff]
        %v454 = vpack.c.bf16 %v453, %v452
        %v455 = vld [vmem:[#allocation8] sm:$0xf]
        %v456 = vld [vmem:[#allocation8 + $0x4] sm:$0xf]
        %v457 = vld [vmem:[#allocation8 + $0x8] sm:$0xf]
        %v458 = vld [vmem:[#allocation8 + $0xc] sm:$0xf]
        %v459 = vperm.slane %v449, 0
        %v464 = vunpack.c.l.b16 %v455
        %v465 = vunpack.c.l.b16 %v456
        %v466 = vunpack.c.l.b16 %v457
        %v467 = vunpack.c.l.b16 %v458
        %v468 = vpack.c.b16 %v465, %v464
        %v469 = vpack.c.b16 %v467, %v466
        %vm472 = vcmask 261120
        %v474 = vsel %vm472, %v454, 0
        %476 = vmatpush.bf16.msra.mxu0 0
        %477 = vmatpush.bf16.msra.mxu0 0
        %478 = vmatpush.bf16.msra.mxu0 0
        %479 = vmatpush.bf16.msra.mxu0 0
        %480 = vmatpush.bf16.msra.mxu0 0
        %481 = vmatpush.bf16.msra.mxu0 0
        %482 = vmatpush.bf16.msra.mxu0 %v469
        %483 = vmatpush.bf16.msra.mxu0 %v468
        %484 = vmatmul.bf16.gmra.mxu0 %v474
        %v485 = vpop.f32.mrf.mxu0
        %v486 = vadd.f32 %v459, %v485
        %v487 = vpop.f32.mrf.mxu0
        %v488 = vadd.f32 %v459, %v487
        %489 = vdwg.mxu0
        %v490 = vld [vmem:[#allocation11 + $0x1] sm:$0x1]
        %v491 = vld [vmem:[%s372] sm:$0xff]
        %v492 = vld [vmem:[%s372 + $0x8] sm:$0xff]
        %v493 = vpack.c.bf16 %v491, %v491
        %v494 = vpack.c.bf16 %v492, %v492
        %v495 = vld [vmem:[%s382] sm:$0xff]
        %v496 = vld [vmem:[%s382 + $0x8] sm:$0xff]
        %v497 = vpack.c.bf16 %v495, %v495
        %v498 = vpack.c.bf16 %v496, %v496
        %v501 = vunpack.c.l.b16 %v493
        %v502 = vunpack.c.l.b16 %v494
        %v503 = vpack.c.b16 %v502, %v501
        %v506 = vunpack.c.l.b16 %v497
        %v507 = vunpack.c.l.b16 %v498
        %v508 = vpack.c.b16 %v507, %v506
        %509 = vrot.lane.b32.xlu0 %v508, 32
        %v510 = vpop.permute.xlu0 %509
        %v513 = vsel %vm472, %v503, %v510
        %v514 = vld [vmem:[#allocation10] sm:$0xf]
        %v515 = vld [vmem:[#allocation10 + $0x4] sm:$0xf]
        %v516 = vld [vmem:[#allocation10 + $0x8] sm:$0xf]
        %v517 = vld [vmem:[#allocation10 + $0xc] sm:$0xf]
        %v518 = vld [vmem:[#allocation10 + $0x10] sm:$0xf]
        %v519 = vld [vmem:[#allocation10 + $0x14] sm:$0xf]
        %v520 = vld [vmem:[#allocation10 + $0x18] sm:$0xf]
        %v521 = vld [vmem:[#allocation10 + $0x1c] sm:$0xf]
        %v522 = vld [vmem:[#allocation10 + $0x20] sm:$0xf]
        %v523 = vld [vmem:[#allocation10 + $0x24] sm:$0xf]
        %v524 = vld [vmem:[#allocation10 + $0x28] sm:$0xf]
        %v525 = vld [vmem:[#allocation10 + $0x2c] sm:$0xf]
        %v526 = vperm.slane %v490, 0
        %v539 = vunpack.c.l.b16 %v514
        %v540 = vunpack.c.l.b16 %v515
        %v541 = vunpack.c.l.b16 %v516
        %v542 = vunpack.c.l.b16 %v517
        %v543 = vunpack.c.l.b16 %v518
        %v544 = vunpack.c.l.b16 %v519
        %v545 = vunpack.c.l.b16 %v520
        %v546 = vunpack.c.l.b16 %v521
        %v547 = vunpack.c.l.b16 %v522
        %v548 = vunpack.c.l.b16 %v523
        %v549 = vunpack.c.l.b16 %v524
        %v550 = vunpack.c.l.b16 %v525
        %v551 = vpack.c.b16 %v540, %v539
        %v552 = vpack.c.b16 %v542, %v541
        %v553 = vpack.c.b16 %v544, %v543
        %v554 = vpack.c.b16 %v546, %v545
        %v555 = vpack.c.b16 %v548, %v547
        %v556 = vpack.c.b16 %v550, %v549
        %vm563 = vcmask 785408
        %v564 = vsel %vm563, %v513, 0
        %566 = vmatpush.bf16.msra.mxu0 0
        %567 = vmatpush.bf16.msra.mxu0 0
        %568 = vmatpush.bf16.msra.mxu0 %v556
        %569 = vmatpush.bf16.msra.mxu0 %v555
        %570 = vmatpush.bf16.msra.mxu0 %v554
        %571 = vmatpush.bf16.msra.mxu0 %v553
        %572 = vmatpush.bf16.msra.mxu0 %v552
        %573 = vmatpush.bf16.msra.mxu0 %v551
        %574 = vmatmul.bf16.gmra.mxu0 %v564
        %v575 = vpop.f32.mrf.mxu0
        %v576 = vadd.f32 %v526, %v575
        %v577 = vpop.f32.mrf.mxu0
        %v578 = vadd.f32 %v526, %v577
        %579 = vdwg.mxu0
        %v580 = vpack.c.bf16 %v488, %v486
        %v581 = vpack.c.bf16 %v578, %v576
        %v582 = vld [vmem:[#allocation13] sm:$0xff]
        %v583 = vld [vmem:[#allocation13 + $0x8] sm:$0xff]
        %v585 = vsel %vm472, %v580, 0
        %v588 = vsel %vm472, %v581, 0
        %590 = vmatpush.bf16.xpose.msra.mxu0 0
        %591 = vmatpush.bf16.xpose.msra.mxu0 0
        %592 = vmatpush.bf16.xpose.msra.mxu0 0
        %593 = vmatpush.bf16.xpose.msra.mxu0 0
        %594 = vmatpush.bf16.xpose.msra.mxu0 0
        %595 = vmatpush.bf16.xpose.msra.mxu0 0
        %596 = vmatpush.bf16.xpose.msra.mxu0 0
        %597 = vmatpush.bf16.xpose.msra.mxu0 %v588
        %598 = vmatmul.bf16.gmra.mxu0 %v585
        %v599 = vpop.f32.mrf.mxu0
        %v600 = vadd.f32 %v582, %v599
        %v601 = vpop.f32.mrf.mxu0
        %v602 = vadd.f32 %v583, %v601
        %603 = vdwg.mxu0
        %vm604 = vcmask 130048
        %v605 = vsel %vm604, %v600, -inf
        %606 = vmax.xlane.f32.xlu0 %v605
        %v607 = vpop.xlane.xlu0 %606
        %v608 = vsel %vm604, %v602, -inf
        %609 = vmax.xlane.f32.xlu0 %v608
        %v610 = vpop.xlane.xlu0 %609
        %v611 = vsub.f32 %v600, %v607
        %v612 = vsub.f32 %v602, %v610
        %v613 = vmul.f32 %v611, 1.442695
        %v614 = vpow.pop %v613
        %v615 = vmul.f32 %v612, 1.442695
        %v616 = vpow.pop %v615
        %v617 = vsel %vm604, %v614, 0.0
        %618 = vadd.xlane.f32.xlu0 %v617
        %v619 = vpop.xlane.xlu0 %618
        %v620 = vsel %vm604, %v616, 0.0
        %621 = vadd.xlane.f32.xlu0 %v620
        %v622 = vpop.xlane.xlu0 %621
        %v623 = vrcp.pop %v619
        %v624 = vrcp.pop %v622
        %v625 = vmul.f32 %v614, %v623
        %v626 = vmul.f32 %v616, %v624
        %v627 = vpack.c.bf16 %v626, %v625
        %629 = vrot.lane.b32.xlu0 %v581, 96
        %v630 = vpop.permute.xlu0 %629
        %v633 = vsel %vm604, %v627, 0
        %635 = vmatpush.bf16.msra.mxu0 0
        %636 = vmatpush.bf16.msra.mxu0 0
        %637 = vmatpush.bf16.msra.mxu0 0
        %638 = vmatpush.bf16.msra.mxu0 0
        %639 = vmatpush.bf16.msra.mxu0 0
        %640 = vmatpush.bf16.msra.mxu0 0
        %641 = vmatpush.bf16.msra.mxu0 0
        %642 = vmatpush.bf16.msra.mxu0 %v630
        %643 = vmatmul.bf16.gmra.mxu0 %v633
        %v644 = vpop.f32.mrf.mxu0
        %v645 = vadd.f32 0.0, %v644
        %v646 = vpop.f32.mrf.mxu0
        %v647 = vadd.f32 0.0, %v646
        %648 = vdwg.mxu0
        %vm649 = vcmask 523264
        %v650 = vsel %vm649, %v645, 0.0
        %651 = vadd.xlane.f32.xlu0 %v650
        %v652 = vpop.xlane.xlu0 %651
        %v653 = vsel %vm649, %v647, 0.0
        %654 = vadd.xlane.f32.xlu0 %v653
        %v655 = vpop.xlane.xlu0 %654
        %v656 = vrcp.pop 64.0
        %v657 = vmul.f32 64.0, %v656
        %v658 = vsub.f32 1.0, %v657
        %v659 = vmul.f32 %v656, %v658
        %v660 = vadd.f32 %v656, %v659
        %vm661 = vweird.f32 %v656
        %v662 = vsel %vm661, %v656, %v660
        %v663 = vmul.f32 %v652, %v662
        %v664 = vmul.f32 %v655, %v662
        %v665 = vsub.f32 %v645, %v663
        %v666 = vsub.f32 %v647, %v664
        %v667 = vmul.f32 %v665, %v665
        %v668 = vmul.f32 %v666, %v666
        %v669 = vsel %vm649, %v667, 0.0
        %670 = vadd.xlane.f32.xlu0 %v669
        %v671 = vpop.xlane.xlu0 %670
        %v672 = vsel %vm649, %v668, 0.0
        %673 = vadd.xlane.f32.xlu0 %v672
        %v674 = vpop.xlane.xlu0 %673
        %v675 = vmul.f32 %v671, %v662
        %v676 = vmul.f32 %v674, %v662
        %v677 = vadd.f32 %v675, 1e-05
        %v678 = vadd.f32 %v676, 1e-05
        %v679 = vrsqrt.pop %v677
        %v680 = vmul.f32 %v679, %v677
        %v681 = vmul.f32 %v680, %v679
        %v682 = vmul.f32 0.5, %v681
        %v683 = vsub.f32 1.5, %v682
        %v684 = vmul.f32 %v679, %v683
        %vm685 = vweird.f32 %v677
        %vm686 = vweird.f32 %v679
        %vm687 = vmor %vm685, %vm686
        %v688 = vsel %vm687, %v679, %v684
        %v689 = vrsqrt.pop %v678
        %v690 = vmul.f32 %v689, %v678
        %v691 = vmul.f32 %v690, %v689
        %v692 = vmul.f32 0.5, %v691
        %v693 = vsub.f32 1.5, %v692
        %v694 = vmul.f32 %v689, %v693
        %vm695 = vweird.f32 %v678
        %vm696 = vweird.f32 %v689
        %vm697 = vmor %vm695, %vm696
        %v698 = vsel %vm697, %v689, %v694
        %v699 = vmul.f32 %v665, %v688
        %v700 = vmul.f32 %v666, %v698
        %v701 = vperm.slane %v450, 0
        %v702 = vmul.f32 %v699, %v701
        %v703 = vmul.f32 %v700, %v701
        %v704 = vperm.slane %v451, 0
        %v705 = vadd.f32 %v702, %v704
        %v706 = vadd.f32 %v703, %v704
        %707 = vst.msk [vmem:[%s443] sm:$0xff] %vm649, %v705
        %708 = vst.msk [vmem:[%s443 + $0x8] sm:$0xff] %vm649, %v706
        %s709 = sand.u32 %s199, 1
        %s710 = scalar_lea.sflag [#allocation4], %s709
        %s711 = sand.u32 %s199, 1
        %s712 = smul.addr %s711, 16
        %s713 = scalar_lea.vmem [#allocation14], %s712
        // Predicated region
        $region77: #{tpu_custom_call.1} parent=47 // pred_check
          %p714 = pneg %p209
        $region78: #{tpu_custom_call.1} parent=47 // pred_check_branch
          %716 = sbr.rel (%p714) target = $region80
        $region79: #{tpu_custom_call.1} parent=47 // pred_region
          %s717 = smul.u32 2, %s29
          %719 = vsyncadd %s710, 0
          %s720 = smul.addr %s717, 8
          %s721 = scalar_lea.hbm %s7, %s720
          %s722 = sshll.u32 %s713, 4
          %s723 = int_to_ptr.vmem [resolvable:$true] %s722
          %s724 = sshll.u32 %s721, 4
          %s725 = int_to_ptr.hbm [resolvable:$true] %s724
          %730 = dma.vmem_to_hbm [thread:$0]  %s723, 256, %s725, %s710, 128, 128, 8
        $region80: #{tpu_custom_call.1} parent=47 // pred_fallthru
          _
      $region48: #{tpu_custom_call.1} parent=5 // pred_fallthru
        _
      %p731 = scmp.le.s32.totalorder 2, %s24
      // Predicated region
      $region81: #{tpu_custom_call.1} parent=5 // pred_check
        %p732 = pneg %p731
      $region82: #{tpu_custom_call.1} parent=5 // pred_check_branch
        %734 = sbr.rel (%p732) target = $region84
      $region83: #{tpu_custom_call.1} parent=5 // pred_region
        %s735 = ssub.s32 %s24, 2
        // Predicated region
        $region85: #{tpu_custom_call.1} parent=83 // pred_check
          %p736 = pneg %p215
        $region86: #{tpu_custom_call.1} parent=83 // pred_check_branch
          %738 = sbr.rel (%p736) target = $region88
        $region87: #{tpu_custom_call.1} parent=83 // pred_region
          %s739 = sand.u32 %s200, 1
          %s740 = scalar_lea.sflag [#allocation4], %s739
          %s741 = sand.u32 %s200, 1
          %s742 = smul.addr %s741, 16
          %s743 = scalar_lea.vmem [#allocation14], %s742
          %745 = dma.done %s740, 256
        $region88: #{tpu_custom_call.1} parent=83 // pred_fallthru
          _
      $region84: #{tpu_custom_call.1} parent=5 // pred_fallthru
        _
    $region6: #{tpu_custom_call.1} parent=1 // loop_footer
      %s28 = sadd.s32 1, %s24
    $region7: #{tpu_custom_call.1} parent=1 // loop_footer_branch
      %23 = sbr.rel target = $region3
    $region8: #{tpu_custom_call.1} parent=1 // loop_exit
      _
    %746 = vsyncpa [#allocation3], 1
    %s747 = scalar_lea.sflag [#allocation3], 1
    %748 = vsyncpa %s747, 1
    %749 = vsyncpa [#allocation6], 1
    %s750 = scalar_lea.sflag [#allocation6], 1
    %751 = vsyncpa %s750, 1
    %752 = vsyncpa [#allocation9], 1
    %753 = vsyncpa [#allocation12], 1
    %754 = vsyncpa [#allocation4], 1
    %s755 = scalar_lea.sflag [#allocation4], 1
    %756 = vsyncpa %s755, 1

// kernel: tpu_custom_call.1
$region0: #{tpu_custom_call.1}
  #allocation0 [shape = 'u32[]', space=smem, size = 0x4, offset = 0x4, fixed_abs, tag = 'smem constant byte address 0x4 - core index']
  #allocation1 [shape = 'u32[72,128]{1,0:T(1,128)}', space=vmem, size = 0x9000, scoped, tag = 'internal scratch']
  %s0 = inlined_call_operand.hbm [shape: f32[32,32], index: 0, kind: input, shape index: {}]
  %s1 = inlined_call_operand.hbm [shape: f32[32,32], index: 1, kind: input, shape index: {}]
  %s2 = inlined_call_operand.hbm [shape: f32[32,64], index: 2, kind: input, shape index: {}]
  %s3 = inlined_call_operand.hbm [shape: bf16[32,32], index: 3, kind: input, shape index: {}]
  %s4 = inlined_call_operand.hbm [shape: bf16[96,96], index: 4, kind: input, shape index: {}]
  %s5 = inlined_call_operand.hbm [shape: f32[8,96], index: 5, kind: input, shape index: {}]
  %s6 = inlined_call_operand.hbm [shape: f32[16,16], index: 6, kind: input, shape index: {}]
  %s7 = inlined_call_operand.hbm [shape: f32[32,64], index: 7, kind: output, shape index: {}]
  %s8 = sld [smem:[#allocation0]]
  $region89: #{tpu_custom_call.1} parent=0
    _
  %s10 = ssub.s32 1, %s8
  %s11 = scalar_select 0, %s10, %s8
  $region1: #{tpu_custom_call.1} parent=0
    #allocation2 [shape = 'u8[16384]{0}', space=vmem, size = 0x4000, scoped, tag = 'input window, operand 0']
    #allocation3 [shape = 's32[2]{0}', space=sflag, size = 0x8, scoped, tag = 'scoped memory for tpu_custom_call.1']
    #allocation4 [shape = 's32[2]{0}', space=sflag, size = 0x8, scoped, tag = 'scoped memory for tpu_custom_call.1']
    #allocation5 [shape = 'u8[16384]{0}', space=vmem, size = 0x4000, scoped, tag = 'input window, operand 1']
    #allocation6 [shape = 's32[2]{0}', space=sflag, size = 0x8, scoped, tag = 'scoped memory for tpu_custom_call.1']
    #allocation7 [shape = 'u8[16384]{0}', space=vmem, size = 0x4000, scoped, tag = 'input window, operand 2']
    #allocation8 [shape = 'u8[8192]{0}', space=vmem, size = 0x2000, scoped, tag = 'input window, operand 3, single buffered']
    #allocation9 [shape = 's32[1]{0}', space=sflag, size = 0x4, scoped, tag = 'scoped memory for tpu_custom_call.1']
    #allocation10 [shape = 'u8[24576]{0}', space=vmem, size = 0x6000, scoped, tag = 'input window, operand 4, single buffered']
    #allocation11 [shape = 'u8[4096]{0}', space=vmem, size = 0x1000, scoped, tag = 'input window, operand 5, single buffered']
    #allocation12 [shape = 's32[1]{0}', space=sflag, size = 0x4, scoped, tag = 'scoped memory for tpu_custom_call.1']
    #allocation13 [shape = 'u8[8192]{0}', space=vmem, size = 0x2000, scoped, tag = 'input window, operand 6, single buffered']
    #allocation14 [shape = 'u8[16384]{0}', space=vmem, size = 0x4000, scoped, tag = 'output window, operand 0']
    %12 = vsyncpa [#allocation3], 0
    %s13 = scalar_lea.sflag [#allocation3], 1
    %14 = vsyncpa %s13, 0
    %15 = vsyncpa [#allocation6], 0
    %s16 = scalar_lea.sflag [#allocation6], 1
    %17 = vsyncpa %s16, 0
    %18 = vsyncpa [#allocation9], 0
    %19 = vsyncpa [#allocation12], 0
    %20 = vsyncpa [#allocation4], 0
    %s21 = scalar_lea.sflag [#allocation4], 1
    %22 = vsyncpa %s21, 0
    loop: start=0, step=1, limit=4
    $region2: #{tpu_custom_call.1} parent=1 // loop_pre_header
      _
    $region3: #{tpu_custom_call.1} parent=1 // loop_header
      %s24 = sphi 0, %s28
      %p25 = scmp.ge.s32.totalorder %s24, 4
      %s34 = sphi 0, %s36
      %s37 = sphi 0, %s34
      %s38 = sphi 0, %s37
      %s54 = sphi 0, %s38
      %s60 = sphi 0, %s62
      %s63 = sphi 0, %s60
      %s64 = sphi 0, %s63
      %s80 = sphi 0, %s64
      %s86 = sphi 0, %s88
      %s89 = sphi 0, %s86
      %s90 = sphi 0, %s89
      %s106 = sphi 0, %s90
      %s110 = sphi 0, %s110
      %s112 = sphi 0, %s110
      %s113 = sphi 0, %s112
      %s127 = sphi 0, %s113
      %s131 = sphi 0, %s131
      %s133 = sphi 0, %s131
      %s134 = sphi 0, %s133
      %s148 = sphi 0, %s134
      %s152 = sphi 0, %s152
      %s154 = sphi 0, %s152
      %s155 = sphi 0, %s154
      %s169 = sphi 0, %s155
      %s173 = sphi 0, %s173
      %s175 = sphi 0, %s173
      %s176 = sphi 0, %s175
      %s190 = sphi 0, %s176
      %s196 = sphi 0, %s198
      %s199 = sphi 0, %s196
      %s200 = sphi 0, %s199
      %s216 = sphi 0, %s200
    $region4: #{tpu_custom_call.1} parent=1 // loop_header_branch
      %27 = sbr.rel (%p25) target = $region8
    $region5: #{tpu_custom_call.1} parent=1 // loop_body
      %s29 = ssub.s32 %s24, 1
      %s30 = ssub.s32 %s24, 2
      %s31 = sadd.s32 %s24, 1
      %s32 = ssub.s32 %s24, %s31
      %p33 = scmp.eq.s32.totalorder %s32, 0
      %s35 = sadd.s32 %s34, 1
      %s36 = scalar_select %p33, %s34, %s35
      %p39 = pneg %p33
      %p40 = scmp.eq.s32.totalorder %s24, 1
      %p41 = por %p39, %p40
      %p42 = scmp.ne.s32.totalorder %s34, %s37
      %p43 = scmp.eq.s32.totalorder %s24, 0
      %p44 = por %p42, %p43
      %p45 = scmp.ne.s32.totalorder %s34, %s37
      %p46 = scmp.eq.s32.totalorder %s29, 1
      %p47 = por %p45, %p46
      %p48 = scmp.ne.s32.totalorder %s37, %s38
      %p49 = scmp.eq.s32.totalorder %s29, 0
      %p50 = por %p48, %p49
      %p51 = scmp.ne.s32.totalorder %s37, %s38
      %p52 = scmp.eq.s32.totalorder %s30, 1
      %p53 = por %p51, %p52
      %p55 = scmp.ne.s32.totalorder %s38, %s54
      %p56 = scmp.eq.s32.totalorder %s30, 0
      %p57 = por %p55, %p56
      %s58 = ssub.s32 %s24, %s31
      %p59 = scmp.eq.s32.totalorder %s58, 0
      %s61 = sadd.s32 %s60, 1
      %s62 = scalar_select %p59, %s60, %s61
      %p65 = pneg %p59
      %p66 = scmp.eq.s32.totalorder %s24, 1
      %p67 = por %p65, %p66
      %p68 = scmp.ne.s32.totalorder %s60, %s63
      %p69 = scmp.eq.s32.totalorder %s24, 0
      %p70 = por %p68, %p69
      %p71 = scmp.ne.s32.totalorder %s60, %s63
      %p72 = scmp.eq.s32.totalorder %s29, 1
      %p73 = por %p71, %p72
      %p74 = scmp.ne.s32.totalorder %s63, %s64
      %p75 = scmp.eq.s32.totalorder %s29, 0
      %p76 = por %p74, %p75
      %p77 = scmp.ne.s32.totalorder %s63, %s64
      %p78 = scmp.eq.s32.totalorder %s30, 1
      %p79 = por %p77, %p78
      %p81 = scmp.ne.s32.totalorder %s64, %s80
      %p82 = scmp.eq.s32.totalorder %s30, 0
      %p83 = por %p81, %p82
      %s84 = ssub.s32 %s24, %s31
      %p85 = scmp.eq.s32.totalorder %s84, 0
      %s87 = sadd.s32 %s86, 1
      %s88 = scalar_select %p85, %s86, %s87
      %p91 = pneg %p85
      %p92 = scmp.eq.s32.totalorder %s24, 1
      %p93 = por %p91, %p92
      %p94 = scmp.ne.s32.totalorder %s86, %s89
      %p95 = scmp.eq.s32.totalorder %s24, 0
      %p96 = por %p94, %p95
      %p97 = scmp.ne.s32.totalorder %s86, %s89
      %p98 = scmp.eq.s32.totalorder %s29, 1
      %p99 = por %p97, %p98
      %p100 = scmp.ne.s32.totalorder %s89, %s90
      %p101 = scmp.eq.s32.totalorder %s29, 0
      %p102 = por %p100, %p101
      %p103 = scmp.ne.s32.totalorder %s89, %s90
      %p104 = scmp.eq.s32.totalorder %s30, 1
      %p105 = por %p103, %p104
      %p107 = scmp.ne.s32.totalorder %s90, %s106
      %p108 = scmp.eq.s32.totalorder %s30, 0
      %p109 = por %p107, %p108
      %s111 = sadd.s32 %s110, 1
      %p114 = scmp.eq.s32.totalorder %s24, 1
      %p115 = scmp.ne.s32.totalorder %s110, %s112
      %p116 = scmp.eq.s32.totalorder %s24, 0
      %p117 = por %p115, %p116
      %p118 = scmp.ne.s32.totalorder %s110, %s112
      %p119 = scmp.eq.s32.totalorder %s29, 1
      %p120 = por %p118, %p119
      %p121 = scmp.ne.s32.totalorder %s112, %s113
      %p122 = scmp.eq.s32.totalorder %s29, 0
      %p123 = por %p121, %p122
      %p124 = scmp.ne.s32.totalorder %s112, %s113
      %p125 = scmp.eq.s32.totalorder %s30, 1
      %p126 = por %p124, %p125
      %p128 = scmp.ne.s32.totalorder %s113, %s127
      %p129 = scmp.eq.s32.totalorder %s30, 0
      %p130 = por %p128, %p129
      %s132 = sadd.s32 %s131, 1
      %p135 = scmp.eq.s32.totalorder %s24, 1
      %p136 = scmp.ne.s32.totalorder %s131, %s133
      %p137 = scmp.eq.s32.totalorder %s24, 0
      %p138 = por %p136, %p137
      %p139 = scmp.ne.s32.totalorder %s131, %s133
      %p140 = scmp.eq.s32.totalorder %s29, 1
      %p141 = por %p139, %p140
      %p142 = scmp.ne.s32.totalorder %s133, %s134
      %p143 = scmp.eq.s32.totalorder %s29, 0
      %p144 = por %p142, %p143
      %p145 = scmp.ne.s32.totalorder %s133, %s134
      %p146 = scmp.eq.s32.totalorder %s30, 1
      %p147 = por %p145, %p146
      %p149 = scmp.ne.s32.totalorder %s134, %s148
      %p150 = scmp.eq.s32.totalorder %s30, 0
      %p151 = por %p149, %p150
      %s153 = sadd.s32 %s152, 1
      %p156 = scmp.eq.s32.totalorder %s24, 1
      %p157 = scmp.ne.s32.totalorder %s152, %s154
      %p158 = scmp.eq.s32.totalorder %s24, 0
      %p159 = por %p157, %p158
      %p160 = scmp.ne.s32.totalorder %s152, %s154
      %p161 = scmp.eq.s32.totalorder %s29, 1
      %p162 = por %p160, %p161
      %p163 = scmp.ne.s32.totalorder %s154, %s155
      %p164 = scmp.eq.s32.totalorder %s29, 0
      %p165 = por %p163, %p164
      %p166 = scmp.ne.s32.totalorder %s154, %s155
      %p167 = scmp.eq.s32.totalorder %s30, 1
      %p168 = por %p166, %p167
      %p170 = scmp.ne.s32.totalorder %s155, %s169
      %p171 = scmp.eq.s32.totalorder %s30, 0
      %p172 = por %p170, %p171
      %s174 = sadd.s32 %s173, 1
      %p177 = scmp.eq.s32.totalorder %s24, 1
      %p178 = scmp.ne.s32.totalorder %s173, %s175
      %p179 = scmp.eq.s32.totalorder %s24, 0
      %p180 = por %p178, %p179
      %p181 = scmp.ne.s32.totalorder %s173, %s175
      %p182 = scmp.eq.s32.totalorder %s29, 1
      %p183 = por %p181, %p182
      %p184 = scmp.ne.s32.totalorder %s175, %s176
      %p185 = scmp.eq.s32.totalorder %s29, 0
      %p186 = por %p184, %p185
      %p187 = scmp.ne.s32.totalorder %s175, %s176
      %p188 = scmp.eq.s32.totalorder %s30, 1
      %p189 = por %p187, %p188
      %p191 = scmp.ne.s32.totalorder %s176, %s190
      %p192 = scmp.eq.s32.totalorder %s30, 0
      %p193 = por %p191, %p192
      %s194 = ssub.s32 %s24, %s31
      %p195 = scmp.eq.s32.totalorder %s194, 0
      %s197 = sadd.s32 %s196, 1
      %s198 = scalar_select %p195, %s196, %s197
      %p201 = pneg %p195
      %p202 = scmp.eq.s32.totalorder %s24, 1
      %p203 = por %p201, %p202
      %p204 = scmp.ne.s32.totalorder %s196, %s199
      %p205 = scmp.eq.s32.totalorder %s24, 0
      %p206 = por %p204, %p205
      %p207 = scmp.ne.s32.totalorder %s196, %s199
      %p208 = scmp.eq.s32.totalorder %s29, 1
      %p209 = por %p207, %p208
      %p210 = scmp.ne.s32.totalorder %s199, %s200
      %p211 = scmp.eq.s32.totalorder %s29, 0
      %p212 = por %p210, %p211
      %p213 = scmp.ne.s32.totalorder %s199, %s200
      %p214 = scmp.eq.s32.totalorder %s30, 1
      %p215 = por %p213, %p214
      %p217 = scmp.ne.s32.totalorder %s200, %s216
      %p218 = scmp.eq.s32.totalorder %s30, 0
      %p219 = por %p217, %p218
      %p220 = scmp.le.s32.totalorder 1, %s24
      %p221 = scmp.lt.s32.totalorder %s24, 3
      %p222 = pnand %p220, %p221
      %p223 = pneg %p222
      // Predicated region
      $region9: #{tpu_custom_call.1} parent=5 // pred_check
        _
      $region10: #{tpu_custom_call.1} parent=5 // pred_check_branch
        %225 = sbr.rel (%p222) target = $region12
      $region11: #{tpu_custom_call.1} parent=5 // pred_region
        %s226 = ssub.s32 %s24, 1
        // Predicated region
        $region13: #{tpu_custom_call.1} parent=11 // pred_check
          %p227 = pneg %p123
        $region14: #{tpu_custom_call.1} parent=11 // pred_check_branch
          %229 = sbr.rel (%p227) target = $region16
        $region15: #{tpu_custom_call.1} parent=11 // pred_region
          %231 = vsyncadd [#allocation9], 0
          %s232 = sshll.u32 %s3, 4
          %s233 = int_to_ptr.hbm [resolvable:$true] %s232
          %s234 = sshll.u32 [#allocation8], 4
          %s235 = int_to_ptr.vmem [resolvable:$true] %s234
          %240 = dma.hbm_to_vmem [thread:$0]  %s233, 256, %s235, [#allocation9], 64, 64, 4
        $region16: #{tpu_custom_call.1} parent=11 // pred_fallthru
          _
        // Predicated region
        $region17: #{tpu_custom_call.1} parent=11 // pred_check
          %p241 = pneg %p144
        $region18: #{tpu_custom_call.1} parent=11 // pred_check_branch
          %243 = sbr.rel (%p241) target = $region20
        $region19: #{tpu_custom_call.1} parent=11 // pred_region
          %245 = vsyncadd [#allocation9], 0
          %s246 = sshll.u32 %s4, 4
          %s247 = int_to_ptr.hbm [resolvable:$true] %s246
          %s248 = sshll.u32 [#allocation10], 4
          %s249 = int_to_ptr.vmem [resolvable:$true] %s248
          %254 = dma.hbm_to_vmem [thread:$0]  %s247, 768, %s249, [#allocation9], 64, 64, 4
        $region20: #{tpu_custom_call.1} parent=11 // pred_fallthru
          _
        // Predicated region
        $region21: #{tpu_custom_call.1} parent=11 // pred_check
          %p255 = pneg %p165
        $region22: #{tpu_custom_call.1} parent=11 // pred_check_branch
          %257 = sbr.rel (%p255) target = $region24
        $region23: #{tpu_custom_call.1} parent=11 // pred_region
          %259 = vsyncadd [#allocation12], 0
          %s261 = sshll.u32 %s5, 4
          %s262 = int_to_ptr.hbm [resolvable:$true] %s261
          %s263 = sshll.u32 [#allocation11], 4
          %s264 = int_to_ptr.vmem [resolvable:$true] %s263
          %266 = dma.hbm_to_vmem [thread:$0]  %s262, 128, %s264, [#allocation12]
        $region24: #{tpu_custom_call.1} parent=11 // pred_fallthru
          _
        // Predicated region
        $region25: #{tpu_custom_call.1} parent=11 // pred_check
          %p267 = pneg %p186
        $region26: #{tpu_custom_call.1} parent=11 // pred_check_branch
          %269 = sbr.rel (%p267) target = $region28
        $region27: #{tpu_custom_call.1} parent=11 // pred_region
          %271 = vsyncadd [#allocation12], 0
          %s272 = sshll.u32 %s6, 4
          %s273 = int_to_ptr.hbm [resolvable:$true] %s272
          %s274 = sshll.u32 [#allocation13], 4
          %s275 = int_to_ptr.vmem [resolvable:$true] %s274
          %280 = dma.hbm_to_vmem [thread:$0]  %s273, 256, %s275, [#allocation12], 128, 128, 8
        $region28: #{tpu_custom_call.1} parent=11 // pred_fallthru
          _
      $region12: #{tpu_custom_call.1} parent=5 // pred_fallthru
        _
      %p281 = scmp.lt.s32.totalorder %s24, 2
      // Predicated region
      $region29: #{tpu_custom_call.1} parent=5 // pred_check
        %p282 = pneg %p281
      $region30: #{tpu_custom_call.1} parent=5 // pred_check_branch
        %284 = sbr.rel (%p282) target = $region32
      $region31: #{tpu_custom_call.1} parent=5 // pred_region
        // Predicated region
        $region33: #{tpu_custom_call.1} parent=31 // pred_check
          %p285 = pneg %p44
        $region34: #{tpu_custom_call.1} parent=31 // pred_check_branch
          %287 = sbr.rel (%p285) target = $region36
        $region35: #{tpu_custom_call.1} parent=31 // pred_region
          %s288 = sand.u32 %s34, 1
          %s289 = scalar_lea.sflag [#allocation3], %s288
          %s290 = sand.u32 %s34, 1
          %s291 = smul.addr %s290, 16
          %s292 = scalar_lea.vmem [#allocation2], %s291
          %s293 = smul.u32 2, %s24
          %295 = vsyncadd %s289, 0
          %s296 = smul.addr %s293, 8
          %s297 = scalar_lea.hbm %s0, %s296
          %s298 = sshll.u32 %s297, 4
          %s299 = int_to_ptr.hbm [resolvable:$true] %s298
          %s300 = sshll.u32 %s292, 4
          %s301 = int_to_ptr.vmem [resolvable:$true] %s300
          %306 = dma.hbm_to_vmem [thread:$0]  %s299, 256, %s301, %s289, 128, 128, 8
        $region36: #{tpu_custom_call.1} parent=31 // pred_fallthru
          _
        // Predicated region
        $region37: #{tpu_custom_call.1} parent=31 // pred_check
          %p307 = pneg %p70
        $region38: #{tpu_custom_call.1} parent=31 // pred_check_branch
          %309 = sbr.rel (%p307) target = $region40
        $region39: #{tpu_custom_call.1} parent=31 // pred_region
          %s310 = sand.u32 %s24, 1
          %s311 = scalar_lea.sflag [#allocation6], %s310
          %s312 = sand.u32 %s60, 1
          %s313 = smul.addr %s312, 16
          %s314 = scalar_lea.vmem [#allocation5], %s313
          %s315 = smul.u32 2, %s24
          %317 = vsyncadd %s311, 0
          %s318 = smul.addr %s315, 8
          %s319 = scalar_lea.hbm %s1, %s318
          %s320 = sshll.u32 %s319, 4
          %s321 = int_to_ptr.hbm [resolvable:$true] %s320
          %s322 = sshll.u32 %s314, 4
          %s323 = int_to_ptr.vmem [resolvable:$true] %s322
          %328 = dma.hbm_to_vmem [thread:$0]  %s321, 256, %s323, %s311, 128, 128, 8
        $region40: #{tpu_custom_call.1} parent=31 // pred_fallthru
          _
        // Predicated region
        $region41: #{tpu_custom_call.1} parent=31 // pred_check
          %p329 = pneg %p96
        $region42: #{tpu_custom_call.1} parent=31 // pred_check_branch
          %331 = sbr.rel (%p329) target = $region44
        $region43: #{tpu_custom_call.1} parent=31 // pred_region
          %s332 = sand.u32 %s24, 1
          %s333 = scalar_lea.sflag [#allocation6], %s332
          %s334 = sand.u32 %s86, 1
          %s335 = smul.addr %s334, 16
          %s336 = scalar_lea.vmem [#allocation7], %s335
          %s337 = smul.u32 2, %s24
          %339 = vsyncadd %s333, 0
          %s340 = smul.addr %s337, 8
          %s341 = scalar_lea.hbm %s2, %s340
          %s342 = sshll.u32 %s341, 4
          %s343 = int_to_ptr.hbm [resolvable:$true] %s342
          %s344 = sshll.u32 %s336, 4
          %s345 = int_to_ptr.vmem [resolvable:$true] %s344
          %350 = dma.hbm_to_vmem [thread:$0]  %s343, 256, %s345, %s333, 128, 128, 8
        $region44: #{tpu_custom_call.1} parent=31 // pred_fallthru
          _
      $region32: #{tpu_custom_call.1} parent=5 // pred_fallthru
        _
      %p351 = scmp.le.s32.totalorder 1, %s24
      %p352 = scmp.lt.s32.totalorder %s24, 3
      %p353 = pnand %p351, %p352
      %p354 = pneg %p353
      // Predicated region
      $region45: #{tpu_custom_call.1} parent=5 // pred_check
        _
      $region46: #{tpu_custom_call.1} parent=5 // pred_check_branch
        %356 = sbr.rel (%p353) target = $region48
      $region47: #{tpu_custom_call.1} parent=5 // pred_region
        %s357 = ssub.s32 %s24, 1
        %s358 = sand.u32 %s37, 1
        %s359 = scalar_lea.sflag [#allocation3], %s358
        %s360 = sand.u32 %s37, 1
        %s361 = smul.addr %s360, 16
        %s362 = scalar_lea.vmem [#allocation2], %s361
        // Predicated region
        $region49: #{tpu_custom_call.1} parent=47 // pred_check
          %p363 = pneg %p50
        $region50: #{tpu_custom_call.1} parent=47 // pred_check_branch
          %365 = sbr.rel (%p363) target = $region52
        $region51: #{tpu_custom_call.1} parent=47 // pred_region
          %367 = dma.done %s359, 256
        $region52: #{tpu_custom_call.1} parent=47 // pred_fallthru
          _
        %s368 = sand.u32 %s29, 1
        %s369 = scalar_lea.sflag [#allocation6], %s368
        %s370 = sand.u32 %s63, 1
        %s371 = smul.addr %s370, 16
        %s372 = scalar_lea.vmem [#allocation5], %s371
        // Predicated region
        $region53: #{tpu_custom_call.1} parent=47 // pred_check
          %p373 = pneg %p76
        $region54: #{tpu_custom_call.1} parent=47 // pred_check_branch
          %375 = sbr.rel (%p373) target = $region56
        $region55: #{tpu_custom_call.1} parent=47 // pred_region
          %377 = dma.done %s369, 256
        $region56: #{tpu_custom_call.1} parent=47 // pred_fallthru
          _
        %s378 = sand.u32 %s29, 1
        %s379 = scalar_lea.sflag [#allocation6], %s378
        %s380 = sand.u32 %s89, 1
        %s381 = smul.addr %s380, 16
        %s382 = scalar_lea.vmem [#allocation7], %s381
        // Predicated region
        $region57: #{tpu_custom_call.1} parent=47 // pred_check
          %p383 = pneg %p102
        $region58: #{tpu_custom_call.1} parent=47 // pred_check_branch
          %385 = sbr.rel (%p383) target = $region60
        $region59: #{tpu_custom_call.1} parent=47 // pred_region
          %387 = dma.done %s379, 256
        $region60: #{tpu_custom_call.1} parent=47 // pred_fallthru
          _
        // Predicated region
        $region61: #{tpu_custom_call.1} parent=47 // pred_check
          %p388 = pneg %p123
        $region62: #{tpu_custom_call.1} parent=47 // pred_check_branch
          %390 = sbr.rel (%p388) target = $region64
        $region63: #{tpu_custom_call.1} parent=47 // pred_region
          %392 = dma.done [#allocation9], 256
        $region64: #{tpu_custom_call.1} parent=47 // pred_fallthru
          _
        // Predicated region
        $region65: #{tpu_custom_call.1} parent=47 // pred_check
          %p393 = pneg %p144
        $region66: #{tpu_custom_call.1} parent=47 // pred_check_branch
          %395 = sbr.rel (%p393) target = $region68
        $region67: #{tpu_custom_call.1} parent=47 // pred_region
          %397 = dma.done [#allocation9], 768
        $region68: #{tpu_custom_call.1} parent=47 // pred_fallthru
          _
        // Predicated region
        $region69: #{tpu_custom_call.1} parent=47 // pred_check
          %p398 = pneg %p165
        $region70: #{tpu_custom_call.1} parent=47 // pred_check_branch
          %400 = sbr.rel (%p398) target = $region72
        $region71: #{tpu_custom_call.1} parent=47 // pred_region
          %402 = dma.done [#allocation12], 128
        $region72: #{tpu_custom_call.1} parent=47 // pred_fallthru
          _
        // Predicated region
        $region73: #{tpu_custom_call.1} parent=47 // pred_check
          %p403 = pneg %p186
        $region74: #{tpu_custom_call.1} parent=47 // pred_check_branch
          %405 = sbr.rel (%p403) target = $region76
        $region75: #{tpu_custom_call.1} parent=47 // pred_region
          %407 = dma.done [#allocation12], 256
        $region76: #{tpu_custom_call.1} parent=47 // pred_fallthru
          _
        %s408 = sand.u32 %s37, 1
        %s409 = scalar_lea.sflag [#allocation3], %s408
        %s410 = sand.u32 %s37, 1
        %s411 = smul.addr %s410, 16
        %s412 = scalar_lea.vmem [#allocation2], %s411
        %p413 = pneg %p50
        %p414 = pneg %p47
        %s415 = sand.u32 %s29, 1
        %s416 = scalar_lea.sflag [#allocation6], %s415
        %s417 = sand.u32 %s63, 1
        %s418 = smul.addr %s417, 16
        %s419 = scalar_lea.vmem [#allocation5], %s418
        %p420 = pneg %p76
        %p421 = pneg %p73
        %s422 = sand.u32 %s29, 1
        %s423 = scalar_lea.sflag [#allocation6], %s422
        %s424 = sand.u32 %s89, 1
        %s425 = smul.addr %s424, 16
        %s426 = scalar_lea.vmem [#allocation7], %s425
        %p427 = pneg %p102
        %p428 = pneg %p99
        %p429 = pneg %p123
        %p430 = pneg %p120
        %p431 = pneg %p144
        %p432 = pneg %p141
        %p433 = pneg %p165
        %p434 = pneg %p162
        %p435 = pneg %p186
        %p436 = pneg %p183
        %p437 = pneg %p212
        %p438 = pneg %p209
        %s439 = sand.u32 %s199, 1
        %s440 = scalar_lea.sflag [#allocation4], %s439
        %s441 = sand.u32 %s199, 1
        %s442 = smul.addr %s441, 16
        %s443 = scalar_lea.vmem [#allocation14], %s442
        %s444 = smul.u32 2, %s29
        %s445 = smul.u32 2, %s29
        %s446 = smul.u32 2, %s29
        %s447 = smul.u32 2, %s29
        %v449 = vld [vmem:[#allocation11] sm:$0x1]
        %v450 = vld [vmem:[#allocation11 + $0x2] sm:$0x1]
        %v451 = vld [vmem:[#allocation11 + $0x3] sm:$0x1]
        %v452 = vld [vmem:[%s362] sm:$0xff]
        %v453 = vld [vmem:[%s362 + $0x8] sm:$0xff]
        %v454 = vpack.c.bf16 %v453, %v452
        %v455 = vld [vmem:[#allocation8] sm:$0xf]
        %v456 = vld [vmem:[#allocation8 + $0x4] sm:$0xf]
        %v457 = vld [vmem:[#allocation8 + $0x8] sm:$0xf]
        %v458 = vld [vmem:[#allocation8 + $0xc] sm:$0xf]
        %v459 = vperm.slane %v449, 0
        %v464 = vunpack.c.l.b16 %v455
        %v465 = vunpack.c.l.b16 %v456
        %v466 = vunpack.c.l.b16 %v457
        %v467 = vunpack.c.l.b16 %v458
        %v468 = vpack.c.b16 %v465, %v464
        %v469 = vpack.c.b16 %v467, %v466
        %vm472 = vcmask 261120
        %v474 = vsel %vm472, %v454, 0
        %476 = vmatpush.bf16.msra.mxu0 0
        %477 = vmatpush.bf16.msra.mxu0 0
        %478 = vmatpush.bf16.msra.mxu0 0
        %479 = vmatpush.bf16.msra.mxu0 0
        %480 = vmatpush.bf16.msra.mxu0 0
        %481 = vmatpush.bf16.msra.mxu0 0
        %482 = vmatpush.bf16.msra.mxu0 %v469
        %483 = vmatpush.bf16.msra.mxu0 %v468
        %484 = vmatmul.bf16.gmra.mxu0 %v474
        %v485 = vpop.f32.mrf.mxu0
        %v486 = vadd.f32 %v459, %v485
        %v487 = vpop.f32.mrf.mxu0
        %v488 = vadd.f32 %v459, %v487
        %489 = vdwg.mxu0
        %v490 = vld [vmem:[#allocation11 + $0x1] sm:$0x1]
        %v491 = vld [vmem:[%s372] sm:$0xff]
        %v492 = vld [vmem:[%s372 + $0x8] sm:$0xff]
        %v493 = vpack.c.bf16 %v491, %v491
        %v494 = vpack.c.bf16 %v492, %v492
        %v495 = vld [vmem:[%s382] sm:$0xff]
        %v496 = vld [vmem:[%s382 + $0x8] sm:$0xff]
        %v497 = vpack.c.bf16 %v495, %v495
        %v498 = vpack.c.bf16 %v496, %v496
        %v501 = vunpack.c.l.b16 %v493
        %v502 = vunpack.c.l.b16 %v494
        %v503 = vpack.c.b16 %v502, %v501
        %v506 = vunpack.c.l.b16 %v497
        %v507 = vunpack.c.l.b16 %v498
        %v508 = vpack.c.b16 %v507, %v506
        %509 = vrot.lane.b32.xlu0 %v508, 32
        %v510 = vpop.permute.xlu0 %509
        %v513 = vsel %vm472, %v503, %v510
        %v514 = vld [vmem:[#allocation10] sm:$0xf]
        %v515 = vld [vmem:[#allocation10 + $0x4] sm:$0xf]
        %v516 = vld [vmem:[#allocation10 + $0x8] sm:$0xf]
        %v517 = vld [vmem:[#allocation10 + $0xc] sm:$0xf]
        %v518 = vld [vmem:[#allocation10 + $0x10] sm:$0xf]
        %v519 = vld [vmem:[#allocation10 + $0x14] sm:$0xf]
        %v520 = vld [vmem:[#allocation10 + $0x18] sm:$0xf]
        %v521 = vld [vmem:[#allocation10 + $0x1c] sm:$0xf]
        %v522 = vld [vmem:[#allocation10 + $0x20] sm:$0xf]
        %v523 = vld [vmem:[#allocation10 + $0x24] sm:$0xf]
        %v524 = vld [vmem:[#allocation10 + $0x28] sm:$0xf]
        %v525 = vld [vmem:[#allocation10 + $0x2c] sm:$0xf]
        %v526 = vperm.slane %v490, 0
        %v539 = vunpack.c.l.b16 %v514
        %v540 = vunpack.c.l.b16 %v515
        %v541 = vunpack.c.l.b16 %v516
        %v542 = vunpack.c.l.b16 %v517
        %v543 = vunpack.c.l.b16 %v518
        %v544 = vunpack.c.l.b16 %v519
        %v545 = vunpack.c.l.b16 %v520
        %v546 = vunpack.c.l.b16 %v521
        %v547 = vunpack.c.l.b16 %v522
        %v548 = vunpack.c.l.b16 %v523
        %v549 = vunpack.c.l.b16 %v524
        %v550 = vunpack.c.l.b16 %v525
        %v551 = vpack.c.b16 %v540, %v539
        %v552 = vpack.c.b16 %v542, %v541
        %v553 = vpack.c.b16 %v544, %v543
        %v554 = vpack.c.b16 %v546, %v545
        %v555 = vpack.c.b16 %v548, %v547
        %v556 = vpack.c.b16 %v550, %v549
        %vm563 = vcmask 785408
        %v564 = vsel %vm563, %v513, 0
        %566 = vmatpush.bf16.msra.mxu0 0
        %567 = vmatpush.bf16.msra.mxu0 0
        %568 = vmatpush.bf16.msra.mxu0 %v556
        %569 = vmatpush.bf16.msra.mxu0 %v555
        %570 = vmatpush.bf16.msra.mxu0 %v554
        %571 = vmatpush.bf16.msra.mxu0 %v553
        %572 = vmatpush.bf16.msra.mxu0 %v552
        %573 = vmatpush.bf16.msra.mxu0 %v551
        %574 = vmatmul.bf16.gmra.mxu0 %v564
        %v575 = vpop.f32.mrf.mxu0
        %v576 = vadd.f32 %v526, %v575
        %v577 = vpop.f32.mrf.mxu0
        %v578 = vadd.f32 %v526, %v577
        %579 = vdwg.mxu0
        %v580 = vpack.c.bf16 %v488, %v486
        %v581 = vpack.c.bf16 %v578, %v576
        %v582 = vld [vmem:[#allocation13] sm:$0xff]
        %v583 = vld [vmem:[#allocation13 + $0x8] sm:$0xff]
        %v585 = vsel %vm472, %v580, 0
        %v588 = vsel %vm472, %v581, 0
        %590 = vmatpush.bf16.xpose.msra.mxu0 0
        %591 = vmatpush.bf16.xpose.msra.mxu0 0
        %592 = vmatpush.bf16.xpose.msra.mxu0 0
        %593 = vmatpush.bf16.xpose.msra.mxu0 0
        %594 = vmatpush.bf16.xpose.msra.mxu0 0
        %595 = vmatpush.bf16.xpose.msra.mxu0 0
        %596 = vmatpush.bf16.xpose.msra.mxu0 0
        %597 = vmatpush.bf16.xpose.msra.mxu0 %v588
        %598 = vmatmul.bf16.gmra.mxu0 %v585
        %v599 = vpop.f32.mrf.mxu0
        %v600 = vadd.f32 %v582, %v599
        %v601 = vpop.f32.mrf.mxu0
        %v602 = vadd.f32 %v583, %v601
        %603 = vdwg.mxu0
        %vm604 = vcmask 130048
        %v605 = vsel %vm604, %v600, -inf
        %606 = vmax.xlane.f32.xlu0 %v605
        %v607 = vpop.xlane.xlu0 %606
        %v608 = vsel %vm604, %v602, -inf
        %609 = vmax.xlane.f32.xlu0 %v608
        %v610 = vpop.xlane.xlu0 %609
        %v611 = vsub.f32 %v600, %v607
        %v612 = vsub.f32 %v602, %v610
        %v613 = vmul.f32 %v611, 1.442695
        %v614 = vpow.pop %v613
        %v615 = vmul.f32 %v612, 1.442695
        %v616 = vpow.pop %v615
        %v617 = vsel %vm604, %v614, 0.0
        %618 = vadd.xlane.f32.xlu0 %v617
        %v619 = vpop.xlane.xlu0 %618
        %v620 = vsel %vm604, %v616, 0.0
        %621 = vadd.xlane.f32.xlu0 %v620
        %v622 = vpop.xlane.xlu0 %621
        %v623 = vrcp.pop %v619
        %v624 = vrcp.pop %v622
        %v625 = vmul.f32 %v614, %v623
        %v626 = vmul.f32 %v616, %v624
        %v627 = vpack.c.bf16 %v626, %v625
        %629 = vrot.lane.b32.xlu0 %v581, 96
        %v630 = vpop.permute.xlu0 %629
        %v633 = vsel %vm604, %v627, 0
        %635 = vmatpush.bf16.msra.mxu0 0
        %636 = vmatpush.bf16.msra.mxu0 0
        %637 = vmatpush.bf16.msra.mxu0 0
        %638 = vmatpush.bf16.msra.mxu0 0
        %639 = vmatpush.bf16.msra.mxu0 0
        %640 = vmatpush.bf16.msra.mxu0 0
        %641 = vmatpush.bf16.msra.mxu0 0
        %642 = vmatpush.bf16.msra.mxu0 %v630
        %643 = vmatmul.bf16.gmra.mxu0 %v633
        %v644 = vpop.f32.mrf.mxu0
        %v645 = vadd.f32 0.0, %v644
        %v646 = vpop.f32.mrf.mxu0
        %v647 = vadd.f32 0.0, %v646
        %648 = vdwg.mxu0
        %vm649 = vcmask 523264
        %v650 = vsel %vm649, %v645, 0.0
        %651 = vadd.xlane.f32.xlu0 %v650
        %v652 = vpop.xlane.xlu0 %651
        %v653 = vsel %vm649, %v647, 0.0
        %654 = vadd.xlane.f32.xlu0 %v653
        %v655 = vpop.xlane.xlu0 %654
        %v656 = vrcp.pop 64.0
        %v657 = vmul.f32 64.0, %v656
        %v658 = vsub.f32 1.0, %v657
        %v659 = vmul.f32 %v656, %v658
        %v660 = vadd.f32 %v656, %v659
        %vm661 = vweird.f32 %v656
        %v662 = vsel %vm661, %v656, %v660
        %v663 = vmul.f32 %v652, %v662
        %v664 = vmul.f32 %v655, %v662
        %v665 = vsub.f32 %v645, %v663
        %v666 = vsub.f32 %v647, %v664
        %v667 = vmul.f32 %v665, %v665
        %v668 = vmul.f32 %v666, %v666
        %v669 = vsel %vm649, %v667, 0.0
        %670 = vadd.xlane.f32.xlu0 %v669
        %v671 = vpop.xlane.xlu0 %670
        %v672 = vsel %vm649, %v668, 0.0
        %673 = vadd.xlane.f32.xlu0 %v672
        %v674 = vpop.xlane.xlu0 %673
        %v675 = vmul.f32 %v671, %v662
        %v676 = vmul.f32 %v674, %v662
        %v677 = vadd.f32 %v675, 1e-05
        %v678 = vadd.f32 %v676, 1e-05
        %v679 = vrsqrt.pop %v677
        %v680 = vmul.f32 %v679, %v677
        %v681 = vmul.f32 %v680, %v679
        %v682 = vmul.f32 0.5, %v681
        %v683 = vsub.f32 1.5, %v682
        %v684 = vmul.f32 %v679, %v683
        %vm685 = vweird.f32 %v677
        %vm686 = vweird.f32 %v679
        %vm687 = vmor %vm685, %vm686
        %v688 = vsel %vm687, %v679, %v684
        %v689 = vrsqrt.pop %v678
        %v690 = vmul.f32 %v689, %v678
        %v691 = vmul.f32 %v690, %v689
        %v692 = vmul.f32 0.5, %v691
        %v693 = vsub.f32 1.5, %v692
        %v694 = vmul.f32 %v689, %v693
        %vm695 = vweird.f32 %v678
        %vm696 = vweird.f32 %v689
        %vm697 = vmor %vm695, %vm696
        %v698 = vsel %vm697, %v689, %v694
        %v699 = vmul.f32 %v665, %v688
        %v700 = vmul.f32 %v666, %v698
        %v701 = vperm.slane %v450, 0
        %v702 = vmul.f32 %v699, %v701
        %v703 = vmul.f32 %v700, %v701
        %v704 = vperm.slane %v451, 0
        %v705 = vadd.f32 %v702, %v704
        %v706 = vadd.f32 %v703, %v704
        %707 = vst.msk [vmem:[%s443] sm:$0xff] %vm649, %v705
        %708 = vst.msk [vmem:[%s443 + $0x8] sm:$0xff] %vm649, %v706
        %s709 = sand.u32 %s199, 1
        %s710 = scalar_lea.sflag [#allocation4], %s709
        %s711 = sand.u32 %s199, 1
        %s712 = smul.addr %s711, 16
        %s713 = scalar_lea.vmem [#allocation14], %s712
        // Predicated region
        $region77: #{tpu_custom_call.1} parent=47 // pred_check
          %p714 = pneg %p209
        $region78: #{tpu_custom_call.1} parent=47 // pred_check_branch
          %716 = sbr.rel (%p714) target = $region80
        $region79: #{tpu_custom_call.1} parent=47 // pred_region
          %s717 = smul.u32 2, %s29
          %719 = vsyncadd %s710, 0
          %s720 = smul.addr %s717, 8
          %s721 = scalar_lea.hbm %s7, %s720
          %s722 = sshll.u32 %s713, 4
          %s723 = int_to_ptr.vmem [resolvable:$true] %s722
          %s724 = sshll.u32 %s721, 4
          %s725 = int_to_ptr.hbm [resolvable:$true] %s724
          %730 = dma.vmem_to_hbm [thread:$0]  %s723, 256, %s725, %s710, 128, 128, 8
        $region80: #{tpu_custom_call.1} parent=47 // pred_fallthru
          _
      $region48: #{tpu_custom_call.1} parent=5 // pred_fallthru
        _
      %p731 = scmp.le.s32.totalorder 2, %s24
      // Predicated region
      $region81: #{tpu_custom_call.1} parent=5 // pred_check
        %p732 = pneg %p731
      $region82: #{tpu_custom_call.1} parent=5 // pred_check_branch
        %734 = sbr.rel (%p732) target = $region84
      $region83: #{tpu_custom_call.1} parent=5 // pred_region
        %s735 = ssub.s32 %s24, 2
        // Predicated region
        $region85: #{tpu_custom_call.1} parent=83 // pred_check
          %p736 = pneg %p215
        $region86: #{tpu_custom_call.1} parent=83 // pred_check_branch
          %738 = sbr.rel (%p736) target = $region88
        $region87: #{tpu_custom_call.1} parent=83 // pred_region
          %s739 = sand.u32 %s200, 1
          %s740 = scalar_lea.sflag [#allocation4], %s739
          %s741 = sand.u32 %s200, 1
          %s742 = smul.addr %s741, 16
          %s743 = scalar_lea.vmem [#allocation14], %s742
          %745 = dma.done %s740, 256
        $region88: #{tpu_custom_call.1} parent=83 // pred_fallthru
          _
      $region84: #{tpu_custom_call.1} parent=5 // pred_fallthru
        _
    $region6: #{tpu_custom_call.1} parent=1 // loop_footer
      %s28 = sadd.s32 1, %s24
    $region7: #{tpu_custom_call.1} parent=1 // loop_footer_branch
      %23 = sbr.rel target = $region3
    $region8: #{tpu_custom_call.1} parent=1 // loop_exit
      _
    %746 = vsyncpa [#allocation3], 1
    %s747 = scalar_lea.sflag [#allocation3], 1
    %748 = vsyncpa %s747, 1
    %749 = vsyncpa [#allocation6], 1
    %s750 = scalar_lea.sflag [#allocation6], 1
    %751 = vsyncpa %s750, 1
    %752 = vsyncpa [#allocation9], 1
    %753 = vsyncpa [#allocation12], 1
    %754 = vsyncpa [#allocation4], 1
    %s755 = scalar_lea.sflag [#allocation4], 1
    %756 = vsyncpa %s755, 1

// kernel: tpu_custom_call.1
$region0: #{tpu_custom_call.1}
  #allocation0 [shape = 'u32[]', space=smem, size = 0x4, offset = 0x4, fixed_abs, tag = 'smem constant byte address 0x4 - core index']
  #allocation1 [shape = 'u32[72,128]{1,0:T(1,128)}', space=vmem, size = 0x9000, scoped, tag = 'internal scratch']
  %s0 = inlined_call_operand.hbm [shape: f32[32,32], index: 0, kind: input, shape index: {}]
  %s1 = inlined_call_operand.hbm [shape: f32[32,32], index: 1, kind: input, shape index: {}]
  %s2 = inlined_call_operand.hbm [shape: f32[32,64], index: 2, kind: input, shape index: {}]
  %s3 = inlined_call_operand.hbm [shape: bf16[32,32], index: 3, kind: input, shape index: {}]
  %s4 = inlined_call_operand.hbm [shape: bf16[32,32], index: 4, kind: input, shape index: {}]
  %s5 = inlined_call_operand.hbm [shape: bf16[64,64], index: 5, kind: input, shape index: {}]
  %s6 = inlined_call_operand.hbm [shape: f32[8,64], index: 6, kind: input, shape index: {}]
  %s7 = inlined_call_operand.hbm [shape: f32[16,16], index: 7, kind: input, shape index: {}]
  %s8 = inlined_call_operand.hbm [shape: f32[32,64], index: 8, kind: output, shape index: {}]
  %s9 = sld [smem:[#allocation0]]
  $region97: #{tpu_custom_call.1} parent=0
    _
  %s11 = ssub.s32 1, %s9
  %s12 = scalar_select 0, %s11, %s9
  $region1: #{tpu_custom_call.1} parent=0
    #allocation2 [shape = 'u8[16384]{0}', space=vmem, size = 0x4000, scoped, tag = 'input window, operand 0']
    #allocation3 [shape = 's32[2]{0}', space=sflag, size = 0x8, scoped, tag = 'scoped memory for tpu_custom_call.1']
    #allocation4 [shape = 's32[2]{0}', space=sflag, size = 0x8, scoped, tag = 'scoped memory for tpu_custom_call.1']
    #allocation5 [shape = 'u8[16384]{0}', space=vmem, size = 0x4000, scoped, tag = 'input window, operand 1']
    #allocation6 [shape = 's32[2]{0}', space=sflag, size = 0x8, scoped, tag = 'scoped memory for tpu_custom_call.1']
    #allocation7 [shape = 'u8[16384]{0}', space=vmem, size = 0x4000, scoped, tag = 'input window, operand 2']
    #allocation8 [shape = 'u8[8192]{0}', space=vmem, size = 0x2000, scoped, tag = 'input window, operand 3, single buffered']
    #allocation9 [shape = 's32[1]{0}', space=sflag, size = 0x4, scoped, tag = 'scoped memory for tpu_custom_call.1']
    #allocation10 [shape = 'u8[8192]{0}', space=vmem, size = 0x2000, scoped, tag = 'input window, operand 4, single buffered']
    #allocation11 [shape = 'u8[16384]{0}', space=vmem, size = 0x4000, scoped, tag = 'input window, operand 5, single buffered']
    #allocation12 [shape = 's32[1]{0}', space=sflag, size = 0x4, scoped, tag = 'scoped memory for tpu_custom_call.1']
    #allocation13 [shape = 'u8[4096]{0}', space=vmem, size = 0x1000, scoped, tag = 'input window, operand 6, single buffered']
    #allocation14 [shape = 'u8[8192]{0}', space=vmem, size = 0x2000, scoped, tag = 'input window, operand 7, single buffered']
    #allocation15 [shape = 's32[1]{0}', space=sflag, size = 0x4, scoped, tag = 'scoped memory for tpu_custom_call.1']
    #allocation16 [shape = 'u8[16384]{0}', space=vmem, size = 0x4000, scoped, tag = 'output window, operand 0']
    %13 = vsyncpa [#allocation3], 0
    %s14 = scalar_lea.sflag [#allocation3], 1
    %15 = vsyncpa %s14, 0
    %16 = vsyncpa [#allocation6], 0
    %s17 = scalar_lea.sflag [#allocation6], 1
    %18 = vsyncpa %s17, 0
    %19 = vsyncpa [#allocation9], 0
    %20 = vsyncpa [#allocation12], 0
    %21 = vsyncpa [#allocation15], 0
    %22 = vsyncpa [#allocation4], 0
    %s23 = scalar_lea.sflag [#allocation4], 1
    %24 = vsyncpa %s23, 0
    loop: start=0, step=1, limit=4
    $region2: #{tpu_custom_call.1} parent=1 // loop_pre_header
      _
    $region3: #{tpu_custom_call.1} parent=1 // loop_header
      %s26 = sphi 0, %s30
      %p27 = scmp.ge.s32.totalorder %s26, 4
      %s36 = sphi 0, %s38
      %s39 = sphi 0, %s36
      %s40 = sphi 0, %s39
      %s56 = sphi 0, %s40
      %s62 = sphi 0, %s64
      %s65 = sphi 0, %s62
      %s66 = sphi 0, %s65
      %s82 = sphi 0, %s66
      %s88 = sphi 0, %s90
      %s91 = sphi 0, %s88
      %s92 = sphi 0, %s91
      %s108 = sphi 0, %s92
      %s112 = sphi 0, %s112
      %s114 = sphi 0, %s112
      %s115 = sphi 0, %s114
      %s129 = sphi 0, %s115
      %s133 = sphi 0, %s133
      %s135 = sphi 0, %s133
      %s136 = sphi 0, %s135
      %s150 = sphi 0, %s136
      %s154 = sphi 0, %s154
      %s156 = sphi 0, %s154
      %s157 = sphi 0, %s156
      %s171 = sphi 0, %s157
      %s175 = sphi 0, %s175
      %s177 = sphi 0, %s175
      %s178 = sphi 0, %s177
      %s192 = sphi 0, %s178
      %s196 = sphi 0, %s196
      %s198 = sphi 0, %s196
      %s199 = sphi 0, %s198
      %s213 = sphi 0, %s199
      %s219 = sphi 0, %s221
      %s222 = sphi 0, %s219
      %s223 = sphi 0, %s222
      %s239 = sphi 0, %s223
    $region4: #{tpu_custom_call.1} parent=1 // loop_header_branch
      %29 = sbr.rel (%p27) target = $region8
    $region5: #{tpu_custom_call.1} parent=1 // loop_body
      %s31 = ssub.s32 %s26, 1
      %s32 = ssub.s32 %s26, 2
      %s33 = sadd.s32 %s26, 1
      %s34 = ssub.s32 %s26, %s33
      %p35 = scmp.eq.s32.totalorder %s34, 0
      %s37 = sadd.s32 %s36, 1
      %s38 = scalar_select %p35, %s36, %s37
      %p41 = pneg %p35
      %p42 = scmp.eq.s32.totalorder %s26, 1
      %p43 = por %p41, %p42
      %p44 = scmp.ne.s32.totalorder %s36, %s39
      %p45 = scmp.eq.s32.totalorder %s26, 0
      %p46 = por %p44, %p45
      %p47 = scmp.ne.s32.totalorder %s36, %s39
      %p48 = scmp.eq.s32.totalorder %s31, 1
      %p49 = por %p47, %p48
      %p50 = scmp.ne.s32.totalorder %s39, %s40
      %p51 = scmp.eq.s32.totalorder %s31, 0
      %p52 = por %p50, %p51
      %p53 = scmp.ne.s32.totalorder %s39, %s40
      %p54 = scmp.eq.s32.totalorder %s32, 1
      %p55 = por %p53, %p54
      %p57 = scmp.ne.s32.totalorder %s40, %s56
      %p58 = scmp.eq.s32.totalorder %s32, 0
      %p59 = por %p57, %p58
      %s60 = ssub.s32 %s26, %s33
      %p61 = scmp.eq.s32.totalorder %s60, 0
      %s63 = sadd.s32 %s62, 1
      %s64 = scalar_select %p61, %s62, %s63
      %p67 = pneg %p61
      %p68 = scmp.eq.s32.totalorder %s26, 1
      %p69 = por %p67, %p68
      %p70 = scmp.ne.s32.totalorder %s62, %s65
      %p71 = scmp.eq.s32.totalorder %s26, 0
      %p72 = por %p70, %p71
      %p73 = scmp.ne.s32.totalorder %s62, %s65
      %p74 = scmp.eq.s32.totalorder %s31, 1
      %p75 = por %p73, %p74
      %p76 = scmp.ne.s32.totalorder %s65, %s66
      %p77 = scmp.eq.s32.totalorder %s31, 0
      %p78 = por %p76, %p77
      %p79 = scmp.ne.s32.totalorder %s65, %s66
      %p80 = scmp.eq.s32.totalorder %s32, 1
      %p81 = por %p79, %p80
      %p83 = scmp.ne.s32.totalorder %s66, %s82
      %p84 = scmp.eq.s32.totalorder %s32, 0
      %p85 = por %p83, %p84
      %s86 = ssub.s32 %s26, %s33
      %p87 = scmp.eq.s32.totalorder %s86, 0
      %s89 = sadd.s32 %s88, 1
      %s90 = scalar_select %p87, %s88, %s89
      %p93 = pneg %p87
      %p94 = scmp.eq.s32.totalorder %s26, 1
      %p95 = por %p93, %p94
      %p96 = scmp.ne.s32.totalorder %s88, %s91
      %p97 = scmp.eq.s32.totalorder %s26, 0
      %p98 = por %p96, %p97
      %p99 = scmp.ne.s32.totalorder %s88, %s91
      %p100 = scmp.eq.s32.totalorder %s31, 1
      %p101 = por %p99, %p100
      %p102 = scmp.ne.s32.totalorder %s91, %s92
      %p103 = scmp.eq.s32.totalorder %s31, 0
      %p104 = por %p102, %p103
      %p105 = scmp.ne.s32.totalorder %s91, %s92
      %p106 = scmp.eq.s32.totalorder %s32, 1
      %p107 = por %p105, %p106
      %p109 = scmp.ne.s32.totalorder %s92, %s108
      %p110 = scmp.eq.s32.totalorder %s32, 0
      %p111 = por %p109, %p110
      %s113 = sadd.s32 %s112, 1
      %p116 = scmp.eq.s32.totalorder %s26, 1
      %p117 = scmp.ne.s32.totalorder %s112, %s114
      %p118 = scmp.eq.s32.totalorder %s26, 0
      %p119 = por %p117, %p118
      %p120 = scmp.ne.s32.totalorder %s112, %s114
      %p121 = scmp.eq.s32.totalorder %s31, 1
      %p122 = por %p120, %p121
      %p123 = scmp.ne.s32.totalorder %s114, %s115
      %p124 = scmp.eq.s32.totalorder %s31, 0
      %p125 = por %p123, %p124
      %p126 = scmp.ne.s32.totalorder %s114, %s115
      %p127 = scmp.eq.s32.totalorder %s32, 1
      %p128 = por %p126, %p127
      %p130 = scmp.ne.s32.totalorder %s115, %s129
      %p131 = scmp.eq.s32.totalorder %s32, 0
      %p132 = por %p130, %p131
      %s134 = sadd.s32 %s133, 1
      %p137 = scmp.eq.s32.totalorder %s26, 1
      %p138 = scmp.ne.s32.totalorder %s133, %s135
      %p139 = scmp.eq.s32.totalorder %s26, 0
      %p140 = por %p138, %p139
      %p141 = scmp.ne.s32.totalorder %s133, %s135
      %p142 = scmp.eq.s32.totalorder %s31, 1
      %p143 = por %p141, %p142
      %p144 = scmp.ne.s32.totalorder %s135, %s136
      %p145 = scmp.eq.s32.totalorder %s31, 0
      %p146 = por %p144, %p145
      %p147 = scmp.ne.s32.totalorder %s135, %s136
      %p148 = scmp.eq.s32.totalorder %s32, 1
      %p149 = por %p147, %p148
      %p151 = scmp.ne.s32.totalorder %s136, %s150
      %p152 = scmp.eq.s32.totalorder %s32, 0
      %p153 = por %p151, %p152
      %s155 = sadd.s32 %s154, 1
      %p158 = scmp.eq.s32.totalorder %s26, 1
      %p159 = scmp.ne.s32.totalorder %s154, %s156
      %p160 = scmp.eq.s32.totalorder %s26, 0
      %p161 = por %p159, %p160
      %p162 = scmp.ne.s32.totalorder %s154, %s156
      %p163 = scmp.eq.s32.totalorder %s31, 1
      %p164 = por %p162, %p163
      %p165 = scmp.ne.s32.totalorder %s156, %s157
      %p166 = scmp.eq.s32.totalorder %s31, 0
      %p167 = por %p165, %p166
      %p168 = scmp.ne.s32.totalorder %s156, %s157
      %p169 = scmp.eq.s32.totalorder %s32, 1
      %p170 = por %p168, %p169
      %p172 = scmp.ne.s32.totalorder %s157, %s171
      %p173 = scmp.eq.s32.totalorder %s32, 0
      %p174 = por %p172, %p173
      %s176 = sadd.s32 %s175, 1
      %p179 = scmp.eq.s32.totalorder %s26, 1
      %p180 = scmp.ne.s32.totalorder %s175, %s177
      %p181 = scmp.eq.s32.totalorder %s26, 0
      %p182 = por %p180, %p181
      %p183 = scmp.ne.s32.totalorder %s175, %s177
      %p184 = scmp.eq.s32.totalorder %s31, 1
      %p185 = por %p183, %p184
      %p186 = scmp.ne.s32.totalorder %s177, %s178
      %p187 = scmp.eq.s32.totalorder %s31, 0
      %p188 = por %p186, %p187
      %p189 = scmp.ne.s32.totalorder %s177, %s178
      %p190 = scmp.eq.s32.totalorder %s32, 1
      %p191 = por %p189, %p190
      %p193 = scmp.ne.s32.totalorder %s178, %s192
      %p194 = scmp.eq.s32.totalorder %s32, 0
      %p195 = por %p193, %p194
      %s197 = sadd.s32 %s196, 1
      %p200 = scmp.eq.s32.totalorder %s26, 1
      %p201 = scmp.ne.s32.totalorder %s196, %s198
      %p202 = scmp.eq.s32.totalorder %s26, 0
      %p203 = por %p201, %p202
      %p204 = scmp.ne.s32.totalorder %s196, %s198
      %p205 = scmp.eq.s32.totalorder %s31, 1
      %p206 = por %p204, %p205
      %p207 = scmp.ne.s32.totalorder %s198, %s199
      %p208 = scmp.eq.s32.totalorder %s31, 0
      %p209 = por %p207, %p208
      %p210 = scmp.ne.s32.totalorder %s198, %s199
      %p211 = scmp.eq.s32.totalorder %s32, 1
      %p212 = por %p210, %p211
      %p214 = scmp.ne.s32.totalorder %s199, %s213
      %p215 = scmp.eq.s32.totalorder %s32, 0
      %p216 = por %p214, %p215
      %s217 = ssub.s32 %s26, %s33
      %p218 = scmp.eq.s32.totalorder %s217, 0
      %s220 = sadd.s32 %s219, 1
      %s221 = scalar_select %p218, %s219, %s220
      %p224 = pneg %p218
      %p225 = scmp.eq.s32.totalorder %s26, 1
      %p226 = por %p224, %p225
      %p227 = scmp.ne.s32.totalorder %s219, %s222
      %p228 = scmp.eq.s32.totalorder %s26, 0
      %p229 = por %p227, %p228
      %p230 = scmp.ne.s32.totalorder %s219, %s222
      %p231 = scmp.eq.s32.totalorder %s31, 1
      %p232 = por %p230, %p231
      %p233 = scmp.ne.s32.totalorder %s222, %s223
      %p234 = scmp.eq.s32.totalorder %s31, 0
      %p235 = por %p233, %p234
      %p236 = scmp.ne.s32.totalorder %s222, %s223
      %p237 = scmp.eq.s32.totalorder %s32, 1
      %p238 = por %p236, %p237
      %p240 = scmp.ne.s32.totalorder %s223, %s239
      %p241 = scmp.eq.s32.totalorder %s32, 0
      %p242 = por %p240, %p241
      %p243 = scmp.le.s32.totalorder 1, %s26
      %p244 = scmp.lt.s32.totalorder %s26, 3
      %p245 = pnand %p243, %p244
      %p246 = pneg %p245
      // Predicated region
      $region9: #{tpu_custom_call.1} parent=5 // pred_check
        _
      $region10: #{tpu_custom_call.1} parent=5 // pred_check_branch
        %248 = sbr.rel (%p245) target = $region12
      $region11: #{tpu_custom_call.1} parent=5 // pred_region
        %s249 = ssub.s32 %s26, 1
        // Predicated region
        $region13: #{tpu_custom_call.1} parent=11 // pred_check
          %p250 = pneg %p125
        $region14: #{tpu_custom_call.1} parent=11 // pred_check_branch
          %252 = sbr.rel (%p250) target = $region16
        $region15: #{tpu_custom_call.1} parent=11 // pred_region
          %254 = vsyncadd [#allocation9], 0
          %s255 = sshll.u32 %s3, 4
          %s256 = int_to_ptr.hbm [resolvable:$true] %s255
          %s257 = sshll.u32 [#allocation8], 4
          %s258 = int_to_ptr.vmem [resolvable:$true] %s257
          %263 = dma.hbm_to_vmem [thread:$0]  %s256, 256, %s258, [#allocation9], 64, 64, 4
        $region16: #{tpu_custom_call.1} parent=11 // pred_fallthru
          _
        // Predicated region
        $region17: #{tpu_custom_call.1} parent=11 // pred_check
          %p264 = pneg %p146
        $region18: #{tpu_custom_call.1} parent=11 // pred_check_branch
          %266 = sbr.rel (%p264) target = $region20
        $region19: #{tpu_custom_call.1} parent=11 // pred_region
          %268 = vsyncadd [#allocation9], 0
          %s269 = sshll.u32 %s4, 4
          %s270 = int_to_ptr.hbm [resolvable:$true] %s269
          %s271 = sshll.u32 [#allocation10], 4
          %s272 = int_to_ptr.vmem [resolvable:$true] %s271
          %277 = dma.hbm_to_vmem [thread:$0]  %s270, 256, %s272, [#allocation9], 64, 64, 4
        $region20: #{tpu_custom_call.1} parent=11 // pred_fallthru
          _
        // Predicated region
        $region21: #{tpu_custom_call.1} parent=11 // pred_check
          %p278 = pneg %p167
        $region22: #{tpu_custom_call.1} parent=11 // pred_check_branch
          %280 = sbr.rel (%p278) target = $region24
        $region23: #{tpu_custom_call.1} parent=11 // pred_region
          %282 = vsyncadd [#allocation12], 0
          %s283 = sshll.u32 %s5, 4
          %s284 = int_to_ptr.hbm [resolvable:$true] %s283
          %s285 = sshll.u32 [#allocation11], 4
          %s286 = int_to_ptr.vmem [resolvable:$true] %s285
          %291 = dma.hbm_to_vmem [thread:$0]  %s284, 512, %s286, [#allocation12], 64, 64, 4
        $region24: #{tpu_custom_call.1} parent=11 // pred_fallthru
          _
        // Predicated region
        $region25: #{tpu_custom_call.1} parent=11 // pred_check
          %p292 = pneg %p188
        $region26: #{tpu_custom_call.1} parent=11 // pred_check_branch
          %294 = sbr.rel (%p292) target = $region28
        $region27: #{tpu_custom_call.1} parent=11 // pred_region
          %296 = vsyncadd [#allocation12], 0
          %s298 = sshll.u32 %s6, 4
          %s299 = int_to_ptr.hbm [resolvable:$true] %s298
          %s300 = sshll.u32 [#allocation13], 4
          %s301 = int_to_ptr.vmem [resolvable:$true] %s300
          %303 = dma.hbm_to_vmem [thread:$0]  %s299, 128, %s301, [#allocation12]
        $region28: #{tpu_custom_call.1} parent=11 // pred_fallthru
          _
        // Predicated region
        $region29: #{tpu_custom_call.1} parent=11 // pred_check
          %p304 = pneg %p209
        $region30: #{tpu_custom_call.1} parent=11 // pred_check_branch
          %306 = sbr.rel (%p304) target = $region32
        $region31: #{tpu_custom_call.1} parent=11 // pred_region
          %308 = vsyncadd [#allocation15], 0
          %s309 = sshll.u32 %s7, 4
          %s310 = int_to_ptr.hbm [resolvable:$true] %s309
          %s311 = sshll.u32 [#allocation14], 4
          %s312 = int_to_ptr.vmem [resolvable:$true] %s311
          %317 = dma.hbm_to_vmem [thread:$0]  %s310, 256, %s312, [#allocation15], 128, 128, 8
        $region32: #{tpu_custom_call.1} parent=11 // pred_fallthru
          _
      $region12: #{tpu_custom_call.1} parent=5 // pred_fallthru
        _
      %p318 = scmp.lt.s32.totalorder %s26, 2
      // Predicated region
      $region33: #{tpu_custom_call.1} parent=5 // pred_check
        %p319 = pneg %p318
      $region34: #{tpu_custom_call.1} parent=5 // pred_check_branch
        %321 = sbr.rel (%p319) target = $region36
      $region35: #{tpu_custom_call.1} parent=5 // pred_region
        // Predicated region
        $region37: #{tpu_custom_call.1} parent=35 // pred_check
          %p322 = pneg %p46
        $region38: #{tpu_custom_call.1} parent=35 // pred_check_branch
          %324 = sbr.rel (%p322) target = $region40
        $region39: #{tpu_custom_call.1} parent=35 // pred_region
          %s325 = sand.u32 %s36, 1
          %s326 = scalar_lea.sflag [#allocation3], %s325
          %s327 = sand.u32 %s36, 1
          %s328 = smul.addr %s327, 16
          %s329 = scalar_lea.vmem [#allocation2], %s328
          %s330 = smul.u32 2, %s26
          %332 = vsyncadd %s326, 0
          %s333 = smul.addr %s330, 8
          %s334 = scalar_lea.hbm %s0, %s333
          %s335 = sshll.u32 %s334, 4
          %s336 = int_to_ptr.hbm [resolvable:$true] %s335
          %s337 = sshll.u32 %s329, 4
          %s338 = int_to_ptr.vmem [resolvable:$true] %s337
          %343 = dma.hbm_to_vmem [thread:$0]  %s336, 256, %s338, %s326, 128, 128, 8
        $region40: #{tpu_custom_call.1} parent=35 // pred_fallthru
          _
        // Predicated region
        $region41: #{tpu_custom_call.1} parent=35 // pred_check
          %p344 = pneg %p72
        $region42: #{tpu_custom_call.1} parent=35 // pred_check_branch
          %346 = sbr.rel (%p344) target = $region44
        $region43: #{tpu_custom_call.1} parent=35 // pred_region
          %s347 = sand.u32 %s26, 1
          %s348 = scalar_lea.sflag [#allocation6], %s347
          %s349 = sand.u32 %s62, 1
          %s350 = smul.addr %s349, 16
          %s351 = scalar_lea.vmem [#allocation5], %s350
          %s352 = smul.u32 2, %s26
          %354 = vsyncadd %s348, 0
          %s355 = smul.addr %s352, 8
          %s356 = scalar_lea.hbm %s1, %s355
          %s357 = sshll.u32 %s356, 4
          %s358 = int_to_ptr.hbm [resolvable:$true] %s357
          %s359 = sshll.u32 %s351, 4
          %s360 = int_to_ptr.vmem [resolvable:$true] %s359
          %365 = dma.hbm_to_vmem [thread:$0]  %s358, 256, %s360, %s348, 128, 128, 8
        $region44: #{tpu_custom_call.1} parent=35 // pred_fallthru
          _
        // Predicated region
        $region45: #{tpu_custom_call.1} parent=35 // pred_check
          %p366 = pneg %p98
        $region46: #{tpu_custom_call.1} parent=35 // pred_check_branch
          %368 = sbr.rel (%p366) target = $region48
        $region47: #{tpu_custom_call.1} parent=35 // pred_region
          %s369 = sand.u32 %s26, 1
          %s370 = scalar_lea.sflag [#allocation6], %s369
          %s371 = sand.u32 %s88, 1
          %s372 = smul.addr %s371, 16
          %s373 = scalar_lea.vmem [#allocation7], %s372
          %s374 = smul.u32 2, %s26
          %376 = vsyncadd %s370, 0
          %s377 = smul.addr %s374, 8
          %s378 = scalar_lea.hbm %s2, %s377
          %s379 = sshll.u32 %s378, 4
          %s380 = int_to_ptr.hbm [resolvable:$true] %s379
          %s381 = sshll.u32 %s373, 4
          %s382 = int_to_ptr.vmem [resolvable:$true] %s381
          %387 = dma.hbm_to_vmem [thread:$0]  %s380, 256, %s382, %s370, 128, 128, 8
        $region48: #{tpu_custom_call.1} parent=35 // pred_fallthru
          _
      $region36: #{tpu_custom_call.1} parent=5 // pred_fallthru
        _
      %p388 = scmp.le.s32.totalorder 1, %s26
      %p389 = scmp.lt.s32.totalorder %s26, 3
      %p390 = pnand %p388, %p389
      %p391 = pneg %p390
      // Predicated region
      $region49: #{tpu_custom_call.1} parent=5 // pred_check
        _
      $region50: #{tpu_custom_call.1} parent=5 // pred_check_branch
        %393 = sbr.rel (%p390) target = $region52
      $region51: #{tpu_custom_call.1} parent=5 // pred_region
        %s394 = ssub.s32 %s26, 1
        %s395 = sand.u32 %s39, 1
        %s396 = scalar_lea.sflag [#allocation3], %s395
        %s397 = sand.u32 %s39, 1
        %s398 = smul.addr %s397, 16
        %s399 = scalar_lea.vmem [#allocation2], %s398
        // Predicated region
        $region53: #{tpu_custom_call.1} parent=51 // pred_check
          %p400 = pneg %p52
        $region54: #{tpu_custom_call.1} parent=51 // pred_check_branch
          %402 = sbr.rel (%p400) target = $region56
        $region55: #{tpu_custom_call.1} parent=51 // pred_region
          %404 = dma.done %s396, 256
        $region56: #{tpu_custom_call.1} parent=51 // pred_fallthru
          _
        %s405 = sand.u32 %s31, 1
        %s406 = scalar_lea.sflag [#allocation6], %s405
        %s407 = sand.u32 %s65, 1
        %s408 = smul.addr %s407, 16
        %s409 = scalar_lea.vmem [#allocation5], %s408
        // Predicated region
        $region57: #{tpu_custom_call.1} parent=51 // pred_check
          %p410 = pneg %p78
        $region58: #{tpu_custom_call.1} parent=51 // pred_check_branch
          %412 = sbr.rel (%p410) target = $region60
        $region59: #{tpu_custom_call.1} parent=51 // pred_region
          %414 = dma.done %s406, 256
        $region60: #{tpu_custom_call.1} parent=51 // pred_fallthru
          _
        %s415 = sand.u32 %s31, 1
        %s416 = scalar_lea.sflag [#allocation6], %s415
        %s417 = sand.u32 %s91, 1
        %s418 = smul.addr %s417, 16
        %s419 = scalar_lea.vmem [#allocation7], %s418
        // Predicated region
        $region61: #{tpu_custom_call.1} parent=51 // pred_check
          %p420 = pneg %p104
        $region62: #{tpu_custom_call.1} parent=51 // pred_check_branch
          %422 = sbr.rel (%p420) target = $region64
        $region63: #{tpu_custom_call.1} parent=51 // pred_region
          %424 = dma.done %s416, 256
        $region64: #{tpu_custom_call.1} parent=51 // pred_fallthru
          _
        // Predicated region
        $region65: #{tpu_custom_call.1} parent=51 // pred_check
          %p425 = pneg %p125
        $region66: #{tpu_custom_call.1} parent=51 // pred_check_branch
          %427 = sbr.rel (%p425) target = $region68
        $region67: #{tpu_custom_call.1} parent=51 // pred_region
          %429 = dma.done [#allocation9], 256
        $region68: #{tpu_custom_call.1} parent=51 // pred_fallthru
          _
        // Predicated region
        $region69: #{tpu_custom_call.1} parent=51 // pred_check
          %p430 = pneg %p146
        $region70: #{tpu_custom_call.1} parent=51 // pred_check_branch
          %432 = sbr.rel (%p430) target = $region72
        $region71: #{tpu_custom_call.1} parent=51 // pred_region
          %434 = dma.done [#allocation9], 256
        $region72: #{tpu_custom_call.1} parent=51 // pred_fallthru
          _
        // Predicated region
        $region73: #{tpu_custom_call.1} parent=51 // pred_check
          %p435 = pneg %p167
        $region74: #{tpu_custom_call.1} parent=51 // pred_check_branch
          %437 = sbr.rel (%p435) target = $region76
        $region75: #{tpu_custom_call.1} parent=51 // pred_region
          %439 = dma.done [#allocation12], 512
        $region76: #{tpu_custom_call.1} parent=51 // pred_fallthru
          _
        // Predicated region
        $region77: #{tpu_custom_call.1} parent=51 // pred_check
          %p440 = pneg %p188
        $region78: #{tpu_custom_call.1} parent=51 // pred_check_branch
          %442 = sbr.rel (%p440) target = $region80
        $region79: #{tpu_custom_call.1} parent=51 // pred_region
          %444 = dma.done [#allocation12], 128
        $region80: #{tpu_custom_call.1} parent=51 // pred_fallthru
          _
        // Predicated region
        $region81: #{tpu_custom_call.1} parent=51 // pred_check
          %p445 = pneg %p209
        $region82: #{tpu_custom_call.1} parent=51 // pred_check_branch
          %447 = sbr.rel (%p445) target = $region84
        $region83: #{tpu_custom_call.1} parent=51 // pred_region
          %449 = dma.done [#allocation15], 256
        $region84: #{tpu_custom_call.1} parent=51 // pred_fallthru
          _
        %s450 = sand.u32 %s39, 1
        %s451 = scalar_lea.sflag [#allocation3], %s450
        %s452 = sand.u32 %s39, 1
        %s453 = smul.addr %s452, 16
        %s454 = scalar_lea.vmem [#allocation2], %s453
        %p455 = pneg %p52
        %p456 = pneg %p49
        %s457 = sand.u32 %s31, 1
        %s458 = scalar_lea.sflag [#allocation6], %s457
        %s459 = sand.u32 %s65, 1
        %s460 = smul.addr %s459, 16
        %s461 = scalar_lea.vmem [#allocation5], %s460
        %p462 = pneg %p78
        %p463 = pneg %p75
        %s464 = sand.u32 %s31, 1
        %s465 = scalar_lea.sflag [#allocation6], %s464
        %s466 = sand.u32 %s91, 1
        %s467 = smul.addr %s466, 16
        %s468 = scalar_lea.vmem [#allocation7], %s467
        %p469 = pneg %p104
        %p470 = pneg %p101
        %p471 = pneg %p125
        %p472 = pneg %p122
        %p473 = pneg %p146
        %p474 = pneg %p143
        %p475 = pneg %p167
        %p476 = pneg %p164
        %p477 = pneg %p188
        %p478 = pneg %p185
        %p479 = pneg %p209
        %p480 = pneg %p206
        %p481 = pneg %p235
        %p482 = pneg %p232
        %s483 = sand.u32 %s222, 1
        %s484 = scalar_lea.sflag [#allocation4], %s483
        %s485 = sand.u32 %s222, 1
        %s486 = smul.addr %s485, 16
        %s487 = scalar_lea.vmem [#allocation16], %s486
        %s488 = smul.u32 2, %s31
        %s489 = smul.u32 2, %s31
        %s490 = smul.u32 2, %s31
        %s491 = smul.u32 2, %s31
        %v493 = vld [vmem:[#allocation13] sm:$0x1]
        %v494 = vld [vmem:[#allocation13 + $0x3] sm:$0x1]
        %v495 = vld [vmem:[#allocation13 + $0x4] sm:$0x1]
        %v496 = vld [vmem:[%s399] sm:$0xff]
        %v497 = vld [vmem:[%s399 + $0x8] sm:$0xff]
        %v498 = vpack.c.bf16 %v497, %v496
        %v499 = vld [vmem:[#allocation8] sm:$0xf]
        %v500 = vld [vmem:[#allocation8 + $0x4] sm:$0xf]
        %v501 = vld [vmem:[#allocation8 + $0x8] sm:$0xf]
        %v502 = vld [vmem:[#allocation8 + $0xc] sm:$0xf]
        %v503 = vperm.slane %v493, 0
        %v508 = vunpack.c.l.b16 %v499
        %v509 = vunpack.c.l.b16 %v500
        %v510 = vunpack.c.l.b16 %v501
        %v511 = vunpack.c.l.b16 %v502
        %v512 = vpack.c.b16 %v509, %v508
        %v513 = vpack.c.b16 %v511, %v510
        %vm516 = vcmask 261120
        %v518 = vsel %vm516, %v498, 0
        %520 = vmatpush.bf16.msra.mxu0 0
        %521 = vmatpush.bf16.msra.mxu0 0
        %522 = vmatpush.bf16.msra.mxu0 0
        %523 = vmatpush.bf16.msra.mxu0 0
        %524 = vmatpush.bf16.msra.mxu0 0
        %525 = vmatpush.bf16.msra.mxu0 0
        %526 = vmatpush.bf16.msra.mxu0 %v513
        %527 = vmatpush.bf16.msra.mxu0 %v512
        %528 = vmatmul.bf16.gmra.mxu0 %v518
        %v529 = vpop.f32.mrf.mxu0
        %v530 = vadd.f32 %v503, %v529
        %v531 = vpop.f32.mrf.mxu0
        %v532 = vadd.f32 %v503, %v531
        %533 = vdwg.mxu0
        %v534 = vld [vmem:[#allocation13 + $0x1] sm:$0x1]
        %v535 = vld [vmem:[#allocation13 + $0x2] sm:$0x1]
        %v536 = vld [vmem:[%s409] sm:$0xff]
        %v537 = vld [vmem:[%s409 + $0x8] sm:$0xff]
        %v538 = vpack.c.bf16 %v537, %v536
        %v539 = vld [vmem:[#allocation10] sm:$0xf]
        %v540 = vld [vmem:[#allocation10 + $0x4] sm:$0xf]
        %v541 = vld [vmem:[#allocation10 + $0x8] sm:$0xf]
        %v542 = vld [vmem:[#allocation10 + $0xc] sm:$0xf]
        %v543 = vperm.slane %v534, 0
        %v548 = vunpack.c.l.b16 %v539
        %v549 = vunpack.c.l.b16 %v540
        %v550 = vunpack.c.l.b16 %v541
        %v551 = vunpack.c.l.b16 %v542
        %v552 = vpack.c.b16 %v549, %v548
        %v553 = vpack.c.b16 %v551, %v550
        %v557 = vsel %vm516, %v538, 0
        %559 = vmatpush.bf16.msra.mxu0 0
        %560 = vmatpush.bf16.msra.mxu0 0
        %561 = vmatpush.bf16.msra.mxu0 0
        %562 = vmatpush.bf16.msra.mxu0 0
        %563 = vmatpush.bf16.msra.mxu0 0
        %564 = vmatpush.bf16.msra.mxu0 0
        %565 = vmatpush.bf16.msra.mxu0 %v553
        %566 = vmatpush.bf16.msra.mxu0 %v552
        %567 = vmatmul.bf16.gmra.mxu0 %v557
        %v568 = vpop.f32.mrf.mxu0
        %v569 = vadd.f32 %v543, %v568
        %v570 = vpop.f32.mrf.mxu0
        %v571 = vadd.f32 %v543, %v570
        %572 = vdwg.mxu0
        %v573 = vld [vmem:[%s419] sm:$0xff]
        %v574 = vld [vmem:[%s419 + $0x8] sm:$0xff]
        %v575 = vpack.c.bf16 %v574, %v573
        %v576 = vld [vmem:[#allocation11] sm:$0xf]
        %v577 = vld [vmem:[#allocation11 + $0x4] sm:$0xf]
        %v578 = vld [vmem:[#allocation11 + $0x8] sm:$0xf]
        %v579 = vld [vmem:[#allocation11 + $0xc] sm:$0xf]
        %v580 = vld [vmem:[#allocation11 + $0x10] sm:$0xf]
        %v581 = vld [vmem:[#allocation11 + $0x14] sm:$0xf]
        %v582 = vld [vmem:[#allocation11 + $0x18] sm:$0xf]
        %v583 = vld [vmem:[#allocation11 + $0x1c] sm:$0xf]
        %v584 = vperm.slane %v535, 0
        %v593 = vunpack.c.l.b16 %v576
        %v594 = vunpack.c.l.b16 %v577
        %v595 = vunpack.c.l.b16 %v578
        %v596 = vunpack.c.l.b16 %v579
        %v597 = vunpack.c.l.b16 %v580
        %v598 = vunpack.c.l.b16 %v581
        %v599 = vunpack.c.l.b16 %v582
        %v600 = vunpack.c.l.b16 %v583
        %v601 = vpack.c.b16 %v594, %v593
        %v602 = vpack.c.b16 %v596, %v595
        %v603 = vpack.c.b16 %v598, %v597
        %v604 = vpack.c.b16 %v600, %v599
        %vm609 = vcmask 523264
        %v611 = vsel %vm609, %v575, 0
        %613 = vmatpush.bf16.msra.mxu0 0
        %614 = vmatpush.bf16.msra.mxu0 0
        %615 = vmatpush.bf16.msra.mxu0 0
        %616 = vmatpush.bf16.msra.mxu0 0
        %617 = vmatpush.bf16.msra.mxu0 %v604
        %618 = vmatpush.bf16.msra.mxu0 %v603
        %619 = vmatpush.bf16.msra.mxu0 %v602
        %620 = vmatpush.bf16.msra.mxu0 %v601
        %621 = vmatmul.bf16.gmra.mxu0 %v611
        %v622 = vpop.f32.mrf.mxu0
        %v623 = vadd.f32 %v584, %v622
        %v624 = vpop.f32.mrf.mxu0
        %v625 = vadd.f32 %v584, %v624
        %626 = vdwg.mxu0
        %v627 = vpack.c.bf16 %v532, %v530
        %v628 = vpack.c.bf16 %v571, %v569
        %v629 = vld [vmem:[#allocation14] sm:$0xff]
        %v630 = vld [vmem:[#allocation14 + $0x8] sm:$0xff]
        %v632 = vsel %vm516, %v627, 0
        %v635 = vsel %vm516, %v628, 0
        %637 = vmatpush.bf16.xpose.msra.mxu0 0
        %638 = vmatpush.bf16.xpose.msra.mxu0 0
        %639 = vmatpush.bf16.xpose.msra.mxu0 0
        %640 = vmatpush.bf16.xpose.msra.mxu0 0
        %641 = vmatpush.bf16.xpose.msra.mxu0 0
        %642 = vmatpush.bf16.xpose.msra.mxu0 0
        %643 = vmatpush.bf16.xpose.msra.mxu0 0
        %644 = vmatpush.bf16.xpose.msra.mxu0 %v635
        %645 = vmatmul.bf16.gmra.mxu0 %v632
        %v646 = vpop.f32.mrf.mxu0
        %v647 = vadd.f32 %v629, %v646
        %v648 = vpop.f32.mrf.mxu0
        %v649 = vadd.f32 %v630, %v648
        %650 = vdwg.mxu0
        %vm651 = vcmask 130048
        %v652 = vsel %vm651, %v647, -inf
        %653 = vmax.xlane.f32.xlu0 %v652
        %v654 = vpop.xlane.xlu0 %653
        %v655 = vsel %vm651, %v649, -inf
        %656 = vmax.xlane.f32.xlu0 %v655
        %v657 = vpop.xlane.xlu0 %656
        %v658 = vsub.f32 %v647, %v654
        %v659 = vsub.f32 %v649, %v657
        %v660 = vmul.f32 %v658, 1.442695
        %v661 = vpow.pop %v660
        %v662 = vmul.f32 %v659, 1.442695
        %v663 = vpow.pop %v662
        %v664 = vsel %vm651, %v661, 0.0
        %665 = vadd.xlane.f32.xlu0 %v664
        %v666 = vpop.xlane.xlu0 %665
        %v667 = vsel %vm651, %v663, 0.0
        %668 = vadd.xlane.f32.xlu0 %v667
        %v669 = vpop.xlane.xlu0 %668
        %v670 = vrcp.pop %v666
        %v671 = vrcp.pop %v669
        %v672 = vmul.f32 %v661, %v670
        %v673 = vmul.f32 %v663, %v671
        %v674 = vpack.c.bf16 %v673, %v672
        %v675 = vpack.c.bf16 %v625, %v623
        %v677 = vsel %vm651, %v674, 0
        %679 = vmatpush.bf16.msra.mxu0 0
        %680 = vmatpush.bf16.msra.mxu0 0
        %681 = vmatpush.bf16.msra.mxu0 0
        %682 = vmatpush.bf16.msra.mxu0 0
        %683 = vmatpush.bf16.msra.mxu0 0
        %684 = vmatpush.bf16.msra.mxu0 0
        %685 = vmatpush.bf16.msra.mxu0 0
        %686 = vmatpush.bf16.msra.mxu0 %v675
        %687 = vmatmul.bf16.gmra.mxu0 %v677
        %v688 = vpop.f32.mrf.mxu0
        %v689 = vadd.f32 0.0, %v688
        %v690 = vpop.f32.mrf.mxu0
        %v691 = vadd.f32 0.0, %v690
        %692 = vdwg.mxu0
        %v693 = vsel %vm609, %v689, 0.0
        %694 = vadd.xlane.f32.xlu0 %v693
        %v695 = vpop.xlane.xlu0 %694
        %v696 = vsel %vm609, %v691, 0.0
        %697 = vadd.xlane.f32.xlu0 %v696
        %v698 = vpop.xlane.xlu0 %697
        %v699 = vrcp.pop 64.0
        %v700 = vmul.f32 64.0, %v699
        %v701 = vsub.f32 1.0, %v700
        %v702 = vmul.f32 %v699, %v701
        %v703 = vadd.f32 %v699, %v702
        %vm704 = vweird.f32 %v699
        %v705 = vsel %vm704, %v699, %v703
        %v706 = vmul.f32 %v695, %v705
        %v707 = vmul.f32 %v698, %v705
        %v708 = vsub.f32 %v689, %v706
        %v709 = vsub.f32 %v691, %v707
        %v710 = vmul.f32 %v708, %v708
        %v711 = vmul.f32 %v709, %v709
        %v712 = vsel %vm609, %v710, 0.0
        %713 = vadd.xlane.f32.xlu0 %v712
        %v714 = vpop.xlane.xlu0 %713
        %v715 = vsel %vm609, %v711, 0.0
        %716 = vadd.xlane.f32.xlu0 %v715
        %v717 = vpop.xlane.xlu0 %716
        %v718 = vmul.f32 %v714, %v705
        %v719 = vmul.f32 %v717, %v705
        %v720 = vadd.f32 %v718, 1e-05
        %v721 = vadd.f32 %v719, 1e-05
        %v722 = vrsqrt.pop %v720
        %v723 = vmul.f32 %v722, %v720
        %v724 = vmul.f32 %v723, %v722
        %v725 = vmul.f32 0.5, %v724
        %v726 = vsub.f32 1.5, %v725
        %v727 = vmul.f32 %v722, %v726
        %vm728 = vweird.f32 %v720
        %vm729 = vweird.f32 %v722
        %vm730 = vmor %vm728, %vm729
        %v731 = vsel %vm730, %v722, %v727
        %v732 = vrsqrt.pop %v721
        %v733 = vmul.f32 %v732, %v721
        %v734 = vmul.f32 %v733, %v732
        %v735 = vmul.f32 0.5, %v734
        %v736 = vsub.f32 1.5, %v735
        %v737 = vmul.f32 %v732, %v736
        %vm738 = vweird.f32 %v721
        %vm739 = vweird.f32 %v732
        %vm740 = vmor %vm738, %vm739
        %v741 = vsel %vm740, %v732, %v737
        %v742 = vmul.f32 %v708, %v731
        %v743 = vmul.f32 %v709, %v741
        %v744 = vperm.slane %v494, 0
        %v745 = vmul.f32 %v742, %v744
        %v746 = vmul.f32 %v743, %v744
        %v747 = vperm.slane %v495, 0
        %v748 = vadd.f32 %v745, %v747
        %v749 = vadd.f32 %v746, %v747
        %750 = vst.msk [vmem:[%s487] sm:$0xff] %vm609, %v748
        %751 = vst.msk [vmem:[%s487 + $0x8] sm:$0xff] %vm609, %v749
        %s752 = sand.u32 %s222, 1
        %s753 = scalar_lea.sflag [#allocation4], %s752
        %s754 = sand.u32 %s222, 1
        %s755 = smul.addr %s754, 16
        %s756 = scalar_lea.vmem [#allocation16], %s755
        // Predicated region
        $region85: #{tpu_custom_call.1} parent=51 // pred_check
          %p757 = pneg %p232
        $region86: #{tpu_custom_call.1} parent=51 // pred_check_branch
          %759 = sbr.rel (%p757) target = $region88
        $region87: #{tpu_custom_call.1} parent=51 // pred_region
          %s760 = smul.u32 2, %s31
          %762 = vsyncadd %s753, 0
          %s763 = smul.addr %s760, 8
          %s764 = scalar_lea.hbm %s8, %s763
          %s765 = sshll.u32 %s756, 4
          %s766 = int_to_ptr.vmem [resolvable:$true] %s765
          %s767 = sshll.u32 %s764, 4
          %s768 = int_to_ptr.hbm [resolvable:$true] %s767
          %773 = dma.vmem_to_hbm [thread:$0]  %s766, 256, %s768, %s753, 128, 128, 8
        $region88: #{tpu_custom_call.1} parent=51 // pred_fallthru
          _
      $region52: #{tpu_custom_call.1} parent=5 // pred_fallthru
        _
      %p774 = scmp.le.s32.totalorder 2, %s26
      // Predicated region
      $region89: #{tpu_custom_call.1} parent=5 // pred_check
        %p775 = pneg %p774
      $region90: #{tpu_custom_call.1} parent=5 // pred_check_branch
        %777 = sbr.rel (%p775) target = $region92
      $region91: #{tpu_custom_call.1} parent=5 // pred_region
        %s778 = ssub.s32 %s26, 2
        // Predicated region
        $region93: #{tpu_custom_call.1} parent=91 // pred_check
          %p779 = pneg %p238
        $region94: #{tpu_custom_call.1} parent=91 // pred_check_branch
          %781 = sbr.rel (%p779) target = $region96
        $region95: #{tpu_custom_call.1} parent=91 // pred_region
          %s782 = sand.u32 %s223, 1
          %s783 = scalar_lea.sflag [#allocation4], %s782
          %s784 = sand.u32 %s223, 1
          %s785 = smul.addr %s784, 16
          %s786 = scalar_lea.vmem [#allocation16], %s785
          %788 = dma.done %s783, 256
        $region96: #{tpu_custom_call.1} parent=91 // pred_fallthru
          _
      $region92: #{tpu_custom_call.1} parent=5 // pred_fallthru
        _
    $region6: #{tpu_custom_call.1} parent=1 // loop_footer
      %s30 = sadd.s32 1, %s26
    $region7: #{tpu_custom_call.1} parent=1 // loop_footer_branch
      %25 = sbr.rel target = $region3
    $region8: #{tpu_custom_call.1} parent=1 // loop_exit
      _
    %789 = vsyncpa [#allocation3], 1
    %s790 = scalar_lea.sflag [#allocation3], 1
    %791 = vsyncpa %s790, 1
    %792 = vsyncpa [#allocation6], 1
    %s793 = scalar_lea.sflag [#allocation6], 1
    %794 = vsyncpa %s793, 1
    %795 = vsyncpa [#allocation9], 1
    %796 = vsyncpa [#allocation12], 1
    %797 = vsyncpa [#allocation15], 1
    %798 = vsyncpa [#allocation4], 1
    %s799 = scalar_lea.sflag [#allocation4], 1
    %800 = vsyncpa %s799, 1

// kernel: tpu_custom_call.1
$region0: #{tpu_custom_call.1}
  #allocation0 [shape = 'u32[]', space=smem, size = 0x4, offset = 0x4, fixed_abs, tag = 'smem constant byte address 0x4 - core index']
  #allocation1 [shape = 'u32[72,128]{1,0:T(1,128)}', space=vmem, size = 0x9000, scoped, tag = 'internal scratch']
  %s0 = inlined_call_operand.hbm [shape: f32[32,32], index: 0, kind: input, shape index: {}]
  %s1 = inlined_call_operand.hbm [shape: f32[32,32], index: 1, kind: input, shape index: {}]
  %s2 = inlined_call_operand.hbm [shape: f32[32,64], index: 2, kind: input, shape index: {}]
  %s3 = inlined_call_operand.hbm [shape: bf16[32,32], index: 3, kind: input, shape index: {}]
  %s4 = inlined_call_operand.hbm [shape: bf16[32,32], index: 4, kind: input, shape index: {}]
  %s5 = inlined_call_operand.hbm [shape: bf16[64,64], index: 5, kind: input, shape index: {}]
  %s6 = inlined_call_operand.hbm [shape: f32[8,64], index: 6, kind: input, shape index: {}]
  %s7 = inlined_call_operand.hbm [shape: f32[16,16], index: 7, kind: input, shape index: {}]
  %s8 = inlined_call_operand.hbm [shape: f32[32,64], index: 8, kind: output, shape index: {}]
  %s9 = sld [smem:[#allocation0]]
  $region97: #{tpu_custom_call.1} parent=0
    _
  %s11 = ssub.s32 1, %s9
  %s12 = scalar_select 0, %s11, %s9
  $region1: #{tpu_custom_call.1} parent=0
    #allocation2 [shape = 'u8[16384]{0}', space=vmem, size = 0x4000, scoped, tag = 'input window, operand 0']
    #allocation3 [shape = 's32[2]{0}', space=sflag, size = 0x8, scoped, tag = 'scoped memory for tpu_custom_call.1']
    #allocation4 [shape = 's32[2]{0}', space=sflag, size = 0x8, scoped, tag = 'scoped memory for tpu_custom_call.1']
    #allocation5 [shape = 'u8[16384]{0}', space=vmem, size = 0x4000, scoped, tag = 'input window, operand 1']
    #allocation6 [shape = 's32[2]{0}', space=sflag, size = 0x8, scoped, tag = 'scoped memory for tpu_custom_call.1']
    #allocation7 [shape = 'u8[16384]{0}', space=vmem, size = 0x4000, scoped, tag = 'input window, operand 2']
    #allocation8 [shape = 'u8[8192]{0}', space=vmem, size = 0x2000, scoped, tag = 'input window, operand 3, single buffered']
    #allocation9 [shape = 's32[1]{0}', space=sflag, size = 0x4, scoped, tag = 'scoped memory for tpu_custom_call.1']
    #allocation10 [shape = 'u8[8192]{0}', space=vmem, size = 0x2000, scoped, tag = 'input window, operand 4, single buffered']
    #allocation11 [shape = 'u8[16384]{0}', space=vmem, size = 0x4000, scoped, tag = 'input window, operand 5, single buffered']
    #allocation12 [shape = 's32[1]{0}', space=sflag, size = 0x4, scoped, tag = 'scoped memory for tpu_custom_call.1']
    #allocation13 [shape = 'u8[4096]{0}', space=vmem, size = 0x1000, scoped, tag = 'input window, operand 6, single buffered']
    #allocation14 [shape = 'u8[8192]{0}', space=vmem, size = 0x2000, scoped, tag = 'input window, operand 7, single buffered']
    #allocation15 [shape = 's32[1]{0}', space=sflag, size = 0x4, scoped, tag = 'scoped memory for tpu_custom_call.1']
    #allocation16 [shape = 'u8[16384]{0}', space=vmem, size = 0x4000, scoped, tag = 'output window, operand 0']
    %13 = vsyncpa [#allocation3], 0
    %s14 = scalar_lea.sflag [#allocation3], 1
    %15 = vsyncpa %s14, 0
    %16 = vsyncpa [#allocation6], 0
    %s17 = scalar_lea.sflag [#allocation6], 1
    %18 = vsyncpa %s17, 0
    %19 = vsyncpa [#allocation9], 0
    %20 = vsyncpa [#allocation12], 0
    %21 = vsyncpa [#allocation15], 0
    %22 = vsyncpa [#allocation4], 0
    %s23 = scalar_lea.sflag [#allocation4], 1
    %24 = vsyncpa %s23, 0
    loop: start=0, step=1, limit=4
    $region2: #{tpu_custom_call.1} parent=1 // loop_pre_header
      _
    $region3: #{tpu_custom_call.1} parent=1 // loop_header
      %s26 = sphi 0, %s30
      %p27 = scmp.ge.s32.totalorder %s26, 4
      %s36 = sphi 0, %s38
      %s39 = sphi 0, %s36
      %s40 = sphi 0, %s39
      %s56 = sphi 0, %s40
      %s62 = sphi 0, %s64
      %s65 = sphi 0, %s62
      %s66 = sphi 0, %s65
      %s82 = sphi 0, %s66
      %s88 = sphi 0, %s90
      %s91 = sphi 0, %s88
      %s92 = sphi 0, %s91
      %s108 = sphi 0, %s92
      %s112 = sphi 0, %s112
      %s114 = sphi 0, %s112
      %s115 = sphi 0, %s114
      %s129 = sphi 0, %s115
      %s133 = sphi 0, %s133
      %s135 = sphi 0, %s133
      %s136 = sphi 0, %s135
      %s150 = sphi 0, %s136
      %s154 = sphi 0, %s154
      %s156 = sphi 0, %s154
      %s157 = sphi 0, %s156
      %s171 = sphi 0, %s157
      %s175 = sphi 0, %s175
      %s177 = sphi 0, %s175
      %s178 = sphi 0, %s177
      %s192 = sphi 0, %s178
      %s196 = sphi 0, %s196
      %s198 = sphi 0, %s196
      %s199 = sphi 0, %s198
      %s213 = sphi 0, %s199
      %s219 = sphi 0, %s221
      %s222 = sphi 0, %s219
      %s223 = sphi 0, %s222
      %s239 = sphi 0, %s223
    $region4: #{tpu_custom_call.1} parent=1 // loop_header_branch
      %29 = sbr.rel (%p27) target = $region8
    $region5: #{tpu_custom_call.1} parent=1 // loop_body
      %s31 = ssub.s32 %s26, 1
      %s32 = ssub.s32 %s26, 2
      %s33 = sadd.s32 %s26, 1
      %s34 = ssub.s32 %s26, %s33
      %p35 = scmp.eq.s32.totalorder %s34, 0
      %s37 = sadd.s32 %s36, 1
      %s38 = scalar_select %p35, %s36, %s37
      %p41 = pneg %p35
      %p42 = scmp.eq.s32.totalorder %s26, 1
      %p43 = por %p41, %p42
      %p44 = scmp.ne.s32.totalorder %s36, %s39
      %p45 = scmp.eq.s32.totalorder %s26, 0
      %p46 = por %p44, %p45
      %p47 = scmp.ne.s32.totalorder %s36, %s39
      %p48 = scmp.eq.s32.totalorder %s31, 1
      %p49 = por %p47, %p48
      %p50 = scmp.ne.s32.totalorder %s39, %s40
      %p51 = scmp.eq.s32.totalorder %s31, 0
      %p52 = por %p50, %p51
      %p53 = scmp.ne.s32.totalorder %s39, %s40
      %p54 = scmp.eq.s32.totalorder %s32, 1
      %p55 = por %p53, %p54
      %p57 = scmp.ne.s32.totalorder %s40, %s56
      %p58 = scmp.eq.s32.totalorder %s32, 0
      %p59 = por %p57, %p58
      %s60 = ssub.s32 %s26, %s33
      %p61 = scmp.eq.s32.totalorder %s60, 0
      %s63 = sadd.s32 %s62, 1
      %s64 = scalar_select %p61, %s62, %s63
      %p67 = pneg %p61
      %p68 = scmp.eq.s32.totalorder %s26, 1
      %p69 = por %p67, %p68
      %p70 = scmp.ne.s32.totalorder %s62, %s65
      %p71 = scmp.eq.s32.totalorder %s26, 0
      %p72 = por %p70, %p71
      %p73 = scmp.ne.s32.totalorder %s62, %s65
      %p74 = scmp.eq.s32.totalorder %s31, 1
      %p75 = por %p73, %p74
      %p76 = scmp.ne.s32.totalorder %s65, %s66
      %p77 = scmp.eq.s32.totalorder %s31, 0
      %p78 = por %p76, %p77
      %p79 = scmp.ne.s32.totalorder %s65, %s66
      %p80 = scmp.eq.s32.totalorder %s32, 1
      %p81 = por %p79, %p80
      %p83 = scmp.ne.s32.totalorder %s66, %s82
      %p84 = scmp.eq.s32.totalorder %s32, 0
      %p85 = por %p83, %p84
      %s86 = ssub.s32 %s26, %s33
      %p87 = scmp.eq.s32.totalorder %s86, 0
      %s89 = sadd.s32 %s88, 1
      %s90 = scalar_select %p87, %s88, %s89
      %p93 = pneg %p87
      %p94 = scmp.eq.s32.totalorder %s26, 1
      %p95 = por %p93, %p94
      %p96 = scmp.ne.s32.totalorder %s88, %s91
      %p97 = scmp.eq.s32.totalorder %s26, 0
      %p98 = por %p96, %p97
      %p99 = scmp.ne.s32.totalorder %s88, %s91
      %p100 = scmp.eq.s32.totalorder %s31, 1
      %p101 = por %p99, %p100
      %p102 = scmp.ne.s32.totalorder %s91, %s92
      %p103 = scmp.eq.s32.totalorder %s31, 0
      %p104 = por %p102, %p103
      %p105 = scmp.ne.s32.totalorder %s91, %s92
      %p106 = scmp.eq.s32.totalorder %s32, 1
      %p107 = por %p105, %p106
      %p109 = scmp.ne.s32.totalorder %s92, %s108
      %p110 = scmp.eq.s32.totalorder %s32, 0
      %p111 = por %p109, %p110
      %s113 = sadd.s32 %s112, 1
      %p116 = scmp.eq.s32.totalorder %s26, 1
      %p117 = scmp.ne.s32.totalorder %s112, %s114
      %p118 = scmp.eq.s32.totalorder %s26, 0
      %p119 = por %p117, %p118
      %p120 = scmp.ne.s32.totalorder %s112, %s114
      %p121 = scmp.eq.s32.totalorder %s31, 1
      %p122 = por %p120, %p121
      %p123 = scmp.ne.s32.totalorder %s114, %s115
      %p124 = scmp.eq.s32.totalorder %s31, 0
      %p125 = por %p123, %p124
      %p126 = scmp.ne.s32.totalorder %s114, %s115
      %p127 = scmp.eq.s32.totalorder %s32, 1
      %p128 = por %p126, %p127
      %p130 = scmp.ne.s32.totalorder %s115, %s129
      %p131 = scmp.eq.s32.totalorder %s32, 0
      %p132 = por %p130, %p131
      %s134 = sadd.s32 %s133, 1
      %p137 = scmp.eq.s32.totalorder %s26, 1
      %p138 = scmp.ne.s32.totalorder %s133, %s135
      %p139 = scmp.eq.s32.totalorder %s26, 0
      %p140 = por %p138, %p139
      %p141 = scmp.ne.s32.totalorder %s133, %s135
      %p142 = scmp.eq.s32.totalorder %s31, 1
      %p143 = por %p141, %p142
      %p144 = scmp.ne.s32.totalorder %s135, %s136
      %p145 = scmp.eq.s32.totalorder %s31, 0
      %p146 = por %p144, %p145
      %p147 = scmp.ne.s32.totalorder %s135, %s136
      %p148 = scmp.eq.s32.totalorder %s32, 1
      %p149 = por %p147, %p148
      %p151 = scmp.ne.s32.totalorder %s136, %s150
      %p152 = scmp.eq.s32.totalorder %s32, 0
      %p153 = por %p151, %p152
      %s155 = sadd.s32 %s154, 1
      %p158 = scmp.eq.s32.totalorder %s26, 1
      %p159 = scmp.ne.s32.totalorder %s154, %s156
      %p160 = scmp.eq.s32.totalorder %s26, 0
      %p161 = por %p159, %p160
      %p162 = scmp.ne.s32.totalorder %s154, %s156
      %p163 = scmp.eq.s32.totalorder %s31, 1
      %p164 = por %p162, %p163
      %p165 = scmp.ne.s32.totalorder %s156, %s157
      %p166 = scmp.eq.s32.totalorder %s31, 0
      %p167 = por %p165, %p166
      %p168 = scmp.ne.s32.totalorder %s156, %s157
      %p169 = scmp.eq.s32.totalorder %s32, 1
      %p170 = por %p168, %p169
      %p172 = scmp.ne.s32.totalorder %s157, %s171
      %p173 = scmp.eq.s32.totalorder %s32, 0
      %p174 = por %p172, %p173
      %s176 = sadd.s32 %s175, 1
      %p179 = scmp.eq.s32.totalorder %s26, 1
      %p180 = scmp.ne.s32.totalorder %s175, %s177
      %p181 = scmp.eq.s32.totalorder %s26, 0
      %p182 = por %p180, %p181
      %p183 = scmp.ne.s32.totalorder %s175, %s177
      %p184 = scmp.eq.s32.totalorder %s31, 1
      %p185 = por %p183, %p184
      %p186 = scmp.ne.s32.totalorder %s177, %s178
      %p187 = scmp.eq.s32.totalorder %s31, 0
      %p188 = por %p186, %p187
      %p189 = scmp.ne.s32.totalorder %s177, %s178
      %p190 = scmp.eq.s32.totalorder %s32, 1
      %p191 = por %p189, %p190
      %p193 = scmp.ne.s32.totalorder %s178, %s192
      %p194 = scmp.eq.s32.totalorder %s32, 0
      %p195 = por %p193, %p194
      %s197 = sadd.s32 %s196, 1
      %p200 = scmp.eq.s32.totalorder %s26, 1
      %p201 = scmp.ne.s32.totalorder %s196, %s198
      %p202 = scmp.eq.s32.totalorder %s26, 0
      %p203 = por %p201, %p202
      %p204 = scmp.ne.s32.totalorder %s196, %s198
      %p205 = scmp.eq.s32.totalorder %s31, 1
      %p206 = por %p204, %p205
      %p207 = scmp.ne.s32.totalorder %s198, %s199
      %p208 = scmp.eq.s32.totalorder %s31, 0
      %p209 = por %p207, %p208
      %p210 = scmp.ne.s32.totalorder %s198, %s199
      %p211 = scmp.eq.s32.totalorder %s32, 1
      %p212 = por %p210, %p211
      %p214 = scmp.ne.s32.totalorder %s199, %s213
      %p215 = scmp.eq.s32.totalorder %s32, 0
      %p216 = por %p214, %p215
      %s217 = ssub.s32 %s26, %s33
      %p218 = scmp.eq.s32.totalorder %s217, 0
      %s220 = sadd.s32 %s219, 1
      %s221 = scalar_select %p218, %s219, %s220
      %p224 = pneg %p218
      %p225 = scmp.eq.s32.totalorder %s26, 1
      %p226 = por %p224, %p225
      %p227 = scmp.ne.s32.totalorder %s219, %s222
      %p228 = scmp.eq.s32.totalorder %s26, 0
      %p229 = por %p227, %p228
      %p230 = scmp.ne.s32.totalorder %s219, %s222
      %p231 = scmp.eq.s32.totalorder %s31, 1
      %p232 = por %p230, %p231
      %p233 = scmp.ne.s32.totalorder %s222, %s223
      %p234 = scmp.eq.s32.totalorder %s31, 0
      %p235 = por %p233, %p234
      %p236 = scmp.ne.s32.totalorder %s222, %s223
      %p237 = scmp.eq.s32.totalorder %s32, 1
      %p238 = por %p236, %p237
      %p240 = scmp.ne.s32.totalorder %s223, %s239
      %p241 = scmp.eq.s32.totalorder %s32, 0
      %p242 = por %p240, %p241
      %p243 = scmp.le.s32.totalorder 1, %s26
      %p244 = scmp.lt.s32.totalorder %s26, 3
      %p245 = pnand %p243, %p244
      %p246 = pneg %p245
      // Predicated region
      $region9: #{tpu_custom_call.1} parent=5 // pred_check
        _
      $region10: #{tpu_custom_call.1} parent=5 // pred_check_branch
        %248 = sbr.rel (%p245) target = $region12
      $region11: #{tpu_custom_call.1} parent=5 // pred_region
        %s249 = ssub.s32 %s26, 1
        // Predicated region
        $region13: #{tpu_custom_call.1} parent=11 // pred_check
          %p250 = pneg %p125
        $region14: #{tpu_custom_call.1} parent=11 // pred_check_branch
          %252 = sbr.rel (%p250) target = $region16
        $region15: #{tpu_custom_call.1} parent=11 // pred_region
          %254 = vsyncadd [#allocation9], 0
          %s255 = sshll.u32 %s3, 4
          %s256 = int_to_ptr.hbm [resolvable:$true] %s255
          %s257 = sshll.u32 [#allocation8], 4
          %s258 = int_to_ptr.vmem [resolvable:$true] %s257
          %263 = dma.hbm_to_vmem [thread:$0]  %s256, 256, %s258, [#allocation9], 64, 64, 4
        $region16: #{tpu_custom_call.1} parent=11 // pred_fallthru
          _
        // Predicated region
        $region17: #{tpu_custom_call.1} parent=11 // pred_check
          %p264 = pneg %p146
        $region18: #{tpu_custom_call.1} parent=11 // pred_check_branch
          %266 = sbr.rel (%p264) target = $region20
        $region19: #{tpu_custom_call.1} parent=11 // pred_region
          %268 = vsyncadd [#allocation9], 0
          %s269 = sshll.u32 %s4, 4
          %s270 = int_to_ptr.hbm [resolvable:$true] %s269
          %s271 = sshll.u32 [#allocation10], 4
          %s272 = int_to_ptr.vmem [resolvable:$true] %s271
          %277 = dma.hbm_to_vmem [thread:$0]  %s270, 256, %s272, [#allocation9], 64, 64, 4
        $region20: #{tpu_custom_call.1} parent=11 // pred_fallthru
          _
        // Predicated region
        $region21: #{tpu_custom_call.1} parent=11 // pred_check
          %p278 = pneg %p167
        $region22: #{tpu_custom_call.1} parent=11 // pred_check_branch
          %280 = sbr.rel (%p278) target = $region24
        $region23: #{tpu_custom_call.1} parent=11 // pred_region
          %282 = vsyncadd [#allocation12], 0
          %s283 = sshll.u32 %s5, 4
          %s284 = int_to_ptr.hbm [resolvable:$true] %s283
          %s285 = sshll.u32 [#allocation11], 4
          %s286 = int_to_ptr.vmem [resolvable:$true] %s285
          %291 = dma.hbm_to_vmem [thread:$0]  %s284, 512, %s286, [#allocation12], 64, 64, 4
        $region24: #{tpu_custom_call.1} parent=11 // pred_fallthru
          _
        // Predicated region
        $region25: #{tpu_custom_call.1} parent=11 // pred_check
          %p292 = pneg %p188
        $region26: #{tpu_custom_call.1} parent=11 // pred_check_branch
          %294 = sbr.rel (%p292) target = $region28
        $region27: #{tpu_custom_call.1} parent=11 // pred_region
          %296 = vsyncadd [#allocation12], 0
          %s298 = sshll.u32 %s6, 4
          %s299 = int_to_ptr.hbm [resolvable:$true] %s298
          %s300 = sshll.u32 [#allocation13], 4
          %s301 = int_to_ptr.vmem [resolvable:$true] %s300
          %303 = dma.hbm_to_vmem [thread:$0]  %s299, 128, %s301, [#allocation12]
        $region28: #{tpu_custom_call.1} parent=11 // pred_fallthru
          _
        // Predicated region
        $region29: #{tpu_custom_call.1} parent=11 // pred_check
          %p304 = pneg %p209
        $region30: #{tpu_custom_call.1} parent=11 // pred_check_branch
          %306 = sbr.rel (%p304) target = $region32
        $region31: #{tpu_custom_call.1} parent=11 // pred_region
          %308 = vsyncadd [#allocation15], 0
          %s309 = sshll.u32 %s7, 4
          %s310 = int_to_ptr.hbm [resolvable:$true] %s309
          %s311 = sshll.u32 [#allocation14], 4
          %s312 = int_to_ptr.vmem [resolvable:$true] %s311
          %317 = dma.hbm_to_vmem [thread:$0]  %s310, 256, %s312, [#allocation15], 128, 128, 8
        $region32: #{tpu_custom_call.1} parent=11 // pred_fallthru
          _
      $region12: #{tpu_custom_call.1} parent=5 // pred_fallthru
        _
      %p318 = scmp.lt.s32.totalorder %s26, 2
      // Predicated region
      $region33: #{tpu_custom_call.1} parent=5 // pred_check
        %p319 = pneg %p318
      $region34: #{tpu_custom_call.1} parent=5 // pred_check_branch
        %321 = sbr.rel (%p319) target = $region36
      $region35: #{tpu_custom_call.1} parent=5 // pred_region
        // Predicated region
        $region37: #{tpu_custom_call.1} parent=35 // pred_check
          %p322 = pneg %p46
        $region38: #{tpu_custom_call.1} parent=35 // pred_check_branch
          %324 = sbr.rel (%p322) target = $region40
        $region39: #{tpu_custom_call.1} parent=35 // pred_region
          %s325 = sand.u32 %s36, 1
          %s326 = scalar_lea.sflag [#allocation3], %s325
          %s327 = sand.u32 %s36, 1
          %s328 = smul.addr %s327, 16
          %s329 = scalar_lea.vmem [#allocation2], %s328
          %s330 = smul.u32 2, %s26
          %332 = vsyncadd %s326, 0
          %s333 = smul.addr %s330, 8
          %s334 = scalar_lea.hbm %s0, %s333
          %s335 = sshll.u32 %s334, 4
          %s336 = int_to_ptr.hbm [resolvable:$true] %s335
          %s337 = sshll.u32 %s329, 4
          %s338 = int_to_ptr.vmem [resolvable:$true] %s337
          %343 = dma.hbm_to_vmem [thread:$0]  %s336, 256, %s338, %s326, 128, 128, 8
        $region40: #{tpu_custom_call.1} parent=35 // pred_fallthru
          _
        // Predicated region
        $region41: #{tpu_custom_call.1} parent=35 // pred_check
          %p344 = pneg %p72
        $region42: #{tpu_custom_call.1} parent=35 // pred_check_branch
          %346 = sbr.rel (%p344) target = $region44
        $region43: #{tpu_custom_call.1} parent=35 // pred_region
          %s347 = sand.u32 %s26, 1
          %s348 = scalar_lea.sflag [#allocation6], %s347
          %s349 = sand.u32 %s62, 1
          %s350 = smul.addr %s349, 16
          %s351 = scalar_lea.vmem [#allocation5], %s350
          %s352 = smul.u32 2, %s26
          %354 = vsyncadd %s348, 0
          %s355 = smul.addr %s352, 8
          %s356 = scalar_lea.hbm %s1, %s355
          %s357 = sshll.u32 %s356, 4
          %s358 = int_to_ptr.hbm [resolvable:$true] %s357
          %s359 = sshll.u32 %s351, 4
          %s360 = int_to_ptr.vmem [resolvable:$true] %s359
          %365 = dma.hbm_to_vmem [thread:$0]  %s358, 256, %s360, %s348, 128, 128, 8
        $region44: #{tpu_custom_call.1} parent=35 // pred_fallthru
          _
        // Predicated region
        $region45: #{tpu_custom_call.1} parent=35 // pred_check
          %p366 = pneg %p98
        $region46: #{tpu_custom_call.1} parent=35 // pred_check_branch
          %368 = sbr.rel (%p366) target = $region48
        $region47: #{tpu_custom_call.1} parent=35 // pred_region
          %s369 = sand.u32 %s26, 1
          %s370 = scalar_lea.sflag [#allocation6], %s369
          %s371 = sand.u32 %s88, 1
          %s372 = smul.addr %s371, 16
          %s373 = scalar_lea.vmem [#allocation7], %s372
          %s374 = smul.u32 2, %s26
          %376 = vsyncadd %s370, 0
          %s377 = smul.addr %s374, 8
          %s378 = scalar_lea.hbm %s2, %s377
          %s379 = sshll.u32 %s378, 4
          %s380 = int_to_ptr.hbm [resolvable:$true] %s379
          %s381 = sshll.u32 %s373, 4
          %s382 = int_to_ptr.vmem [resolvable:$true] %s381
          %387 = dma.hbm_to_vmem [thread:$0]  %s380, 256, %s382, %s370, 128, 128, 8
        $region48: #{tpu_custom_call.1} parent=35 // pred_fallthru
          _
      $region36: #{tpu_custom_call.1} parent=5 // pred_fallthru
        _
      %p388 = scmp.le.s32.totalorder 1, %s26
      %p389 = scmp.lt.s32.totalorder %s26, 3
      %p390 = pnand %p388, %p389
      %p391 = pneg %p390
      // Predicated region
      $region49: #{tpu_custom_call.1} parent=5 // pred_check
        _
      $region50: #{tpu_custom_call.1} parent=5 // pred_check_branch
        %393 = sbr.rel (%p390) target = $region52
      $region51: #{tpu_custom_call.1} parent=5 // pred_region
        %s394 = ssub.s32 %s26, 1
        %s395 = sand.u32 %s39, 1
        %s396 = scalar_lea.sflag [#allocation3], %s395
        %s397 = sand.u32 %s39, 1
        %s398 = smul.addr %s397, 16
        %s399 = scalar_lea.vmem [#allocation2], %s398
        // Predicated region
        $region53: #{tpu_custom_call.1} parent=51 // pred_check
          %p400 = pneg %p52
        $region54: #{tpu_custom_call.1} parent=51 // pred_check_branch
          %402 = sbr.rel (%p400) target = $region56
        $region55: #{tpu_custom_call.1} parent=51 // pred_region
          %404 = dma.done %s396, 256
        $region56: #{tpu_custom_call.1} parent=51 // pred_fallthru
          _
        %s405 = sand.u32 %s31, 1
        %s406 = scalar_lea.sflag [#allocation6], %s405
        %s407 = sand.u32 %s65, 1
        %s408 = smul.addr %s407, 16
        %s409 = scalar_lea.vmem [#allocation5], %s408
        // Predicated region
        $region57: #{tpu_custom_call.1} parent=51 // pred_check
          %p410 = pneg %p78
        $region58: #{tpu_custom_call.1} parent=51 // pred_check_branch
          %412 = sbr.rel (%p410) target = $region60
        $region59: #{tpu_custom_call.1} parent=51 // pred_region
          %414 = dma.done %s406, 256
        $region60: #{tpu_custom_call.1} parent=51 // pred_fallthru
          _
        %s415 = sand.u32 %s31, 1
        %s416 = scalar_lea.sflag [#allocation6], %s415
        %s417 = sand.u32 %s91, 1
        %s418 = smul.addr %s417, 16
        %s419 = scalar_lea.vmem [#allocation7], %s418
        // Predicated region
        $region61: #{tpu_custom_call.1} parent=51 // pred_check
          %p420 = pneg %p104
        $region62: #{tpu_custom_call.1} parent=51 // pred_check_branch
          %422 = sbr.rel (%p420) target = $region64
        $region63: #{tpu_custom_call.1} parent=51 // pred_region
          %424 = dma.done %s416, 256
        $region64: #{tpu_custom_call.1} parent=51 // pred_fallthru
          _
        // Predicated region
        $region65: #{tpu_custom_call.1} parent=51 // pred_check
          %p425 = pneg %p125
        $region66: #{tpu_custom_call.1} parent=51 // pred_check_branch
          %427 = sbr.rel (%p425) target = $region68
        $region67: #{tpu_custom_call.1} parent=51 // pred_region
          %429 = dma.done [#allocation9], 256
        $region68: #{tpu_custom_call.1} parent=51 // pred_fallthru
          _
        // Predicated region
        $region69: #{tpu_custom_call.1} parent=51 // pred_check
          %p430 = pneg %p146
        $region70: #{tpu_custom_call.1} parent=51 // pred_check_branch
          %432 = sbr.rel (%p430) target = $region72
        $region71: #{tpu_custom_call.1} parent=51 // pred_region
          %434 = dma.done [#allocation9], 256
        $region72: #{tpu_custom_call.1} parent=51 // pred_fallthru
          _
        // Predicated region
        $region73: #{tpu_custom_call.1} parent=51 // pred_check
          %p435 = pneg %p167
        $region74: #{tpu_custom_call.1} parent=51 // pred_check_branch
          %437 = sbr.rel (%p435) target = $region76
        $region75: #{tpu_custom_call.1} parent=51 // pred_region
          %439 = dma.done [#allocation12], 512
        $region76: #{tpu_custom_call.1} parent=51 // pred_fallthru
          _
        // Predicated region
        $region77: #{tpu_custom_call.1} parent=51 // pred_check
          %p440 = pneg %p188
        $region78: #{tpu_custom_call.1} parent=51 // pred_check_branch
          %442 = sbr.rel (%p440) target = $region80
        $region79: #{tpu_custom_call.1} parent=51 // pred_region
          %444 = dma.done [#allocation12], 128
        $region80: #{tpu_custom_call.1} parent=51 // pred_fallthru
          _
        // Predicated region
        $region81: #{tpu_custom_call.1} parent=51 // pred_check
          %p445 = pneg %p209
        $region82: #{tpu_custom_call.1} parent=51 // pred_check_branch
          %447 = sbr.rel (%p445) target = $region84
        $region83: #{tpu_custom_call.1} parent=51 // pred_region
          %449 = dma.done [#allocation15], 256
        $region84: #{tpu_custom_call.1} parent=51 // pred_fallthru
          _
        %s450 = sand.u32 %s39, 1
        %s451 = scalar_lea.sflag [#allocation3], %s450
        %s452 = sand.u32 %s39, 1
        %s453 = smul.addr %s452, 16
        %s454 = scalar_lea.vmem [#allocation2], %s453
        %p455 = pneg %p52
        %p456 = pneg %p49
        %s457 = sand.u32 %s31, 1
        %s458 = scalar_lea.sflag [#allocation6], %s457
        %s459 = sand.u32 %s65, 1
        %s460 = smul.addr %s459, 16
        %s461 = scalar_lea.vmem [#allocation5], %s460
        %p462 = pneg %p78
        %p463 = pneg %p75
        %s464 = sand.u32 %s31, 1
        %s465 = scalar_lea.sflag [#allocation6], %s464
        %s466 = sand.u32 %s91, 1
        %s467 = smul.addr %s466, 16
        %s468 = scalar_lea.vmem [#allocation7], %s467
        %p469 = pneg %p104
        %p470 = pneg %p101
        %p471 = pneg %p125
        %p472 = pneg %p122
        %p473 = pneg %p146
        %p474 = pneg %p143
        %p475 = pneg %p167
        %p476 = pneg %p164
        %p477 = pneg %p188
        %p478 = pneg %p185
        %p479 = pneg %p209
        %p480 = pneg %p206
        %p481 = pneg %p235
        %p482 = pneg %p232
        %s483 = sand.u32 %s222, 1
        %s484 = scalar_lea.sflag [#allocation4], %s483
        %s485 = sand.u32 %s222, 1
        %s486 = smul.addr %s485, 16
        %s487 = scalar_lea.vmem [#allocation16], %s486
        %s488 = smul.u32 2, %s31
        %s489 = smul.u32 2, %s31
        %s490 = smul.u32 2, %s31
        %s491 = smul.u32 2, %s31
        %v493 = vld [vmem:[#allocation13] sm:$0x1]
        %v494 = vld [vmem:[#allocation13 + $0x3] sm:$0x1]
        %v495 = vld [vmem:[#allocation13 + $0x4] sm:$0x1]
        %v496 = vld [vmem:[%s399] sm:$0xff]
        %v497 = vld [vmem:[%s399 + $0x8] sm:$0xff]
        %v498 = vpack.c.bf16 %v497, %v496
        %v499 = vld [vmem:[#allocation8] sm:$0xf]
        %v500 = vld [vmem:[#allocation8 + $0x4] sm:$0xf]
        %v501 = vld [vmem:[#allocation8 + $0x8] sm:$0xf]
        %v502 = vld [vmem:[#allocation8 + $0xc] sm:$0xf]
        %v503 = vperm.slane %v493, 0
        %v508 = vunpack.c.l.b16 %v499
        %v509 = vunpack.c.l.b16 %v500
        %v510 = vunpack.c.l.b16 %v501
        %v511 = vunpack.c.l.b16 %v502
        %v512 = vpack.c.b16 %v509, %v508
        %v513 = vpack.c.b16 %v511, %v510
        %vm516 = vcmask 261120
        %v518 = vsel %vm516, %v498, 0
        %520 = vmatpush.bf16.msra.mxu0 0
        %521 = vmatpush.bf16.msra.mxu0 0
        %522 = vmatpush.bf16.msra.mxu0 0
        %523 = vmatpush.bf16.msra.mxu0 0
        %524 = vmatpush.bf16.msra.mxu0 0
        %525 = vmatpush.bf16.msra.mxu0 0
        %526 = vmatpush.bf16.msra.mxu0 %v513
        %527 = vmatpush.bf16.msra.mxu0 %v512
        %528 = vmatmul.bf16.gmra.mxu0 %v518
        %v529 = vpop.f32.mrf.mxu0
        %v530 = vadd.f32 %v503, %v529
        %v531 = vpop.f32.mrf.mxu0
        %v532 = vadd.f32 %v503, %v531
        %533 = vdwg.mxu0
        %v534 = vld [vmem:[#allocation13 + $0x1] sm:$0x1]
        %v535 = vld [vmem:[#allocation13 + $0x2] sm:$0x1]
        %v536 = vld [vmem:[%s409] sm:$0xff]
        %v537 = vld [vmem:[%s409 + $0x8] sm:$0xff]
        %v538 = vpack.c.bf16 %v537, %v536
        %v539 = vld [vmem:[#allocation10] sm:$0xf]
        %v540 = vld [vmem:[#allocation10 + $0x4] sm:$0xf]
        %v541 = vld [vmem:[#allocation10 + $0x8] sm:$0xf]
        %v542 = vld [vmem:[#allocation10 + $0xc] sm:$0xf]
        %v543 = vperm.slane %v534, 0
        %v548 = vunpack.c.l.b16 %v539
        %v549 = vunpack.c.l.b16 %v540
        %v550 = vunpack.c.l.b16 %v541
        %v551 = vunpack.c.l.b16 %v542
        %v552 = vpack.c.b16 %v549, %v548
        %v553 = vpack.c.b16 %v551, %v550
        %v557 = vsel %vm516, %v538, 0
        %559 = vmatpush.bf16.msra.mxu0 0
        %560 = vmatpush.bf16.msra.mxu0 0
        %561 = vmatpush.bf16.msra.mxu0 0
        %562 = vmatpush.bf16.msra.mxu0 0
        %563 = vmatpush.bf16.msra.mxu0 0
        %564 = vmatpush.bf16.msra.mxu0 0
        %565 = vmatpush.bf16.msra.mxu0 %v553
        %566 = vmatpush.bf16.msra.mxu0 %v552
        %567 = vmatmul.bf16.gmra.mxu0 %v557
        %v568 = vpop.f32.mrf.mxu0
        %v569 = vadd.f32 %v543, %v568
        %v570 = vpop.f32.mrf.mxu0
        %v571 = vadd.f32 %v543, %v570
        %572 = vdwg.mxu0
        %v573 = vld [vmem:[%s419] sm:$0xff]
        %v574 = vld [vmem:[%s419 + $0x8] sm:$0xff]
        %v575 = vpack.c.bf16 %v574, %v573
        %v576 = vld [vmem:[#allocation11] sm:$0xf]
        %v577 = vld [vmem:[#allocation11 + $0x4] sm:$0xf]
        %v578 = vld [vmem:[#allocation11 + $0x8] sm:$0xf]
        %v579 = vld [vmem:[#allocation11 + $0xc] sm:$0xf]
        %v580 = vld [vmem:[#allocation11 + $0x10] sm:$0xf]
        %v581 = vld [vmem:[#allocation11 + $0x14] sm:$0xf]
        %v582 = vld [vmem:[#allocation11 + $0x18] sm:$0xf]
        %v583 = vld [vmem:[#allocation11 + $0x1c] sm:$0xf]
        %v584 = vperm.slane %v535, 0
        %v593 = vunpack.c.l.b16 %v576
        %v594 = vunpack.c.l.b16 %v577
        %v595 = vunpack.c.l.b16 %v578
        %v596 = vunpack.c.l.b16 %v579
        %v597 = vunpack.c.l.b16 %v580
        %v598 = vunpack.c.l.b16 %v581
        %v599 = vunpack.c.l.b16 %v582
        %v600 = vunpack.c.l.b16 %v583
        %v601 = vpack.c.b16 %v594, %v593
        %v602 = vpack.c.b16 %v596, %v595
        %v603 = vpack.c.b16 %v598, %v597
        %v604 = vpack.c.b16 %v600, %v599
        %vm609 = vcmask 523264
        %v611 = vsel %vm609, %v575, 0
        %613 = vmatpush.bf16.msra.mxu0 0
        %614 = vmatpush.bf16.msra.mxu0 0
        %615 = vmatpush.bf16.msra.mxu0 0
        %616 = vmatpush.bf16.msra.mxu0 0
        %617 = vmatpush.bf16.msra.mxu0 %v604
        %618 = vmatpush.bf16.msra.mxu0 %v603
        %619 = vmatpush.bf16.msra.mxu0 %v602
        %620 = vmatpush.bf16.msra.mxu0 %v601
        %621 = vmatmul.bf16.gmra.mxu0 %v611
        %v622 = vpop.f32.mrf.mxu0
        %v623 = vadd.f32 %v584, %v622
        %v624 = vpop.f32.mrf.mxu0
        %v625 = vadd.f32 %v584, %v624
        %626 = vdwg.mxu0
        %v627 = vpack.c.bf16 %v532, %v530
        %v628 = vpack.c.bf16 %v571, %v569
        %v629 = vld [vmem:[#allocation14] sm:$0xff]
        %v630 = vld [vmem:[#allocation14 + $0x8] sm:$0xff]
        %v632 = vsel %vm516, %v627, 0
        %v635 = vsel %vm516, %v628, 0
        %637 = vmatpush.bf16.xpose.msra.mxu0 0
        %638 = vmatpush.bf16.xpose.msra.mxu0 0
        %639 = vmatpush.bf16.xpose.msra.mxu0 0
        %640 = vmatpush.bf16.xpose.msra.mxu0 0
        %641 = vmatpush.bf16.xpose.msra.mxu0 0
        %642 = vmatpush.bf16.xpose.msra.mxu0 0
        %643 = vmatpush.bf16.xpose.msra.mxu0 0
        %644 = vmatpush.bf16.xpose.msra.mxu0 %v635
        %645 = vmatmul.bf16.gmra.mxu0 %v632
        %v646 = vpop.f32.mrf.mxu0
        %v647 = vadd.f32 %v629, %v646
        %v648 = vpop.f32.mrf.mxu0
        %v649 = vadd.f32 %v630, %v648
        %650 = vdwg.mxu0
        %vm651 = vcmask 130048
        %v652 = vsel %vm651, %v647, -inf
        %653 = vmax.xlane.f32.xlu0 %v652
        %v654 = vpop.xlane.xlu0 %653
        %v655 = vsel %vm651, %v649, -inf
        %656 = vmax.xlane.f32.xlu0 %v655
        %v657 = vpop.xlane.xlu0 %656
        %v658 = vsub.f32 %v647, %v654
        %v659 = vsub.f32 %v649, %v657
        %v660 = vmul.f32 %v658, 1.442695
        %v661 = vpow.pop %v660
        %v662 = vmul.f32 %v659, 1.442695
        %v663 = vpow.pop %v662
        %v664 = vsel %vm651, %v661, 0.0
        %665 = vadd.xlane.f32.xlu0 %v664
        %v666 = vpop.xlane.xlu0 %665
        %v667 = vsel %vm651, %v663, 0.0
        %668 = vadd.xlane.f32.xlu0 %v667
        %v669 = vpop.xlane.xlu0 %668
        %v670 = vrcp.pop %v666
        %v671 = vrcp.pop %v669
        %v672 = vmul.f32 %v661, %v670
        %v673 = vmul.f32 %v663, %v671
        %v674 = vpack.c.bf16 %v673, %v672
        %v675 = vpack.c.bf16 %v625, %v623
        %v677 = vsel %vm651, %v674, 0
        %679 = vmatpush.bf16.msra.mxu0 0
        %680 = vmatpush.bf16.msra.mxu0 0
        %681 = vmatpush.bf16.msra.mxu0 0
        %682 = vmatpush.bf16.msra.mxu0 0
        %683 = vmatpush.bf16.msra.mxu0 0
        %684 = vmatpush.bf16.msra.mxu0 0
        %685 = vmatpush.bf16.msra.mxu0 0
        %686 = vmatpush.bf16.msra.mxu0 %v675
        %687 = vmatmul.bf16.gmra.mxu0 %v677
        %v688 = vpop.f32.mrf.mxu0
        %v689 = vadd.f32 0.0, %v688
        %v690 = vpop.f32.mrf.mxu0
        %v691 = vadd.f32 0.0, %v690
        %692 = vdwg.mxu0
        %v693 = vsel %vm609, %v689, 0.0
        %694 = vadd.xlane.f32.xlu0 %v693
        %v695 = vpop.xlane.xlu0 %694
        %v696 = vsel %vm609, %v691, 0.0
        %697 = vadd.xlane.f32.xlu0 %v696
        %v698 = vpop.xlane.xlu0 %697
        %v699 = vrcp.pop 64.0
        %v700 = vmul.f32 64.0, %v699
        %v701 = vsub.f32 1.0, %v700
        %v702 = vmul.f32 %v699, %v701
        %v703 = vadd.f32 %v699, %v702
        %vm704 = vweird.f32 %v699
        %v705 = vsel %vm704, %v699, %v703
        %v706 = vmul.f32 %v695, %v705
        %v707 = vmul.f32 %v698, %v705
        %v708 = vsub.f32 %v689, %v706
        %v709 = vsub.f32 %v691, %v707
        %v710 = vmul.f32 %v708, %v708
        %v711 = vmul.f32 %v709, %v709
        %v712 = vsel %vm609, %v710, 0.0
        %713 = vadd.xlane.f32.xlu0 %v712
        %v714 = vpop.xlane.xlu0 %713
        %v715 = vsel %vm609, %v711, 0.0
        %716 = vadd.xlane.f32.xlu0 %v715
        %v717 = vpop.xlane.xlu0 %716
        %v718 = vmul.f32 %v714, %v705
        %v719 = vmul.f32 %v717, %v705
        %v720 = vadd.f32 %v718, 1e-05
        %v721 = vadd.f32 %v719, 1e-05
        %v722 = vrsqrt.pop %v720
        %v723 = vmul.f32 %v722, %v720
        %v724 = vmul.f32 %v723, %v722
        %v725 = vmul.f32 0.5, %v724
        %v726 = vsub.f32 1.5, %v725
        %v727 = vmul.f32 %v722, %v726
        %vm728 = vweird.f32 %v720
        %vm729 = vweird.f32 %v722
        %vm730 = vmor %vm728, %vm729
        %v731 = vsel %vm730, %v722, %v727
        %v732 = vrsqrt.pop %v721
        %v733 = vmul.f32 %v732, %v721
        %v734 = vmul.f32 %v733, %v732
        %v735 = vmul.f32 0.5, %v734
        %v736 = vsub.f32 1.5, %v735
        %v737 = vmul.f32 %v732, %v736
        %vm738 = vweird.f32 %v721
        %vm739 = vweird.f32 %v732
        %vm740 = vmor %vm738, %vm739
        %v741 = vsel %vm740, %v732, %v737
        %v742 = vmul.f32 %v708, %v731
        %v743 = vmul.f32 %v709, %v741
        %v744 = vperm.slane %v494, 0
        %v745 = vmul.f32 %v742, %v744
        %v746 = vmul.f32 %v743, %v744
        %v747 = vperm.slane %v495, 0
        %v748 = vadd.f32 %v745, %v747
        %v749 = vadd.f32 %v746, %v747
        %750 = vst.msk [vmem:[%s487] sm:$0xff] %vm609, %v748
        %751 = vst.msk [vmem:[%s487 + $0x8] sm:$0xff] %vm609, %v749
        %s752 = sand.u32 %s222, 1
        %s753 = scalar_lea.sflag [#allocation4], %s752
        %s754 = sand.u32 %s222, 1
        %s755 = smul.addr %s754, 16
        %s756 = scalar_lea.vmem [#allocation16], %s755
        // Predicated region
        $region85: #{tpu_custom_call.1} parent=51 // pred_check
          %p757 = pneg %p232
        $region86: #{tpu_custom_call.1} parent=51 // pred_check_branch
          %759 = sbr.rel (%p757) target = $region88
        $region87: #{tpu_custom_call.1} parent=51 // pred_region
          %s760 = smul.u32 2, %s31
          %762 = vsyncadd %s753, 0
          %s763 = smul.addr %s760, 8
          %s764 = scalar_lea.hbm %s8, %s763
          %s765 = sshll.u32 %s756, 4
          %s766 = int_to_ptr.vmem [resolvable:$true] %s765
          %s767 = sshll.u32 %s764, 4
          %s768 = int_to_ptr.hbm [resolvable:$true] %s767
          %773 = dma.vmem_to_hbm [thread:$0]  %s766, 256, %s768, %s753, 128, 128, 8
        $region88: #{tpu_custom_call.1} parent=51 // pred_fallthru
          _
      $region52: #{tpu_custom_call.1} parent=5 // pred_fallthru
        _
      %p774 = scmp.le.s32.totalorder 2, %s26
      // Predicated region
      $region89: #{tpu_custom_call.1} parent=5 // pred_check
        %p775 = pneg %p774
      $region90: #{tpu_custom_call.1} parent=5 // pred_check_branch
        %777 = sbr.rel (%p775) target = $region92
      $region91: #{tpu_custom_call.1} parent=5 // pred_region
        %s778 = ssub.s32 %s26, 2
        // Predicated region
        $region93: #{tpu_custom_call.1} parent=91 // pred_check
          %p779 = pneg %p238
        $region94: #{tpu_custom_call.1} parent=91 // pred_check_branch
          %781 = sbr.rel (%p779) target = $region96
        $region95: #{tpu_custom_call.1} parent=91 // pred_region
          %s782 = sand.u32 %s223, 1
          %s783 = scalar_lea.sflag [#allocation4], %s782
          %s784 = sand.u32 %s223, 1
          %s785 = smul.addr %s784, 16
          %s786 = scalar_lea.vmem [#allocation16], %s785
          %788 = dma.done %s783, 256
        $region96: #{tpu_custom_call.1} parent=91 // pred_fallthru
          _
      $region92: #{tpu_custom_call.1} parent=5 // pred_fallthru
        _
    $region6: #{tpu_custom_call.1} parent=1 // loop_footer
      %s30 = sadd.s32 1, %s26
    $region7: #{tpu_custom_call.1} parent=1 // loop_footer_branch
      %25 = sbr.rel target = $region3
    $region8: #{tpu_custom_call.1} parent=1 // loop_exit
      _
    %789 = vsyncpa [#allocation3], 1
    %s790 = scalar_lea.sflag [#allocation3], 1
    %791 = vsyncpa %s790, 1
    %792 = vsyncpa [#allocation6], 1
    %s793 = scalar_lea.sflag [#allocation6], 1
    %794 = vsyncpa %s793, 1
    %795 = vsyncpa [#allocation9], 1
    %796 = vsyncpa [#allocation12], 1
    %797 = vsyncpa [#allocation15], 1
    %798 = vsyncpa [#allocation4], 1
    %s799 = scalar_lea.sflag [#allocation4], 1
    %800 = vsyncpa %s799, 1

</llo_original>
